<compile_context>
chip_gen: v7x
topology: tpu7x:2x2x1
jax: 0.10.0
libtpu: 0.0.40
codegen_flags: <defaults>
</compile_context>

<pallas_src>
import math
import functools

import jax
import jax.numpy as jnp
from jax.experimental import pallas as pl
from jax.experimental.pallas import tpu as pltpu

LANE = 128
NODE_PAD = 512     # node dim padded so 512-wide aggregation tiles always divide
TM_AGG = 512       # aggregation row tile (adj rows / accumulator rows)
TK_AGG = 512       # aggregation reduction tile (adj cols)
TM_LIN = 512       # linear-kernel row tile


def _round_up(x, m):
    return ((x + m - 1) // m) * m


def _pad2(a, rows, cols):
    return jnp.pad(a, ((0, rows - a.shape[0]), (0, cols - a.shape[1])))


def _vmem_limit_bytes():
    """Generation-aware scoped-VMEM limit: ~3/4 of physical VMEM, capped.
    v5e/v6e (128 MiB) -> 96 MiB; v7x (64 MiB) -> 48 MiB; safe fallback 48 MiB."""
    cap = None
    try:
        info = pltpu.get_tpu_info()
        cap = getattr(info, "vmem_capacity_bytes", None)
    except Exception:
        cap = None
    if not cap:
        cap = 64 * 1024 * 1024
    return int(min(96 * 1024 * 1024, max(32 * 1024 * 1024, (cap * 3) // 4)))


# ---------------------------------------------------------------------------
# Kernel 1: fused dual-linear   s_cat = x @ [W1 | W2] + [b1 | b2]  -> (s1, s2)
# ---------------------------------------------------------------------------
def _linear_concat_kernel(x_ref, w_ref, b_ref, s1_ref, s2_ref):
    F = s1_ref.shape[1]
    s = jnp.dot(x_ref[...], w_ref[...], preferred_element_type=jnp.float32)
    s = s + b_ref[...]                       # biases stay f32, added once here
    s1_ref[...] = s[:, :F].astype(s1_ref.dtype)
    s2_ref[...] = s[:, F:].astype(s2_ref.dtype)


def _linear_concat(x_p, w_cat, b_cat, out_dtype, tm, vmem_limit):
    Np, Fin = x_p.shape
    F2 = w_cat.shape[1]
    F = F2 // 2
    return pl.pallas_call(
        _linear_concat_kernel,
        out_shape=(jax.ShapeDtypeStruct((Np, F), out_dtype),
                   jax.ShapeDtypeStruct((Np, F), out_dtype)),
        grid_spec=pltpu.PrefetchScalarGridSpec(
            num_scalar_prefetch=0,
            grid=(Np // tm,),
            in_specs=[
                pl.BlockSpec((tm, Fin), lambda i: (i, 0)),
                # grid-invariant weight/bias: constant index_map -> fetched once
                pl.BlockSpec((Fin, F2), lambda i: (0, 0)),
                pl.BlockSpec((1, F2), lambda i: (0, 0)),
            ],
            out_specs=[pl.BlockSpec((tm, F), lambda i: (i, 0)),
                       pl.BlockSpec((tm, F), lambda i: (i, 0))],
        ),
        compiler_params=pltpu.CompilerParams(
            dimension_semantics=("parallel",),
            vmem_limit_bytes=vmem_limit,
        ),
    )(x_p, w_cat, b_cat)


# ---------------------------------------------------------------------------
# Kernel 2: aggregation  out = finalize(adj @ s2 + s1)
#   grid = (row_blocks, k_blocks) with the adj-column reduction axis last.
#   s2 is either fully VMEM-resident (fetched once, sliced with pl.ds) or
#   streamed per k-block, chosen by a VMEM-budget gate in the wrapper.
# ---------------------------------------------------------------------------
def _make_agg_kernel(finalize, nclass, resident_s2, tk):
    def kernel(adj_ref, s2_ref, s1_ref, out_ref, acc_ref):
        k = pl.program_id(1)

        @pl.when(k == 0)
        def _init():
            acc_ref[...] = jnp.zeros_like(acc_ref)

        if resident_s2:
            off = pl.multiple_of(k * tk, tk)
            s2 = s2_ref[pl.ds(off, tk), :]
        else:
            s2 = s2_ref[...]

        acc_ref[...] += jnp.dot(adj_ref[...], s2,
                                preferred_element_type=jnp.float32)

        @pl.when(k == pl.num_programs(1) - 1)
        def _finalize():
            r = acc_ref[...] + s1_ref[...].astype(jnp.float32)
            if finalize == "relu":
                out_ref[...] = jnp.maximum(r, 0.0).astype(out_ref.dtype)
            else:  # masked log_softmax over the first `nclass` lanes
                col = jax.lax.broadcasted_iota(jnp.int32, r.shape, 1)
                valid = col < nclass
                neg = jnp.float32(-1e30)
                rv = jnp.where(valid, r, neg)
                m = jnp.max(rv, axis=1, keepdims=True)
                z = jnp.where(valid, r - m, neg)
                lse = jnp.log(jnp.sum(jnp.exp(z), axis=1, keepdims=True))
                out_ref[...] = jnp.where(valid, z - lse, 0.0).astype(out_ref.dtype)

    return kernel


def _aggregate(adj_p, s2, s1, out_dtype, finalize, nclass, tm, tk, vmem_limit):
    Np = adj_p.shape[0]
    F = s2.shape[1]
    db = jnp.dtype(s2.dtype).itemsize

    # per-step tile VMEM: double-buffered adj + s1 + out, plus f32 accumulator
    tile_bytes = (2 * tm * tk + 2 * tm * F) * db + 2 * tm * F * 4 + tm * F * 4
    # resident s2 footprint (constant index map; conservatively count 2 buffers)
    resident_bytes = 2 * Np * F * db
    resident = (resident_bytes + tile_bytes + (4 << 20)) <= vmem_limit

    if resident:
        s2_spec = pl.BlockSpec((Np, F), lambda i, k: (0, 0))   # fetched once
    else:
        s2_spec = pl.BlockSpec((tk, F), lambda i, k: (k, 0))   # streamed per k

    kernel = _make_agg_kernel(finalize, nclass, resident, tk)
    return pl.pallas_call(
        kernel,
        out_shape=jax.ShapeDtypeStruct((Np, F), out_dtype),
        grid_spec=pltpu.PrefetchScalarGridSpec(
            num_scalar_prefetch=0,
            grid=(Np // tm, Np // tk),            # reduction axis last
            in_specs=[
                pl.BlockSpec((tm, tk), lambda i, k: (i, k)),   # adj tile
                s2_spec,                                       # s2 (resident or streamed)
                pl.BlockSpec((tm, F), lambda i, k: (i, 0)),    # s1 (row-resident)
            ],
            out_specs=pl.BlockSpec((tm, F), lambda i, k: (i, 0)),
            scratch_shapes=[pltpu.VMEM((tm, F), jnp.float32)],
        ),
        compiler_params=pltpu.CompilerParams(
            dimension_semantics=("parallel", "arbitrary"),
            vmem_limit_bytes=vmem_limit,
        ),
    )(adj_p, s2, s1)


# ---------------------------------------------------------------------------
# Full forward
# ---------------------------------------------------------------------------
@functools.partial(jax.jit, static_argnames=("compute_dtype",))
def graphsage_forward(x, adj, params, *, compute_dtype=jnp.bfloat16):
    """params: w1a/b1a/w2a/b2a (gc1), w1b/b1b/w2b/b2b (gc2); weights stored
    pre-transposed [in, out] (matching PyTorch x @ W.T + b); biases [1, out]."""
    N, nfeat = x.shape
    nhid = params["w1a"].shape[1]
    nclass = params["w1b"].shape[1]

    # lane-dense padding of feature/class dims; node dim padded to 512 so the
    # aggregation always uses 512-wide tiles (no 128-tile fallback).
    Fin_p = _round_up(nfeat, LANE)
    H_p = _round_up(nhid, LANE)
    C_p = _round_up(nclass, LANE)
    Np = _round_up(N, NODE_PAD)

    vmem_limit = _vmem_limit_bytes()
    tm_lin = TM_LIN
    tm_agg, tk_agg = TM_AGG, TK_AGG

    x_p = _pad2(x, Np, Fin_p).astype(compute_dtype)
    adj_p = _pad2(adj, Np, Np).astype(compute_dtype)

    def cat_pad(w1, b1, w2, b2, fin_p, fout_p):
        fout = w1.shape[1]
        w = jnp.zeros((fin_p, 2 * fout_p), jnp.float32)
        w = w.at[:w1.shape[0], :fout].set(w1)
        w = w.at[:w2.shape[0], fout_p:fout_p + fout].set(w2)
        b = jnp.zeros((1, 2 * fout_p), jnp.float32)
        b = b.at[:, :fout].set(b1.reshape(1, -1))
        b = b.at[:, fout_p:fout_p + fout].set(b2.reshape(1, -1))
        return w.astype(compute_dtype), b     # biases stay f32

    w_a, b_a = cat_pad(params["w1a"], params["b1a"],
                       params["w2a"], params["b2a"], Fin_p, H_p)
    w_b, b_b = cat_pad(params["w1b"], params["b1b"],
                       params["w2b"], params["b2b"], H_p, C_p)

    # --- gc1 ---
    s1, s2 = _linear_concat(x_p, w_a, b_a, compute_dtype, tm_lin, vmem_limit)
    h = _aggregate(adj_p, s2, s1, compute_dtype, "relu", None,
                   tm_agg, tk_agg, vmem_limit)
    # TODO(synk): dropout is identity here (eval mode); training-mode dropout
    # would need pltpu.prng_seed + pltpu.prng_random_bits mask/scale.

    # --- gc2 + masked log_softmax (f32 output) ---
    t1, t2 = _linear_concat(h, w_b, b_b, compute_dtype, tm_lin, vmem_limit)
    out_p = _aggregate(adj_p, t2, t1, jnp.float32, "log_softmax", nclass,
                       tm_agg, tk_agg, vmem_limit)

    return out_p[:N, :nclass]


# ---------------------------------------------------------------------------
# Init + demo
# ---------------------------------------------------------------------------
def init_params(key, nfeat, nhid, nclass):
    """Mirror the PyTorch module: weights uniform(-1/sqrt(in), 1/sqrt(in)),
    biases PyTorch-Linear-default uniform with the same bound."""
    ks = jax.random.split(key, 8)

    def lin(kw, kb, fan_in, fan_out):
        bound = 1.0 / math.sqrt(fan_in)
        w = jax.random.uniform(kw, (fan_in, fan_out), jnp.float32, -bound, bound)
        b = jax.random.uniform(kb, (1, fan_out), jnp.float32, -bound, bound)
        return w, b

    w1a, b1a = lin(ks[0], ks[1], nfeat, nhid)
    w2a, b2a = lin(ks[2], ks[3], nfeat, nhid)
    w1b, b1b = lin(ks[4], ks[5], nhid, nclass)
    w2b, b2b = lin(ks[6], ks[7], nhid, nclass)
    return dict(w1a=w1a, b1a=b1a, w2a=w2a, b2a=b2a,
                w1b=w1b, b1b=b1b, w2b=w2b, b2b=b2b)


if __name__ == "__main__":
    key = jax.random.PRNGKey(0)
    k_x, k_adj, k_p = jax.random.split(key, 3)

    N, nfeat, nhid, nclass = 16, 32, 32, 16

    x = jax.random.normal(k_x, (N, nfeat), jnp.float32)
    # dense row-normalized adjacency with self-loops, like typical GCN input
    a = (jax.random.uniform(k_adj, (N, N)) < 0.3).astype(jnp.float32)
    a = jnp.maximum(a, jnp.eye(N, dtype=jnp.float32))
    adj = a / jnp.sum(a, axis=1, keepdims=True)

    params = init_params(k_p, nfeat, nhid, nclass)

    # plain-JAX reference (unpadded, f32)
    def ref_forward(x, adj, p):
        s1 = x @ p["w1a"] + p["b1a"]
        s2 = x @ p["w2a"] + p["b2a"]
        h = jnp.maximum(adj @ s2 + s1, 0.0)
        t1 = h @ p["w1b"] + p["b1b"]
        t2 = h @ p["w2b"] + p["b2b"]
        o = adj @ t2 + t1
        return jax.nn.log_softmax(o, axis=1)

    ref = ref_forward(x, adj, params)

    # f32 path: tight correctness check
    out_f32 = graphsage_forward(x, adj, params, compute_dtype=jnp.float32)
    jax.block_until_ready(out_f32)
    assert out_f32.shape == (N, nclass)
    assert jnp.max(jnp.abs(out_f32 - ref)) < 1e-4

    # bf16 path (default, perf config): relaxed tolerance
    out_bf16 = graphsage_forward(x, adj, params)
    jax.block_until_ready(out_bf16)
    assert out_bf16.shape == (N, nclass)
    assert jnp.max(jnp.abs(out_bf16 - ref)) < 1e-1

    print("KERNEL_OK")
</pallas_src>

<mosaic_0001>
module attributes {stable_mosaic.version = 11 : i64} {
  func.func @_linear_concat_kernel(%arg0: i32, %arg1: memref<512x128xf32, #tpu.memory_space<vmem>>, %arg2: memref<128x256xf32, #tpu.memory_space<vmem>>, %arg3: memref<1x256xf32, #tpu.memory_space<vmem>>, %arg4: memref<512x128xf32, #tpu.memory_space<vmem>>, %arg5: memref<512x128xf32, #tpu.memory_space<vmem>>) attributes {dimension_semantics = [#tpu.dimension_semantics<parallel>], iteration_bounds = array<i64: 1>, scalar_prefetch = 0 : i64, scratch_operands = 0 : i64, tpu.core_type = #tpu.core_type<tc>, window_params = [{transform_indices = @transform_0, window_bounds = array<i64: 512, 128>}, {pipeline_mode = #tpu.pipeline_mode<synchronous>, transform_indices = @transform_1, window_bounds = array<i64: 128, 256>}, {pipeline_mode = #tpu.pipeline_mode<synchronous>, transform_indices = @transform_2, window_bounds = array<i64: 1, 256>}, {transform_indices = @transform_3, window_bounds = array<i64: 512, 128>}, {transform_indices = @transform_4, window_bounds = array<i64: 512, 128>}]} {
    %c0 = arith.constant 0 : index
    %c0_0 = arith.constant 0 : index
    %0 = vector.load %arg1[%c0, %c0_0] : memref<512x128xf32, #tpu.memory_space<vmem>>, vector<512x128xf32>
    %c0_1 = arith.constant 0 : index
    %c0_2 = arith.constant 0 : index
    %1 = vector.load %arg2[%c0_1, %c0_2] : memref<128x256xf32, #tpu.memory_space<vmem>>, vector<128x256xf32>
    %cst = arith.constant dense<0.000000e+00> : vector<512x256xf32>
    %2 = tpu.matmul %0, %1, %cst {dimension_numbers = #tpu.dot_dimension_numbers<[1], [0], [0], [1], [0, 0, 1, 1], [], []>} : vector<512x128xf32>, vector<128x256xf32>, vector<512x256xf32> -> vector<512x256xf32>
    %c0_3 = arith.constant 0 : index
    %c0_4 = arith.constant 0 : index
    %3 = vector.load %arg3[%c0_3, %c0_4] : memref<1x256xf32, #tpu.memory_space<vmem>>, vector<1x256xf32>
    %4 = vector.broadcast %3 : vector<1x256xf32> to vector<512x256xf32>
    %5 = arith.addf %2, %4 : vector<512x256xf32>
    %6 = vector.extract_strided_slice %5 {offsets = [0, 0], sizes = [512, 128], strides = [1, 1]} : vector<512x256xf32> to vector<512x128xf32>
    %c0_5 = arith.constant 0 : index
    %c0_6 = arith.constant 0 : index
    %7 = vector.load %arg4[%c0_5, %c0_6] : memref<512x128xf32, #tpu.memory_space<vmem>>, vector<512x128xf32>
    tpu.vector_store %arg4[%c0_5, %c0_6], %6 {strides = array<i32>} : memref<512x128xf32, #tpu.memory_space<vmem>>, vector<512x128xf32>,
    %8 = vector.extract_strided_slice %5 {offsets = [0, 128], sizes = [512, 128], strides = [1, 1]} : vector<512x256xf32> to vector<512x128xf32>
    %c0_7 = arith.constant 0 : index
    %c0_8 = arith.constant 0 : index
    %9 = vector.load %arg5[%c0_7, %c0_8] : memref<512x128xf32, #tpu.memory_space<vmem>>, vector<512x128xf32>
    tpu.vector_store %arg5[%c0_7, %c0_8], %8 {strides = array<i32>} : memref<512x128xf32, #tpu.memory_space<vmem>>, vector<512x128xf32>,
    return
  }
  func.func @transform_0(%arg0: i32) -> (i32, i32) {
    %c0_i32 = arith.constant 0 : i32
    %c0_i32_0 = arith.constant 0 : i32
    return %arg0, %c0_i32 : i32, i32
  }
  func.func @transform_1(%arg0: i32) -> (i32, i32) {
    %c0_i32 = arith.constant 0 : i32
    %c0_i32_0 = arith.constant 0 : i32
    %c0_i32_1 = arith.constant 0 : i32
    return %c0_i32, %c0_i32_0 : i32, i32
  }
  func.func @transform_2(%arg0: i32) -> (i32, i32) {
    %c0_i32 = arith.constant 0 : i32
    %c0_i32_0 = arith.constant 0 : i32
    %c0_i32_1 = arith.constant 0 : i32
    return %c0_i32, %c0_i32_0 : i32, i32
  }
  func.func @transform_3(%arg0: i32) -> (i32, i32) {
    %c0_i32 = arith.constant 0 : i32
    %c0_i32_0 = arith.constant 0 : i32
    return %arg0, %c0_i32 : i32, i32
  }
  func.func @transform_4(%arg0: i32) -> (i32, i32) {
    %c0_i32 = arith.constant 0 : i32
    %c0_i32_0 = arith.constant 0 : i32
    return %arg0, %c0_i32 : i32, i32
  }
}

module attributes {stable_mosaic.version = 11 : i64} {
  func.func @kernel(%arg0: i32, %arg1: i32, %arg2: memref<512x512xf32, #tpu.memory_space<vmem>>, %arg3: memref<512x128xf32, #tpu.memory_space<vmem>>, %arg4: memref<512x128xf32, #tpu.memory_space<vmem>>, %arg5: memref<512x128xf32, #tpu.memory_space<vmem>>, %arg6: memref<512x128xf32, #tpu.memory_space<vmem>>) attributes {dimension_semantics = [#tpu.dimension_semantics<parallel>, #tpu.dimension_semantics<arbitrary>], iteration_bounds = array<i64: 1, 1>, scalar_prefetch = 0 : i64, scratch_operands = 1 : i64, tpu.core_type = #tpu.core_type<tc>, window_params = [{transform_indices = @transform_0, window_bounds = array<i64: 512, 512>}, {pipeline_mode = #tpu.pipeline_mode<synchronous>, transform_indices = @transform_1, window_bounds = array<i64: 512, 128>}, {transform_indices = @transform_2, window_bounds = array<i64: 512, 128>}, {transform_indices = @transform_3, window_bounds = array<i64: 512, 128>}]} {
    %c0_i32 = arith.constant 0 : i32
    %0 = arith.cmpi eq, %arg1, %c0_i32 : i32
    %1 = arith.extui %0 : i1 to i32
    %c0_i32_0 = arith.constant 0 : i32
    %2 = arith.cmpi ne, %1, %c0_i32_0 : i32
    scf.if %2 {
      %cst_9 = arith.constant 0.000000e+00 : f32
      %15 = vector.broadcast %cst_9 : f32 to vector<512x128xf32>
      %c0_10 = arith.constant 0 : index
      %c0_11 = arith.constant 0 : index
      %16 = vector.load %arg6[%c0_10, %c0_11] : memref<512x128xf32, #tpu.memory_space<vmem>>, vector<512x128xf32>
      tpu.vector_store %arg6[%c0_10, %c0_11], %15 {strides = array<i32>} : memref<512x128xf32, #tpu.memory_space<vmem>>, vector<512x128xf32>,
    } else {
    }
    %c512_i32 = arith.constant 512 : i32
    %3 = arith.muli %arg1, %c512_i32 : i32
    %4 = tpu.assume_multiple %3, 512 : i32
    %5 = arith.index_cast %4 : i32 to index
    %c0 = arith.constant 0 : index
    %6 = vector.load %arg3[%5, %c0] : memref<512x128xf32, #tpu.memory_space<vmem>>, vector<512x128xf32>
    %c0_1 = arith.constant 0 : index
    %c0_2 = arith.constant 0 : index
    %7 = vector.load %arg6[%c0_1, %c0_2] : memref<512x128xf32, #tpu.memory_space<vmem>>, vector<512x128xf32>
    %c0_3 = arith.constant 0 : index
    %c0_4 = arith.constant 0 : index
    %8 = vector.load %arg2[%c0_3, %c0_4] : memref<512x512xf32, #tpu.memory_space<vmem>>, vector<512x512xf32>
    %cst = arith.constant dense<0.000000e+00> : vector<512x128xf32>
    %9 = tpu.matmul %8, %6, %cst {dimension_numbers = #tpu.dot_dimension_numbers<[1], [0], [0], [1], [0, 0, 1, 1], [], []>} : vector<512x512xf32>, vector<512x128xf32>, vector<512x128xf32> -> vector<512x128xf32>
    %10 = arith.addf %7, %9 : vector<512x128xf32>
    %c0_5 = arith.constant 0 : index
    %c0_6 = arith.constant 0 : index
    %11 = vector.load %arg6[%c0_5, %c0_6] : memref<512x128xf32, #tpu.memory_space<vmem>>, vector<512x128xf32>
    tpu.vector_store %arg6[%c0_5, %c0_6], %10 {strides = array<i32>} : memref<512x128xf32, #tpu.memory_space<vmem>>, vector<512x128xf32>,
    %c0_i32_7 = arith.constant 0 : i32
    %12 = arith.cmpi eq, %arg1, %c0_i32_7 : i32
    %13 = arith.extui %12 : i1 to i32
    %c0_i32_8 = arith.constant 0 : i32
    %14 = arith.cmpi ne, %13, %c0_i32_8 : i32
    scf.if %14 {
      %c0_9 = arith.constant 0 : index
      %c0_10 = arith.constant 0 : index
      %15 = vector.load %arg6[%c0_9, %c0_10] : memref<512x128xf32, #tpu.memory_space<vmem>>, vector<512x128xf32>
      %c0_11 = arith.constant 0 : index
      %c0_12 = arith.constant 0 : index
      %16 = vector.load %arg4[%c0_11, %c0_12] : memref<512x128xf32, #tpu.memory_space<vmem>>, vector<512x128xf32>
      %17 = arith.addf %15, %16 : vector<512x128xf32>
      %cst_13 = arith.constant 0.000000e+00 : f32
      %18 = vector.broadcast %cst_13 : f32 to vector<512x128xf32>
      %19 = arith.maximumf %17, %18 : vector<512x128xf32>
      %c0_14 = arith.constant 0 : index
      %c0_15 = arith.constant 0 : index
      %20 = vector.load %arg5[%c0_14, %c0_15] : memref<512x128xf32, #tpu.memory_space<vmem>>, vector<512x128xf32>
      tpu.vector_store %arg5[%c0_14, %c0_15], %19 {strides = array<i32>} : memref<512x128xf32, #tpu.memory_space<vmem>>, vector<512x128xf32>,
    } else {
    }
    return
  }
  func.func @transform_0(%arg0: i32, %arg1: i32) -> (i32, i32) {
    %c0_i32 = arith.constant 0 : i32
    return %arg0, %arg1 : i32, i32
  }
  func.func @transform_1(%arg0: i32, %arg1: i32) -> (i32, i32) {
    %c0_i32 = arith.constant 0 : i32
    %c0_i32_0 = arith.constant 0 : i32
    %c0_i32_1 = arith.constant 0 : i32
    return %c0_i32, %c0_i32_0 : i32, i32
  }
  func.func @transform_2(%arg0: i32, %arg1: i32) -> (i32, i32) {
    %c0_i32 = arith.constant 0 : i32
    %c0_i32_0 = arith.constant 0 : i32
    return %arg0, %c0_i32 : i32, i32
  }
  func.func @transform_3(%arg0: i32, %arg1: i32) -> (i32, i32) {
    %c0_i32 = arith.constant 0 : i32
    %c0_i32_0 = arith.constant 0 : i32
    return %arg0, %c0_i32 : i32, i32
  }
}

module attributes {stable_mosaic.version = 11 : i64} {
  func.func @kernel(%arg0: i32, %arg1: i32, %arg2: memref<512x512xf32, #tpu.memory_space<vmem>>, %arg3: memref<512x128xf32, #tpu.memory_space<vmem>>, %arg4: memref<512x128xf32, #tpu.memory_space<vmem>>, %arg5: memref<512x128xf32, #tpu.memory_space<vmem>>, %arg6: memref<512x128xf32, #tpu.memory_space<vmem>>) attributes {dimension_semantics = [#tpu.dimension_semantics<parallel>, #tpu.dimension_semantics<arbitrary>], iteration_bounds = array<i64: 1, 1>, scalar_prefetch = 0 : i64, scratch_operands = 1 : i64, tpu.core_type = #tpu.core_type<tc>, window_params = [{transform_indices = @transform_0, window_bounds = array<i64: 512, 512>}, {pipeline_mode = #tpu.pipeline_mode<synchronous>, transform_indices = @transform_1, window_bounds = array<i64: 512, 128>}, {transform_indices = @transform_2, window_bounds = array<i64: 512, 128>}, {transform_indices = @transform_3, window_bounds = array<i64: 512, 128>}]} {
    %c0_i32 = arith.constant 0 : i32
    %0 = arith.cmpi eq, %arg1, %c0_i32 : i32
    %1 = arith.extui %0 : i1 to i32
    %c0_i32_0 = arith.constant 0 : i32
    %2 = arith.cmpi ne, %1, %c0_i32_0 : i32
    scf.if %2 {
      %cst_9 = arith.constant 0.000000e+00 : f32
      %15 = vector.broadcast %cst_9 : f32 to vector<512x128xf32>
      %c0_10 = arith.constant 0 : index
      %c0_11 = arith.constant 0 : index
      %16 = vector.load %arg6[%c0_10, %c0_11] : memref<512x128xf32, #tpu.memory_space<vmem>>, vector<512x128xf32>
      tpu.vector_store %arg6[%c0_10, %c0_11], %15 {strides = array<i32>} : memref<512x128xf32, #tpu.memory_space<vmem>>, vector<512x128xf32>,
    } else {
    }
    %c512_i32 = arith.constant 512 : i32
    %3 = arith.muli %arg1, %c512_i32 : i32
    %4 = tpu.assume_multiple %3, 512 : i32
    %5 = arith.index_cast %4 : i32 to index
    %c0 = arith.constant 0 : index
    %6 = vector.load %arg3[%5, %c0] : memref<512x128xf32, #tpu.memory_space<vmem>>, vector<512x128xf32>
    %c0_1 = arith.constant 0 : index
    %c0_2 = arith.constant 0 : index
    %7 = vector.load %arg6[%c0_1, %c0_2] : memref<512x128xf32, #tpu.memory_space<vmem>>, vector<512x128xf32>
    %c0_3 = arith.constant 0 : index
    %c0_4 = arith.constant 0 : index
    %8 = vector.load %arg2[%c0_3, %c0_4] : memref<512x512xf32, #tpu.memory_space<vmem>>, vector<512x512xf32>
    %cst = arith.constant dense<0.000000e+00> : vector<512x128xf32>
    %9 = tpu.matmul %8, %6, %cst {dimension_numbers = #tpu.dot_dimension_numbers<[1], [0], [0], [1], [0, 0, 1, 1], [], []>} : vector<512x512xf32>, vector<512x128xf32>, vector<512x128xf32> -> vector<512x128xf32>
    %10 = arith.addf %7, %9 : vector<512x128xf32>
    %c0_5 = arith.constant 0 : index
    %c0_6 = arith.constant 0 : index
    %11 = vector.load %arg6[%c0_5, %c0_6] : memref<512x128xf32, #tpu.memory_space<vmem>>, vector<512x128xf32>
    tpu.vector_store %arg6[%c0_5, %c0_6], %10 {strides = array<i32>} : memref<512x128xf32, #tpu.memory_space<vmem>>, vector<512x128xf32>,
    %c0_i32_7 = arith.constant 0 : i32
    %12 = arith.cmpi eq, %arg1, %c0_i32_7 : i32
    %13 = arith.extui %12 : i1 to i32
    %c0_i32_8 = arith.constant 0 : i32
    %14 = arith.cmpi ne, %13, %c0_i32_8 : i32
    scf.if %14 {
      %c0_9 = arith.constant 0 : index
      %c0_10 = arith.constant 0 : index
      %15 = vector.load %arg6[%c0_9, %c0_10] : memref<512x128xf32, #tpu.memory_space<vmem>>, vector<512x128xf32>
      %c0_11 = arith.constant 0 : index
      %c0_12 = arith.constant 0 : index
      %16 = vector.load %arg4[%c0_11, %c0_12] : memref<512x128xf32, #tpu.memory_space<vmem>>, vector<512x128xf32>
      %17 = arith.addf %15, %16 : vector<512x128xf32>
      %18 = tpu.iota {dimensions = array<i32: 1>} : vector<512x128xi32>
      %c16_i32 = arith.constant 16 : i32
      %19 = vector.broadcast %c16_i32 : i32 to vector<512x128xi32>
      %20 = arith.cmpi slt, %18, %19 : vector<512x128xi32>
      %cst_13 = arith.constant -1.000000e+30 : f32
      %21 = vector.broadcast %cst_13 : f32 to vector<512x128xf32>
      %22 = arith.select %20, %17, %21 : vector<512x128xi1>, vector<512x128xf32>
      %cst_14 = arith.constant dense<0xFF800000> : vector<512xf32>
      %23 = vector.multi_reduction <maximumf>, %22, %cst_14 [1] : vector<512x128xf32> to vector<512xf32>
      %24 = vector.shape_cast %23 : vector<512xf32> to vector<512x1xf32>
      %25 = vector.broadcast %24 : vector<512x1xf32> to vector<512x128xf32>
      %26 = arith.subf %17, %25 : vector<512x128xf32>
      %cst_15 = arith.constant -1.000000e+30 : f32
      %27 = vector.broadcast %cst_15 : f32 to vector<512x128xf32>
      %28 = arith.select %20, %26, %27 : vector<512x128xi1>, vector<512x128xf32>
      %29 = math.exp %28 : vector<512x128xf32>
      %cst_16 = arith.constant dense<0.000000e+00> : vector<512xf32>
      %30 = vector.multi_reduction <add>, %29, %cst_16 [1] : vector<512x128xf32> to vector<512xf32>
      %31 = vector.shape_cast %30 : vector<512xf32> to vector<512x1xf32>
      %32 = math.log %31 : vector<512x1xf32>
      %33 = vector.broadcast %32 : vector<512x1xf32> to vector<512x128xf32>
      %34 = arith.subf %28, %33 : vector<512x128xf32>
      %cst_17 = arith.constant 0.000000e+00 : f32
      %35 = vector.broadcast %cst_17 : f32 to vector<512x128xf32>
      %36 = arith.select %20, %34, %35 : vector<512x128xi1>, vector<512x128xf32>
      %c0_18 = arith.constant 0 : index
      %c0_19 = arith.constant 0 : index
      %37 = vector.load %arg5[%c0_18, %c0_19] : memref<512x128xf32, #tpu.memory_space<vmem>>, vector<512x128xf32>
      tpu.vector_store %arg5[%c0_18, %c0_19], %36 {strides = array<i32>} : memref<512x128xf32, #tpu.memory_space<vmem>>, vector<512x128xf32>,
    } else {
    }
    return
  }
  func.func @transform_0(%arg0: i32, %arg1: i32) -> (i32, i32) {
    %c0_i32 = arith.constant 0 : i32
    return %arg0, %arg1 : i32, i32
  }
  func.func @transform_1(%arg0: i32, %arg1: i32) -> (i32, i32) {
    %c0_i32 = arith.constant 0 : i32
    %c0_i32_0 = arith.constant 0 : i32
    %c0_i32_1 = arith.constant 0 : i32
    return %c0_i32, %c0_i32_0 : i32, i32
  }
  func.func @transform_2(%arg0: i32, %arg1: i32) -> (i32, i32) {
    %c0_i32 = arith.constant 0 : i32
    %c0_i32_0 = arith.constant 0 : i32
    return %arg0, %c0_i32 : i32, i32
  }
  func.func @transform_3(%arg0: i32, %arg1: i32) -> (i32, i32) {
    %c0_i32 = arith.constant 0 : i32
    %c0_i32_0 = arith.constant 0 : i32
    return %arg0, %c0_i32 : i32, i32
  }
}

</mosaic_0001>

<llo_original>
// kernel: graphsage_forward.4
$region0: #{graphsage_forward.4}
  #allocation0 [shape = 'u32[]', space=smem, size = 0x4, offset = 0x4, fixed_abs, tag = 'smem constant byte address 0x4 - core index']
  #allocation1 [shape = 'u32[144,128]{1,0:T(1,128)}', space=vmem, size = 0x12000, scoped, tag = 'internal scratch']
  %s0 = inlined_call_operand.vmem [shape: f32[512,128], index: 0, kind: input, shape index: {}]
  %s1 = inlined_call_operand.vmem [shape: f32[128,256], index: 1, kind: input, shape index: {}]
  %s2 = inlined_call_operand.vmem [shape: f32[1,256], index: 2, kind: input, shape index: {}]
  %s3 = inlined_call_operand.vmem [shape: f32[512,128], index: 3, kind: output, shape index: {0}]
  %s4 = inlined_call_operand.vmem [shape: f32[512,128], index: 4, kind: output, shape index: {1}]
  %5 = xla_tuple %s3, %s4
  %s6 = sld [smem:[#allocation0]]
  $region30: #{graphsage_forward.4} parent=0
    _
  %s8 = ssub.s32 1, %s6
  %s9 = scalar_select 0, %s8, %s6
  // Predicated region
  $region2: #{graphsage_forward.4} parent=0 // pred_check
    _
  $region3: #{graphsage_forward.4} parent=0 // pred_check_branch
    %11 = sbr.rel (0) target = $region5
  $region4: #{graphsage_forward.4} parent=0 // pred_region
    _
  $region5: #{graphsage_forward.4} parent=0 // pred_fallthru
    _
  // Predicated region
  $region6: #{graphsage_forward.4} parent=0 // pred_check
    _
  $region7: #{graphsage_forward.4} parent=0 // pred_check_branch
    %13 = sbr.rel (0) target = $region9
  $region8: #{graphsage_forward.4} parent=0 // pred_region
    _
  $region9: #{graphsage_forward.4} parent=0 // pred_fallthru
    _
  // Predicated region
  $region10: #{graphsage_forward.4} parent=0 // pred_check
    _
  $region11: #{graphsage_forward.4} parent=0 // pred_check_branch
    %15 = sbr.rel (0) target = $region13
  $region12: #{graphsage_forward.4} parent=0 // pred_region
    _
  $region13: #{graphsage_forward.4} parent=0 // pred_fallthru
    _
  %v16 = vld [vmem:[%s0] sm:$0xff]
  %v17 = vld [vmem:[%s0 + $0x8] sm:$0xff]
  %v18 = vld [vmem:[%s0 + $0x10] sm:$0xff]
  %v19 = vld [vmem:[%s0 + $0x18] sm:$0xff]
  %v20 = vld [vmem:[%s0 + $0x20] sm:$0xff]
  %v21 = vld [vmem:[%s0 + $0x28] sm:$0xff]
  %v22 = vld [vmem:[%s0 + $0x30] sm:$0xff]
  %v23 = vld [vmem:[%s0 + $0x38] sm:$0xff]
  %v24 = vld [vmem:[%s0 + $0x40] sm:$0xff]
  %v25 = vld [vmem:[%s0 + $0x48] sm:$0xff]
  %v26 = vld [vmem:[%s0 + $0x50] sm:$0xff]
  %v27 = vld [vmem:[%s0 + $0x58] sm:$0xff]
  %v28 = vld [vmem:[%s0 + $0x60] sm:$0xff]
  %v29 = vld [vmem:[%s0 + $0x68] sm:$0xff]
  %v30 = vld [vmem:[%s0 + $0x70] sm:$0xff]
  %v31 = vld [vmem:[%s0 + $0x78] sm:$0xff]
  %v32 = vld [vmem:[%s0 + $0x80] sm:$0xff]
  %v33 = vld [vmem:[%s0 + $0x88] sm:$0xff]
  %v34 = vld [vmem:[%s0 + $0x90] sm:$0xff]
  %v35 = vld [vmem:[%s0 + $0x98] sm:$0xff]
  %v36 = vld [vmem:[%s0 + $0xa0] sm:$0xff]
  %v37 = vld [vmem:[%s0 + $0xa8] sm:$0xff]
  %v38 = vld [vmem:[%s0 + $0xb0] sm:$0xff]
  %v39 = vld [vmem:[%s0 + $0xb8] sm:$0xff]
  %v40 = vld [vmem:[%s0 + $0xc0] sm:$0xff]
  %v41 = vld [vmem:[%s0 + $0xc8] sm:$0xff]
  %v42 = vld [vmem:[%s0 + $0xd0] sm:$0xff]
  %v43 = vld [vmem:[%s0 + $0xd8] sm:$0xff]
  %v44 = vld [vmem:[%s0 + $0xe0] sm:$0xff]
  %v45 = vld [vmem:[%s0 + $0xe8] sm:$0xff]
  %v46 = vld [vmem:[%s0 + $0xf0] sm:$0xff]
  %v47 = vld [vmem:[%s0 + $0xf8] sm:$0xff]
  %v48 = vld [vmem:[%s0 + $0x100] sm:$0xff]
  %v49 = vld [vmem:[%s0 + $0x108] sm:$0xff]
  %v50 = vld [vmem:[%s0 + $0x110] sm:$0xff]
  %v51 = vld [vmem:[%s0 + $0x118] sm:$0xff]
  %v52 = vld [vmem:[%s0 + $0x120] sm:$0xff]
  %v53 = vld [vmem:[%s0 + $0x128] sm:$0xff]
  %v54 = vld [vmem:[%s0 + $0x130] sm:$0xff]
  %v55 = vld [vmem:[%s0 + $0x138] sm:$0xff]
  %v56 = vld [vmem:[%s0 + $0x140] sm:$0xff]
  %v57 = vld [vmem:[%s0 + $0x148] sm:$0xff]
  %v58 = vld [vmem:[%s0 + $0x150] sm:$0xff]
  %v59 = vld [vmem:[%s0 + $0x158] sm:$0xff]
  %v60 = vld [vmem:[%s0 + $0x160] sm:$0xff]
  %v61 = vld [vmem:[%s0 + $0x168] sm:$0xff]
  %v62 = vld [vmem:[%s0 + $0x170] sm:$0xff]
  %v63 = vld [vmem:[%s0 + $0x178] sm:$0xff]
  %v64 = vld [vmem:[%s0 + $0x180] sm:$0xff]
  %v65 = vld [vmem:[%s0 + $0x188] sm:$0xff]
  %v66 = vld [vmem:[%s0 + $0x190] sm:$0xff]
  %v67 = vld [vmem:[%s0 + $0x198] sm:$0xff]
  %v68 = vld [vmem:[%s0 + $0x1a0] sm:$0xff]
  %v69 = vld [vmem:[%s0 + $0x1a8] sm:$0xff]
  %v70 = vld [vmem:[%s0 + $0x1b0] sm:$0xff]
  %v71 = vld [vmem:[%s0 + $0x1b8] sm:$0xff]
  %v72 = vld [vmem:[%s0 + $0x1c0] sm:$0xff]
  %v73 = vld [vmem:[%s0 + $0x1c8] sm:$0xff]
  %v74 = vld [vmem:[%s0 + $0x1d0] sm:$0xff]
  %v75 = vld [vmem:[%s0 + $0x1d8] sm:$0xff]
  %v76 = vld [vmem:[%s0 + $0x1e0] sm:$0xff]
  %v77 = vld [vmem:[%s0 + $0x1e8] sm:$0xff]
  %v78 = vld [vmem:[%s0 + $0x1f0] sm:$0xff]
  %v79 = vld [vmem:[%s0 + $0x1f8] sm:$0xff]
  %v80 = vld [vmem:[%s1] sm:$0xff]
  %v81 = vld [vmem:[%s1 + $0x8] sm:$0xff]
  %v82 = vld [vmem:[%s1 + $0x10] sm:$0xff]
  %v83 = vld [vmem:[%s1 + $0x18] sm:$0xff]
  %v84 = vld [vmem:[%s1 + $0x20] sm:$0xff]
  %v85 = vld [vmem:[%s1 + $0x28] sm:$0xff]
  %v86 = vld [vmem:[%s1 + $0x30] sm:$0xff]
  %v87 = vld [vmem:[%s1 + $0x38] sm:$0xff]
  %v88 = vld [vmem:[%s1 + $0x40] sm:$0xff]
  %v89 = vld [vmem:[%s1 + $0x48] sm:$0xff]
  %v90 = vld [vmem:[%s1 + $0x50] sm:$0xff]
  %v91 = vld [vmem:[%s1 + $0x58] sm:$0xff]
  %v92 = vld [vmem:[%s1 + $0x60] sm:$0xff]
  %v93 = vld [vmem:[%s1 + $0x68] sm:$0xff]
  %v94 = vld [vmem:[%s1 + $0x70] sm:$0xff]
  %v95 = vld [vmem:[%s1 + $0x78] sm:$0xff]
  %v96 = vld [vmem:[%s1 + $0x80] sm:$0xff]
  %v97 = vld [vmem:[%s1 + $0x88] sm:$0xff]
  %v98 = vld [vmem:[%s1 + $0x90] sm:$0xff]
  %v99 = vld [vmem:[%s1 + $0x98] sm:$0xff]
  %v100 = vld [vmem:[%s1 + $0xa0] sm:$0xff]
  %v101 = vld [vmem:[%s1 + $0xa8] sm:$0xff]
  %v102 = vld [vmem:[%s1 + $0xb0] sm:$0xff]
  %v103 = vld [vmem:[%s1 + $0xb8] sm:$0xff]
  %v104 = vld [vmem:[%s1 + $0xc0] sm:$0xff]
  %v105 = vld [vmem:[%s1 + $0xc8] sm:$0xff]
  %v106 = vld [vmem:[%s1 + $0xd0] sm:$0xff]
  %v107 = vld [vmem:[%s1 + $0xd8] sm:$0xff]
  %v108 = vld [vmem:[%s1 + $0xe0] sm:$0xff]
  %v109 = vld [vmem:[%s1 + $0xe8] sm:$0xff]
  %v110 = vld [vmem:[%s1 + $0xf0] sm:$0xff]
  %v111 = vld [vmem:[%s1 + $0xf8] sm:$0xff]
  %v112 = vld [vmem:[%s2] sm:$0x3]
  %v114 = vlaneseq
  %v115 = vshrl.u32 %v114, 7
  %v116 = vsub.s32 0, %v115
  %v117 = vrot.slane %v112, %v116
  %v118 = vlaneseq
  %v119 = vshrl.u32 %v118, 7
  %v120 = vsub.s32 1, %v119
  %v121 = vrot.slane %v112, %v120
  %124 = vmatprep.subr.mxu0 %v81
  %125 = vmatpush1.msra.mxu0 %v80
  %126 = vmatprep.subr.mxu0 %v83
  %127 = vmatpush1.msra.mxu0 %v82
  %128 = vmatprep.subr.mxu0 %v85
  %129 = vmatpush1.msra.mxu0 %v84
  %130 = vmatprep.subr.mxu0 %v87
  %131 = vmatpush1.msra.mxu0 %v86
  %132 = vmatprep.subr.mxu0 %v89
  %133 = vmatpush1.msra.mxu0 %v88
  %134 = vmatprep.subr.mxu0 %v91
  %135 = vmatpush1.msra.mxu0 %v90
  %136 = vmatprep.subr.mxu0 %v93
  %137 = vmatpush1.msra.mxu0 %v92
  %138 = vmatprep.subr.mxu0 %v95
  %139 = vmatpush1.msra.mxu0 %v94
  %140 = vmatprep.subr.mxu0 %v97
  %141 = vmatpush1.msra.mxu0 %v96
  %142 = vmatprep.subr.mxu0 %v99
  %143 = vmatpush1.msra.mxu0 %v98
  %144 = vmatprep.subr.mxu0 %v101
  %145 = vmatpush1.msra.mxu0 %v100
  %146 = vmatprep.subr.mxu0 %v103
  %147 = vmatpush1.msra.mxu0 %v102
  %148 = vmatprep.subr.mxu0 %v105
  %149 = vmatpush1.msra.mxu0 %v104
  %150 = vmatprep.subr.mxu0 %v107
  %151 = vmatpush1.msra.mxu0 %v106
  %152 = vmatprep.subr.mxu0 %v109
  %153 = vmatpush1.msra.mxu0 %v108
  %154 = vmatprep.subr.mxu0 %v111
  %155 = vmatpush1.msra.mxu0 %v110
  %156 = vmatprep.subr.mxu0 0.0
  %157 = vmatpush1.msra.mxu0 0.0
  %158 = vmatprep.subr.mxu0 0.0
  %159 = vmatpush1.msra.mxu0 0.0
  %160 = vmatprep.subr.mxu0 0.0
  %161 = vmatpush1.msra.mxu0 0.0
  %162 = vmatprep.subr.mxu0 0.0
  %163 = vmatpush1.msra.mxu0 0.0
  %164 = vmatprep.subr.mxu0 0.0
  %165 = vmatpush1.msra.mxu0 0.0
  %166 = vmatprep.subr.mxu0 0.0
  %167 = vmatpush1.msra.mxu0 0.0
  %168 = vmatprep.subr.mxu0 0.0
  %169 = vmatpush1.msra.mxu0 0.0
  %170 = vmatprep.subr.mxu0 0.0
  %171 = vmatpush1.msra.mxu0 0.0
  %172 = vmatprep.subr.mxu0 0.0
  %173 = vmatpush1.msra.mxu0 0.0
  %174 = vmatprep.subr.mxu0 0.0
  %175 = vmatpush1.msra.mxu0 0.0
  %176 = vmatprep.subr.mxu0 0.0
  %177 = vmatpush1.msra.mxu0 0.0
  %178 = vmatprep.subr.mxu0 0.0
  %179 = vmatpush1.msra.mxu0 0.0
  %180 = vmatprep.subr.mxu0 0.0
  %181 = vmatpush1.msra.mxu0 0.0
  %182 = vmatprep.subr.mxu0 0.0
  %183 = vmatpush1.msra.mxu0 0.0
  %184 = vmatprep.subr.mxu0 0.0
  %185 = vmatpush1.msra.mxu0 0.0
  %186 = vmatprep.subr.mxu0 0.0
  %187 = vmatpush1.msra.mxu0 0.0
  %188 = vmatprep.mubr.f32.mxu0 0.0
  %189 = vmatmul.mubr.f32.gmra.mrb[0].mxu0 %v16
  %v190 = vpop.f32.mrb[0].mxu0
  %v191 = vadd.f32 %v117, %v190
  %v192 = vpop.f32.mrb[0].mxu0
  %v193 = vadd.f32 %v121, %v192
  %194 = vmatprep.mubr.f32.mxu0 0.0
  %195 = vmatmul.mubr.f32.gmra.mrb[0].mxu0 %v17
  %v196 = vpop.f32.mrb[0].mxu0
  %v197 = vadd.f32 %v117, %v196
  %v198 = vpop.f32.mrb[0].mxu0
  %v199 = vadd.f32 %v121, %v198
  %200 = vmatprep.mubr.f32.mxu0 0.0
  %201 = vmatmul.mubr.f32.gmra.mrb[0].mxu0 %v18
  %v202 = vpop.f32.mrb[0].mxu0
  %v203 = vadd.f32 %v117, %v202
  %v204 = vpop.f32.mrb[0].mxu0
  %v205 = vadd.f32 %v121, %v204
  %206 = vmatprep.mubr.f32.mxu0 0.0
  %207 = vmatmul.mubr.f32.gmra.mrb[0].mxu0 %v19
  %v208 = vpop.f32.mrb[0].mxu0
  %v209 = vadd.f32 %v117, %v208
  %v210 = vpop.f32.mrb[0].mxu0
  %v211 = vadd.f32 %v121, %v210
  %212 = vmatprep.mubr.f32.mxu0 0.0
  %213 = vmatmul.mubr.f32.gmra.mrb[0].mxu0 %v20
  %v214 = vpop.f32.mrb[0].mxu0
  %v215 = vadd.f32 %v117, %v214
  %v216 = vpop.f32.mrb[0].mxu0
  %v217 = vadd.f32 %v121, %v216
  %218 = vmatprep.mubr.f32.mxu0 0.0
  %219 = vmatmul.mubr.f32.gmra.mrb[0].mxu0 %v21
  %v220 = vpop.f32.mrb[0].mxu0
  %v221 = vadd.f32 %v117, %v220
  %v222 = vpop.f32.mrb[0].mxu0
  %v223 = vadd.f32 %v121, %v222
  %224 = vmatprep.mubr.f32.mxu0 0.0
  %225 = vmatmul.mubr.f32.gmra.mrb[0].mxu0 %v22
  %v226 = vpop.f32.mrb[0].mxu0
  %v227 = vadd.f32 %v117, %v226
  %v228 = vpop.f32.mrb[0].mxu0
  %v229 = vadd.f32 %v121, %v228
  %230 = vmatprep.mubr.f32.mxu0 0.0
  %231 = vmatmul.mubr.f32.gmra.mrb[0].mxu0 %v23
  %v232 = vpop.f32.mrb[0].mxu0
  %v233 = vadd.f32 %v117, %v232
  %v234 = vpop.f32.mrb[0].mxu0
  %v235 = vadd.f32 %v121, %v234
  %236 = vmatprep.mubr.f32.mxu0 0.0
  %237 = vmatmul.mubr.f32.gmra.mrb[0].mxu0 %v24
  %v238 = vpop.f32.mrb[0].mxu0
  %v239 = vadd.f32 %v117, %v238
  %v240 = vpop.f32.mrb[0].mxu0
  %v241 = vadd.f32 %v121, %v240
  %242 = vmatprep.mubr.f32.mxu0 0.0
  %243 = vmatmul.mubr.f32.gmra.mrb[0].mxu0 %v25
  %v244 = vpop.f32.mrb[0].mxu0
  %v245 = vadd.f32 %v117, %v244
  %v246 = vpop.f32.mrb[0].mxu0
  %v247 = vadd.f32 %v121, %v246
  %248 = vmatprep.mubr.f32.mxu0 0.0
  %249 = vmatmul.mubr.f32.gmra.mrb[0].mxu0 %v26
  %v250 = vpop.f32.mrb[0].mxu0
  %v251 = vadd.f32 %v117, %v250
  %v252 = vpop.f32.mrb[0].mxu0
  %v253 = vadd.f32 %v121, %v252
  %254 = vmatprep.mubr.f32.mxu0 0.0
  %255 = vmatmul.mubr.f32.gmra.mrb[0].mxu0 %v27
  %v256 = vpop.f32.mrb[0].mxu0
  %v257 = vadd.f32 %v117, %v256
  %v258 = vpop.f32.mrb[0].mxu0
  %v259 = vadd.f32 %v121, %v258
  %260 = vmatprep.mubr.f32.mxu0 0.0
  %261 = vmatmul.mubr.f32.gmra.mrb[0].mxu0 %v28
  %v262 = vpop.f32.mrb[0].mxu0
  %v263 = vadd.f32 %v117, %v262
  %v264 = vpop.f32.mrb[0].mxu0
  %v265 = vadd.f32 %v121, %v264
  %266 = vmatprep.mubr.f32.mxu0 0.0
  %267 = vmatmul.mubr.f32.gmra.mrb[0].mxu0 %v29
  %v268 = vpop.f32.mrb[0].mxu0
  %v269 = vadd.f32 %v117, %v268
  %v270 = vpop.f32.mrb[0].mxu0
  %v271 = vadd.f32 %v121, %v270
  %272 = vmatprep.mubr.f32.mxu0 0.0
  %273 = vmatmul.mubr.f32.gmra.mrb[0].mxu0 %v30
  %v274 = vpop.f32.mrb[0].mxu0
  %v275 = vadd.f32 %v117, %v274
  %v276 = vpop.f32.mrb[0].mxu0
  %v277 = vadd.f32 %v121, %v276
  %278 = vmatprep.mubr.f32.mxu0 0.0
  %279 = vmatmul.mubr.f32.gmra.mrb[0].mxu0 %v31
  %v280 = vpop.f32.mrb[0].mxu0
  %v281 = vadd.f32 %v117, %v280
  %v282 = vpop.f32.mrb[0].mxu0
  %v283 = vadd.f32 %v121, %v282
  %284 = vmatprep.mubr.f32.mxu0 0.0
  %285 = vmatmul.mubr.f32.gmra.mrb[0].mxu0 %v32
  %v286 = vpop.f32.mrb[0].mxu0
  %v287 = vadd.f32 %v117, %v286
  %v288 = vpop.f32.mrb[0].mxu0
  %v289 = vadd.f32 %v121, %v288
  %290 = vmatprep.mubr.f32.mxu0 0.0
  %291 = vmatmul.mubr.f32.gmra.mrb[0].mxu0 %v33
  %v292 = vpop.f32.mrb[0].mxu0
  %v293 = vadd.f32 %v117, %v292
  %v294 = vpop.f32.mrb[0].mxu0
  %v295 = vadd.f32 %v121, %v294
  %296 = vmatprep.mubr.f32.mxu0 0.0
  %297 = vmatmul.mubr.f32.gmra.mrb[0].mxu0 %v34
  %v298 = vpop.f32.mrb[0].mxu0
  %v299 = vadd.f32 %v117, %v298
  %v300 = vpop.f32.mrb[0].mxu0
  %v301 = vadd.f32 %v121, %v300
  %302 = vmatprep.mubr.f32.mxu0 0.0
  %303 = vmatmul.mubr.f32.gmra.mrb[0].mxu0 %v35
  %v304 = vpop.f32.mrb[0].mxu0
  %v305 = vadd.f32 %v117, %v304
  %v306 = vpop.f32.mrb[0].mxu0
  %v307 = vadd.f32 %v121, %v306
  %308 = vmatprep.mubr.f32.mxu0 0.0
  %309 = vmatmul.mubr.f32.gmra.mrb[0].mxu0 %v36
  %v310 = vpop.f32.mrb[0].mxu0
  %v311 = vadd.f32 %v117, %v310
  %v312 = vpop.f32.mrb[0].mxu0
  %v313 = vadd.f32 %v121, %v312
  %314 = vmatprep.mubr.f32.mxu0 0.0
  %315 = vmatmul.mubr.f32.gmra.mrb[0].mxu0 %v37
  %v316 = vpop.f32.mrb[0].mxu0
  %v317 = vadd.f32 %v117, %v316
  %v318 = vpop.f32.mrb[0].mxu0
  %v319 = vadd.f32 %v121, %v318
  %320 = vmatprep.mubr.f32.mxu0 0.0
  %321 = vmatmul.mubr.f32.gmra.mrb[0].mxu0 %v38
  %v322 = vpop.f32.mrb[0].mxu0
  %v323 = vadd.f32 %v117, %v322
  %v324 = vpop.f32.mrb[0].mxu0
  %v325 = vadd.f32 %v121, %v324
  %326 = vmatprep.mubr.f32.mxu0 0.0
  %327 = vmatmul.mubr.f32.gmra.mrb[0].mxu0 %v39
  %v328 = vpop.f32.mrb[0].mxu0
  %v329 = vadd.f32 %v117, %v328
  %v330 = vpop.f32.mrb[0].mxu0
  %v331 = vadd.f32 %v121, %v330
  %332 = vmatprep.mubr.f32.mxu0 0.0
  %333 = vmatmul.mubr.f32.gmra.mrb[0].mxu0 %v40
  %v334 = vpop.f32.mrb[0].mxu0
  %v335 = vadd.f32 %v117, %v334
  %v336 = vpop.f32.mrb[0].mxu0
  %v337 = vadd.f32 %v121, %v336
  %338 = vmatprep.mubr.f32.mxu0 0.0
  %339 = vmatmul.mubr.f32.gmra.mrb[0].mxu0 %v41
  %v340 = vpop.f32.mrb[0].mxu0
  %v341 = vadd.f32 %v117, %v340
  %v342 = vpop.f32.mrb[0].mxu0
  %v343 = vadd.f32 %v121, %v342
  %344 = vmatprep.mubr.f32.mxu0 0.0
  %345 = vmatmul.mubr.f32.gmra.mrb[0].mxu0 %v42
  %v346 = vpop.f32.mrb[0].mxu0
  %v347 = vadd.f32 %v117, %v346
  %v348 = vpop.f32.mrb[0].mxu0
  %v349 = vadd.f32 %v121, %v348
  %350 = vmatprep.mubr.f32.mxu0 0.0
  %351 = vmatmul.mubr.f32.gmra.mrb[0].mxu0 %v43
  %v352 = vpop.f32.mrb[0].mxu0
  %v353 = vadd.f32 %v117, %v352
  %v354 = vpop.f32.mrb[0].mxu0
  %v355 = vadd.f32 %v121, %v354
  %356 = vmatprep.mubr.f32.mxu0 0.0
  %357 = vmatmul.mubr.f32.gmra.mrb[0].mxu0 %v44
  %v358 = vpop.f32.mrb[0].mxu0
  %v359 = vadd.f32 %v117, %v358
  %v360 = vpop.f32.mrb[0].mxu0
  %v361 = vadd.f32 %v121, %v360
  %362 = vmatprep.mubr.f32.mxu0 0.0
  %363 = vmatmul.mubr.f32.gmra.mrb[0].mxu0 %v45
  %v364 = vpop.f32.mrb[0].mxu0
  %v365 = vadd.f32 %v117, %v364
  %v366 = vpop.f32.mrb[0].mxu0
  %v367 = vadd.f32 %v121, %v366
  %368 = vmatprep.mubr.f32.mxu0 0.0
  %369 = vmatmul.mubr.f32.gmra.mrb[0].mxu0 %v46
  %v370 = vpop.f32.mrb[0].mxu0
  %v371 = vadd.f32 %v117, %v370
  %v372 = vpop.f32.mrb[0].mxu0
  %v373 = vadd.f32 %v121, %v372
  %374 = vmatprep.mubr.f32.mxu0 0.0
  %375 = vmatmul.mubr.f32.gmra.mrb[0].mxu0 %v47
  %v376 = vpop.f32.mrb[0].mxu0
  %v377 = vadd.f32 %v117, %v376
  %v378 = vpop.f32.mrb[0].mxu0
  %v379 = vadd.f32 %v121, %v378
  %380 = vmatprep.mubr.f32.mxu0 0.0
  %381 = vmatmul.mubr.f32.gmra.mrb[0].mxu0 %v48
  %v382 = vpop.f32.mrb[0].mxu0
  %v383 = vadd.f32 %v117, %v382
  %v384 = vpop.f32.mrb[0].mxu0
  %v385 = vadd.f32 %v121, %v384
  %386 = vmatprep.mubr.f32.mxu0 0.0
  %387 = vmatmul.mubr.f32.gmra.mrb[0].mxu0 %v49
  %v388 = vpop.f32.mrb[0].mxu0
  %v389 = vadd.f32 %v117, %v388
  %v390 = vpop.f32.mrb[0].mxu0
  %v391 = vadd.f32 %v121, %v390
  %392 = vmatprep.mubr.f32.mxu0 0.0
  %393 = vmatmul.mubr.f32.gmra.mrb[0].mxu0 %v50
  %v394 = vpop.f32.mrb[0].mxu0
  %v395 = vadd.f32 %v117, %v394
  %v396 = vpop.f32.mrb[0].mxu0
  %v397 = vadd.f32 %v121, %v396
  %398 = vmatprep.mubr.f32.mxu0 0.0
  %399 = vmatmul.mubr.f32.gmra.mrb[0].mxu0 %v51
  %v400 = vpop.f32.mrb[0].mxu0
  %v401 = vadd.f32 %v117, %v400
  %v402 = vpop.f32.mrb[0].mxu0
  %v403 = vadd.f32 %v121, %v402
  %404 = vmatprep.mubr.f32.mxu0 0.0
  %405 = vmatmul.mubr.f32.gmra.mrb[0].mxu0 %v52
  %v406 = vpop.f32.mrb[0].mxu0
  %v407 = vadd.f32 %v117, %v406
  %v408 = vpop.f32.mrb[0].mxu0
  %v409 = vadd.f32 %v121, %v408
  %410 = vmatprep.mubr.f32.mxu0 0.0
  %411 = vmatmul.mubr.f32.gmra.mrb[0].mxu0 %v53
  %v412 = vpop.f32.mrb[0].mxu0
  %v413 = vadd.f32 %v117, %v412
  %v414 = vpop.f32.mrb[0].mxu0
  %v415 = vadd.f32 %v121, %v414
  %416 = vmatprep.mubr.f32.mxu0 0.0
  %417 = vmatmul.mubr.f32.gmra.mrb[0].mxu0 %v54
  %v418 = vpop.f32.mrb[0].mxu0
  %v419 = vadd.f32 %v117, %v418
  %v420 = vpop.f32.mrb[0].mxu0
  %v421 = vadd.f32 %v121, %v420
  %422 = vmatprep.mubr.f32.mxu0 0.0
  %423 = vmatmul.mubr.f32.gmra.mrb[0].mxu0 %v55
  %v424 = vpop.f32.mrb[0].mxu0
  %v425 = vadd.f32 %v117, %v424
  %v426 = vpop.f32.mrb[0].mxu0
  %v427 = vadd.f32 %v121, %v426
  %428 = vmatprep.mubr.f32.mxu0 0.0
  %429 = vmatmul.mubr.f32.gmra.mrb[0].mxu0 %v56
  %v430 = vpop.f32.mrb[0].mxu0
  %v431 = vadd.f32 %v117, %v430
  %v432 = vpop.f32.mrb[0].mxu0
  %v433 = vadd.f32 %v121, %v432
  %434 = vmatprep.mubr.f32.mxu0 0.0
  %435 = vmatmul.mubr.f32.gmra.mrb[0].mxu0 %v57
  %v436 = vpop.f32.mrb[0].mxu0
  %v437 = vadd.f32 %v117, %v436
  %v438 = vpop.f32.mrb[0].mxu0
  %v439 = vadd.f32 %v121, %v438
  %440 = vmatprep.mubr.f32.mxu0 0.0
  %441 = vmatmul.mubr.f32.gmra.mrb[0].mxu0 %v58
  %v442 = vpop.f32.mrb[0].mxu0
  %v443 = vadd.f32 %v117, %v442
  %v444 = vpop.f32.mrb[0].mxu0
  %v445 = vadd.f32 %v121, %v444
  %446 = vmatprep.mubr.f32.mxu0 0.0
  %447 = vmatmul.mubr.f32.gmra.mrb[0].mxu0 %v59
  %v448 = vpop.f32.mrb[0].mxu0
  %v449 = vadd.f32 %v117, %v448
  %v450 = vpop.f32.mrb[0].mxu0
  %v451 = vadd.f32 %v121, %v450
  %452 = vmatprep.mubr.f32.mxu0 0.0
  %453 = vmatmul.mubr.f32.gmra.mrb[0].mxu0 %v60
  %v454 = vpop.f32.mrb[0].mxu0
  %v455 = vadd.f32 %v117, %v454
  %v456 = vpop.f32.mrb[0].mxu0
  %v457 = vadd.f32 %v121, %v456
  %458 = vmatprep.mubr.f32.mxu0 0.0
  %459 = vmatmul.mubr.f32.gmra.mrb[0].mxu0 %v61
  %v460 = vpop.f32.mrb[0].mxu0
  %v461 = vadd.f32 %v117, %v460
  %v462 = vpop.f32.mrb[0].mxu0
  %v463 = vadd.f32 %v121, %v462
  %464 = vmatprep.mubr.f32.mxu0 0.0
  %465 = vmatmul.mubr.f32.gmra.mrb[0].mxu0 %v62
  %v466 = vpop.f32.mrb[0].mxu0
  %v467 = vadd.f32 %v117, %v466
  %v468 = vpop.f32.mrb[0].mxu0
  %v469 = vadd.f32 %v121, %v468
  %470 = vmatprep.mubr.f32.mxu0 0.0
  %471 = vmatmul.mubr.f32.gmra.mrb[0].mxu0 %v63
  %v472 = vpop.f32.mrb[0].mxu0
  %v473 = vadd.f32 %v117, %v472
  %v474 = vpop.f32.mrb[0].mxu0
  %v475 = vadd.f32 %v121, %v474
  %476 = vmatprep.mubr.f32.mxu0 0.0
  %477 = vmatmul.mubr.f32.gmra.mrb[0].mxu0 %v64
  %v478 = vpop.f32.mrb[0].mxu0
  %v479 = vadd.f32 %v117, %v478
  %v480 = vpop.f32.mrb[0].mxu0
  %v481 = vadd.f32 %v121, %v480
  %482 = vmatprep.mubr.f32.mxu0 0.0
  %483 = vmatmul.mubr.f32.gmra.mrb[0].mxu0 %v65
  %v484 = vpop.f32.mrb[0].mxu0
  %v485 = vadd.f32 %v117, %v484
  %v486 = vpop.f32.mrb[0].mxu0
  %v487 = vadd.f32 %v121, %v486
  %488 = vmatprep.mubr.f32.mxu0 0.0
  %489 = vmatmul.mubr.f32.gmra.mrb[0].mxu0 %v66
  %v490 = vpop.f32.mrb[0].mxu0
  %v491 = vadd.f32 %v117, %v490
  %v492 = vpop.f32.mrb[0].mxu0
  %v493 = vadd.f32 %v121, %v492
  %494 = vmatprep.mubr.f32.mxu0 0.0
  %495 = vmatmul.mubr.f32.gmra.mrb[0].mxu0 %v67
  %v496 = vpop.f32.mrb[0].mxu0
  %v497 = vadd.f32 %v117, %v496
  %v498 = vpop.f32.mrb[0].mxu0
  %v499 = vadd.f32 %v121, %v498
  %500 = vmatprep.mubr.f32.mxu0 0.0
  %501 = vmatmul.mubr.f32.gmra.mrb[0].mxu0 %v68
  %v502 = vpop.f32.mrb[0].mxu0
  %v503 = vadd.f32 %v117, %v502
  %v504 = vpop.f32.mrb[0].mxu0
  %v505 = vadd.f32 %v121, %v504
  %506 = vmatprep.mubr.f32.mxu0 0.0
  %507 = vmatmul.mubr.f32.gmra.mrb[0].mxu0 %v69
  %v508 = vpop.f32.mrb[0].mxu0
  %v509 = vadd.f32 %v117, %v508
  %v510 = vpop.f32.mrb[0].mxu0
  %v511 = vadd.f32 %v121, %v510
  %512 = vmatprep.mubr.f32.mxu0 0.0
  %513 = vmatmul.mubr.f32.gmra.mrb[0].mxu0 %v70
  %v514 = vpop.f32.mrb[0].mxu0
  %v515 = vadd.f32 %v117, %v514
  %v516 = vpop.f32.mrb[0].mxu0
  %v517 = vadd.f32 %v121, %v516
  %518 = vmatprep.mubr.f32.mxu0 0.0
  %519 = vmatmul.mubr.f32.gmra.mrb[0].mxu0 %v71
  %v520 = vpop.f32.mrb[0].mxu0
  %v521 = vadd.f32 %v117, %v520
  %v522 = vpop.f32.mrb[0].mxu0
  %v523 = vadd.f32 %v121, %v522
  %524 = vmatprep.mubr.f32.mxu0 0.0
  %525 = vmatmul.mubr.f32.gmra.mrb[0].mxu0 %v72
  %v526 = vpop.f32.mrb[0].mxu0
  %v527 = vadd.f32 %v117, %v526
  %v528 = vpop.f32.mrb[0].mxu0
  %v529 = vadd.f32 %v121, %v528
  %530 = vmatprep.mubr.f32.mxu0 0.0
  %531 = vmatmul.mubr.f32.gmra.mrb[0].mxu0 %v73
  %v532 = vpop.f32.mrb[0].mxu0
  %v533 = vadd.f32 %v117, %v532
  %v534 = vpop.f32.mrb[0].mxu0
  %v535 = vadd.f32 %v121, %v534
  %536 = vmatprep.mubr.f32.mxu0 0.0
  %537 = vmatmul.mubr.f32.gmra.mrb[0].mxu0 %v74
  %v538 = vpop.f32.mrb[0].mxu0
  %v539 = vadd.f32 %v117, %v538
  %v540 = vpop.f32.mrb[0].mxu0
  %v541 = vadd.f32 %v121, %v540
  %542 = vmatprep.mubr.f32.mxu0 0.0
  %543 = vmatmul.mubr.f32.gmra.mrb[0].mxu0 %v75
  %v544 = vpop.f32.mrb[0].mxu0
  %v545 = vadd.f32 %v117, %v544
  %v546 = vpop.f32.mrb[0].mxu0
  %v547 = vadd.f32 %v121, %v546
  %548 = vmatprep.mubr.f32.mxu0 0.0
  %549 = vmatmul.mubr.f32.gmra.mrb[0].mxu0 %v76
  %v550 = vpop.f32.mrb[0].mxu0
  %v551 = vadd.f32 %v117, %v550
  %v552 = vpop.f32.mrb[0].mxu0
  %v553 = vadd.f32 %v121, %v552
  %554 = vmatprep.mubr.f32.mxu0 0.0
  %555 = vmatmul.mubr.f32.gmra.mrb[0].mxu0 %v77
  %v556 = vpop.f32.mrb[0].mxu0
  %v557 = vadd.f32 %v117, %v556
  %v558 = vpop.f32.mrb[0].mxu0
  %v559 = vadd.f32 %v121, %v558
  %560 = vmatprep.mubr.f32.mxu0 0.0
  %561 = vmatmul.mubr.f32.gmra.mrb[0].mxu0 %v78
  %v562 = vpop.f32.mrb[0].mxu0
  %v563 = vadd.f32 %v117, %v562
  %v564 = vpop.f32.mrb[0].mxu0
  %v565 = vadd.f32 %v121, %v564
  %566 = vmatprep.mubr.f32.mxu0 0.0
  %567 = vmatmul.mubr.f32.gmra.mrb[0].mxu0 %v79
  %v568 = vpop.f32.mrb[0].mxu0
  %v569 = vadd.f32 %v117, %v568
  %v570 = vpop.f32.mrb[0].mxu0
  %v571 = vadd.f32 %v121, %v570
  %572 = vdwg.mxu0
  %573 = vst [vmem:[%s3] sm:$0xff] %v191
  %574 = vst [vmem:[%s3 + $0x8] sm:$0xff] %v197
  %575 = vst [vmem:[%s3 + $0x10] sm:$0xff] %v203
  %576 = vst [vmem:[%s3 + $0x18] sm:$0xff] %v209
  %577 = vst [vmem:[%s3 + $0x20] sm:$0xff] %v215
  %578 = vst [vmem:[%s3 + $0x28] sm:$0xff] %v221
  %579 = vst [vmem:[%s3 + $0x30] sm:$0xff] %v227
  %580 = vst [vmem:[%s3 + $0x38] sm:$0xff] %v233
  %581 = vst [vmem:[%s3 + $0x40] sm:$0xff] %v239
  %582 = vst [vmem:[%s3 + $0x48] sm:$0xff] %v245
  %583 = vst [vmem:[%s3 + $0x50] sm:$0xff] %v251
  %584 = vst [vmem:[%s3 + $0x58] sm:$0xff] %v257
  %585 = vst [vmem:[%s3 + $0x60] sm:$0xff] %v263
  %586 = vst [vmem:[%s3 + $0x68] sm:$0xff] %v269
  %587 = vst [vmem:[%s3 + $0x70] sm:$0xff] %v275
  %588 = vst [vmem:[%s3 + $0x78] sm:$0xff] %v281
  %589 = vst [vmem:[%s3 + $0x80] sm:$0xff] %v287
  %590 = vst [vmem:[%s3 + $0x88] sm:$0xff] %v293
  %591 = vst [vmem:[%s3 + $0x90] sm:$0xff] %v299
  %592 = vst [vmem:[%s3 + $0x98] sm:$0xff] %v305
  %593 = vst [vmem:[%s3 + $0xa0] sm:$0xff] %v311
  %594 = vst [vmem:[%s3 + $0xa8] sm:$0xff] %v317
  %595 = vst [vmem:[%s3 + $0xb0] sm:$0xff] %v323
  %596 = vst [vmem:[%s3 + $0xb8] sm:$0xff] %v329
  %597 = vst [vmem:[%s3 + $0xc0] sm:$0xff] %v335
  %598 = vst [vmem:[%s3 + $0xc8] sm:$0xff] %v341
  %599 = vst [vmem:[%s3 + $0xd0] sm:$0xff] %v347
  %600 = vst [vmem:[%s3 + $0xd8] sm:$0xff] %v353
  %601 = vst [vmem:[%s3 + $0xe0] sm:$0xff] %v359
  %602 = vst [vmem:[%s3 + $0xe8] sm:$0xff] %v365
  %603 = vst [vmem:[%s3 + $0xf0] sm:$0xff] %v371
  %604 = vst [vmem:[%s3 + $0xf8] sm:$0xff] %v377
  %605 = vst [vmem:[%s3 + $0x100] sm:$0xff] %v383
  %606 = vst [vmem:[%s3 + $0x108] sm:$0xff] %v389
  %607 = vst [vmem:[%s3 + $0x110] sm:$0xff] %v395
  %608 = vst [vmem:[%s3 + $0x118] sm:$0xff] %v401
  %609 = vst [vmem:[%s3 + $0x120] sm:$0xff] %v407
  %610 = vst [vmem:[%s3 + $0x128] sm:$0xff] %v413
  %611 = vst [vmem:[%s3 + $0x130] sm:$0xff] %v419
  %612 = vst [vmem:[%s3 + $0x138] sm:$0xff] %v425
  %613 = vst [vmem:[%s3 + $0x140] sm:$0xff] %v431
  %614 = vst [vmem:[%s3 + $0x148] sm:$0xff] %v437
  %615 = vst [vmem:[%s3 + $0x150] sm:$0xff] %v443
  %616 = vst [vmem:[%s3 + $0x158] sm:$0xff] %v449
  %617 = vst [vmem:[%s3 + $0x160] sm:$0xff] %v455
  %618 = vst [vmem:[%s3 + $0x168] sm:$0xff] %v461
  %619 = vst [vmem:[%s3 + $0x170] sm:$0xff] %v467
  %620 = vst [vmem:[%s3 + $0x178] sm:$0xff] %v473
  %621 = vst [vmem:[%s3 + $0x180] sm:$0xff] %v479
  %622 = vst [vmem:[%s3 + $0x188] sm:$0xff] %v485
  %623 = vst [vmem:[%s3 + $0x190] sm:$0xff] %v491
  %624 = vst [vmem:[%s3 + $0x198] sm:$0xff] %v497
  %625 = vst [vmem:[%s3 + $0x1a0] sm:$0xff] %v503
  %626 = vst [vmem:[%s3 + $0x1a8] sm:$0xff] %v509
  %627 = vst [vmem:[%s3 + $0x1b0] sm:$0xff] %v515
  %628 = vst [vmem:[%s3 + $0x1b8] sm:$0xff] %v521
  %629 = vst [vmem:[%s3 + $0x1c0] sm:$0xff] %v527
  %630 = vst [vmem:[%s3 + $0x1c8] sm:$0xff] %v533
  %631 = vst [vmem:[%s3 + $0x1d0] sm:$0xff] %v539
  %632 = vst [vmem:[%s3 + $0x1d8] sm:$0xff] %v545
  %633 = vst [vmem:[%s3 + $0x1e0] sm:$0xff] %v551
  %634 = vst [vmem:[%s3 + $0x1e8] sm:$0xff] %v557
  %635 = vst [vmem:[%s3 + $0x1f0] sm:$0xff] %v563
  %636 = vst [vmem:[%s3 + $0x1f8] sm:$0xff] %v569
  %637 = vst [vmem:[%s4] sm:$0xff] %v193
  %638 = vst [vmem:[%s4 + $0x8] sm:$0xff] %v199
  %639 = vst [vmem:[%s4 + $0x10] sm:$0xff] %v205
  %640 = vst [vmem:[%s4 + $0x18] sm:$0xff] %v211
  %641 = vst [vmem:[%s4 + $0x20] sm:$0xff] %v217
  %642 = vst [vmem:[%s4 + $0x28] sm:$0xff] %v223
  %643 = vst [vmem:[%s4 + $0x30] sm:$0xff] %v229
  %644 = vst [vmem:[%s4 + $0x38] sm:$0xff] %v235
  %645 = vst [vmem:[%s4 + $0x40] sm:$0xff] %v241
  %646 = vst [vmem:[%s4 + $0x48] sm:$0xff] %v247
  %647 = vst [vmem:[%s4 + $0x50] sm:$0xff] %v253
  %648 = vst [vmem:[%s4 + $0x58] sm:$0xff] %v259
  %649 = vst [vmem:[%s4 + $0x60] sm:$0xff] %v265
  %650 = vst [vmem:[%s4 + $0x68] sm:$0xff] %v271
  %651 = vst [vmem:[%s4 + $0x70] sm:$0xff] %v277
  %652 = vst [vmem:[%s4 + $0x78] sm:$0xff] %v283
  %653 = vst [vmem:[%s4 + $0x80] sm:$0xff] %v289
  %654 = vst [vmem:[%s4 + $0x88] sm:$0xff] %v295
  %655 = vst [vmem:[%s4 + $0x90] sm:$0xff] %v301
  %656 = vst [vmem:[%s4 + $0x98] sm:$0xff] %v307
  %657 = vst [vmem:[%s4 + $0xa0] sm:$0xff] %v313
  %658 = vst [vmem:[%s4 + $0xa8] sm:$0xff] %v319
  %659 = vst [vmem:[%s4 + $0xb0] sm:$0xff] %v325
  %660 = vst [vmem:[%s4 + $0xb8] sm:$0xff] %v331
  %661 = vst [vmem:[%s4 + $0xc0] sm:$0xff] %v337
  %662 = vst [vmem:[%s4 + $0xc8] sm:$0xff] %v343
  %663 = vst [vmem:[%s4 + $0xd0] sm:$0xff] %v349
  %664 = vst [vmem:[%s4 + $0xd8] sm:$0xff] %v355
  %665 = vst [vmem:[%s4 + $0xe0] sm:$0xff] %v361
  %666 = vst [vmem:[%s4 + $0xe8] sm:$0xff] %v367
  %667 = vst [vmem:[%s4 + $0xf0] sm:$0xff] %v373
  %668 = vst [vmem:[%s4 + $0xf8] sm:$0xff] %v379
  %669 = vst [vmem:[%s4 + $0x100] sm:$0xff] %v385
  %670 = vst [vmem:[%s4 + $0x108] sm:$0xff] %v391
  %671 = vst [vmem:[%s4 + $0x110] sm:$0xff] %v397
  %672 = vst [vmem:[%s4 + $0x118] sm:$0xff] %v403
  %673 = vst [vmem:[%s4 + $0x120] sm:$0xff] %v409
  %674 = vst [vmem:[%s4 + $0x128] sm:$0xff] %v415
  %675 = vst [vmem:[%s4 + $0x130] sm:$0xff] %v421
  %676 = vst [vmem:[%s4 + $0x138] sm:$0xff] %v427
  %677 = vst [vmem:[%s4 + $0x140] sm:$0xff] %v433
  %678 = vst [vmem:[%s4 + $0x148] sm:$0xff] %v439
  %679 = vst [vmem:[%s4 + $0x150] sm:$0xff] %v445
  %680 = vst [vmem:[%s4 + $0x158] sm:$0xff] %v451
  %681 = vst [vmem:[%s4 + $0x160] sm:$0xff] %v457
  %682 = vst [vmem:[%s4 + $0x168] sm:$0xff] %v463
  %683 = vst [vmem:[%s4 + $0x170] sm:$0xff] %v469
  %684 = vst [vmem:[%s4 + $0x178] sm:$0xff] %v475
  %685 = vst [vmem:[%s4 + $0x180] sm:$0xff] %v481
  %686 = vst [vmem:[%s4 + $0x188] sm:$0xff] %v487
  %687 = vst [vmem:[%s4 + $0x190] sm:$0xff] %v493
  %688 = vst [vmem:[%s4 + $0x198] sm:$0xff] %v499
  %689 = vst [vmem:[%s4 + $0x1a0] sm:$0xff] %v505
  %690 = vst [vmem:[%s4 + $0x1a8] sm:$0xff] %v511
  %691 = vst [vmem:[%s4 + $0x1b0] sm:$0xff] %v517
  %692 = vst [vmem:[%s4 + $0x1b8] sm:$0xff] %v523
  %693 = vst [vmem:[%s4 + $0x1c0] sm:$0xff] %v529
  %694 = vst [vmem:[%s4 + $0x1c8] sm:$0xff] %v535
  %695 = vst [vmem:[%s4 + $0x1d0] sm:$0xff] %v541
  %696 = vst [vmem:[%s4 + $0x1d8] sm:$0xff] %v547
  %697 = vst [vmem:[%s4 + $0x1e0] sm:$0xff] %v553
  %698 = vst [vmem:[%s4 + $0x1e8] sm:$0xff] %v559
  %699 = vst [vmem:[%s4 + $0x1f0] sm:$0xff] %v565
  %700 = vst [vmem:[%s4 + $0x1f8] sm:$0xff] %v571
  // Predicated region
  $region14: #{graphsage_forward.4} parent=0 // pred_check
    _
  $region15: #{graphsage_forward.4} parent=0 // pred_check_branch
    %702 = sbr.rel (0) target = $region17
  $region16: #{graphsage_forward.4} parent=0 // pred_region
    _
  $region17: #{graphsage_forward.4} parent=0 // pred_fallthru
    _
  // Predicated region
  $region18: #{graphsage_forward.4} parent=0 // pred_check
    _
  $region19: #{graphsage_forward.4} parent=0 // pred_check_branch
    %704 = sbr.rel (0) target = $region21
  $region20: #{graphsage_forward.4} parent=0 // pred_region
    _
  $region21: #{graphsage_forward.4} parent=0 // pred_fallthru
    _
  // Predicated region
  $region22: #{graphsage_forward.4} parent=0 // pred_check
    _
  $region23: #{graphsage_forward.4} parent=0 // pred_check_branch
    %706 = sbr.rel (0) target = $region25
  $region24: #{graphsage_forward.4} parent=0 // pred_region
    _
  $region25: #{graphsage_forward.4} parent=0 // pred_fallthru
    _
  // Predicated region
  $region26: #{graphsage_forward.4} parent=0 // pred_check
    _
  $region27: #{graphsage_forward.4} parent=0 // pred_check_branch
    %708 = sbr.rel (0) target = $region29
  $region28: #{graphsage_forward.4} parent=0 // pred_region
    _
  $region29: #{graphsage_forward.4} parent=0 // pred_fallthru
    _

// kernel: graphsage_forward.5
$region0: #{graphsage_forward.5}
  #allocation0 [shape = 'u32[]', space=smem, size = 0x4, offset = 0x4, fixed_abs, tag = 'smem constant byte address 0x4 - core index']
  #allocation1 [shape = 'u32[144,128]{1,0:T(1,128)}', space=vmem, size = 0x12000, scoped, tag = 'internal scratch']
  #allocation2 [shape = 'f32[512,128]{1,0:T(8,128)}', space=vmem, size = 0x40000, scoped, tag = 'scratch operand']
  %s0 = inlined_call_operand.vmem [shape: f32[512,512], index: 0, kind: input, shape index: {}]
  %s1 = inlined_call_operand.vmem [shape: f32[512,128], index: 1, kind: input, shape index: {}]
  %s2 = inlined_call_operand.vmem [shape: f32[512,128], index: 2, kind: input, shape index: {}]
  %s3 = inlined_call_operand.vmem [shape: f32[512,128], index: 3, kind: output, shape index: {}]
  %s4 = sld [smem:[#allocation0]]
  $region30: #{graphsage_forward.5} parent=0
    _
  %s6 = ssub.s32 1, %s4
  %s7 = scalar_select 0, %s6, %s4
  // Predicated region
  $region2: #{graphsage_forward.5} parent=0 // pred_check
    _
  $region3: #{graphsage_forward.5} parent=0 // pred_check_branch
    %9 = sbr.rel (0) target = $region5
  $region4: #{graphsage_forward.5} parent=0 // pred_region
    _
  $region5: #{graphsage_forward.5} parent=0 // pred_fallthru
    _
  // Predicated region
  $region6: #{graphsage_forward.5} parent=0 // pred_check
    _
  $region7: #{graphsage_forward.5} parent=0 // pred_check_branch
    %11 = sbr.rel (0) target = $region9
  $region8: #{graphsage_forward.5} parent=0 // pred_region
    _
  $region9: #{graphsage_forward.5} parent=0 // pred_fallthru
    _
  // Predicated region
  $region10: #{graphsage_forward.5} parent=0 // pred_check
    _
  $region11: #{graphsage_forward.5} parent=0 // pred_check_branch
    %13 = sbr.rel (0) target = $region13
  $region12: #{graphsage_forward.5} parent=0 // pred_region
    _
  $region13: #{graphsage_forward.5} parent=0 // pred_fallthru
    _
  %p14 = scmp.eq.s32.totalorder 0, 0
  // Predicated region
  $region14: #{graphsage_forward.5} parent=0 // pred_check
    %p15 = pneg %p14
  $region15: #{graphsage_forward.5} parent=0 // pred_check_branch
    %17 = sbr.rel (%p15) target = $region17
  $region16: #{graphsage_forward.5} parent=0 // pred_region
    %18 = vst [vmem:[#allocation2] sm:$0xff] 0.0
    %19 = vst [vmem:[#allocation2 + $0x8] sm:$0xff] 0.0
    %20 = vst [vmem:[#allocation2 + $0x10] sm:$0xff] 0.0
    %21 = vst [vmem:[#allocation2 + $0x18] sm:$0xff] 0.0
    %22 = vst [vmem:[#allocation2 + $0x20] sm:$0xff] 0.0
    %23 = vst [vmem:[#allocation2 + $0x28] sm:$0xff] 0.0
    %24 = vst [vmem:[#allocation2 + $0x30] sm:$0xff] 0.0
    %25 = vst [vmem:[#allocation2 + $0x38] sm:$0xff] 0.0
    %26 = vst [vmem:[#allocation2 + $0x40] sm:$0xff] 0.0
    %27 = vst [vmem:[#allocation2 + $0x48] sm:$0xff] 0.0
    %28 = vst [vmem:[#allocation2 + $0x50] sm:$0xff] 0.0
    %29 = vst [vmem:[#allocation2 + $0x58] sm:$0xff] 0.0
    %30 = vst [vmem:[#allocation2 + $0x60] sm:$0xff] 0.0
    %31 = vst [vmem:[#allocation2 + $0x68] sm:$0xff] 0.0
    %32 = vst [vmem:[#allocation2 + $0x70] sm:$0xff] 0.0
    %33 = vst [vmem:[#allocation2 + $0x78] sm:$0xff] 0.0
    %34 = vst [vmem:[#allocation2 + $0x80] sm:$0xff] 0.0
    %35 = vst [vmem:[#allocation2 + $0x88] sm:$0xff] 0.0
    %36 = vst [vmem:[#allocation2 + $0x90] sm:$0xff] 0.0
    %37 = vst [vmem:[#allocation2 + $0x98] sm:$0xff] 0.0
    %38 = vst [vmem:[#allocation2 + $0xa0] sm:$0xff] 0.0
    %39 = vst [vmem:[#allocation2 + $0xa8] sm:$0xff] 0.0
    %40 = vst [vmem:[#allocation2 + $0xb0] sm:$0xff] 0.0
    %41 = vst [vmem:[#allocation2 + $0xb8] sm:$0xff] 0.0
    %42 = vst [vmem:[#allocation2 + $0xc0] sm:$0xff] 0.0
    %43 = vst [vmem:[#allocation2 + $0xc8] sm:$0xff] 0.0
    %44 = vst [vmem:[#allocation2 + $0xd0] sm:$0xff] 0.0
    %45 = vst [vmem:[#allocation2 + $0xd8] sm:$0xff] 0.0
    %46 = vst [vmem:[#allocation2 + $0xe0] sm:$0xff] 0.0
    %47 = vst [vmem:[#allocation2 + $0xe8] sm:$0xff] 0.0
    %48 = vst [vmem:[#allocation2 + $0xf0] sm:$0xff] 0.0
    %49 = vst [vmem:[#allocation2 + $0xf8] sm:$0xff] 0.0
    %50 = vst [vmem:[#allocation2 + $0x100] sm:$0xff] 0.0
    %51 = vst [vmem:[#allocation2 + $0x108] sm:$0xff] 0.0
    %52 = vst [vmem:[#allocation2 + $0x110] sm:$0xff] 0.0
    %53 = vst [vmem:[#allocation2 + $0x118] sm:$0xff] 0.0
    %54 = vst [vmem:[#allocation2 + $0x120] sm:$0xff] 0.0
    %55 = vst [vmem:[#allocation2 + $0x128] sm:$0xff] 0.0
    %56 = vst [vmem:[#allocation2 + $0x130] sm:$0xff] 0.0
    %57 = vst [vmem:[#allocation2 + $0x138] sm:$0xff] 0.0
    %58 = vst [vmem:[#allocation2 + $0x140] sm:$0xff] 0.0
    %59 = vst [vmem:[#allocation2 + $0x148] sm:$0xff] 0.0
    %60 = vst [vmem:[#allocation2 + $0x150] sm:$0xff] 0.0
    %61 = vst [vmem:[#allocation2 + $0x158] sm:$0xff] 0.0
    %62 = vst [vmem:[#allocation2 + $0x160] sm:$0xff] 0.0
    %63 = vst [vmem:[#allocation2 + $0x168] sm:$0xff] 0.0
    %64 = vst [vmem:[#allocation2 + $0x170] sm:$0xff] 0.0
    %65 = vst [vmem:[#allocation2 + $0x178] sm:$0xff] 0.0
    %66 = vst [vmem:[#allocation2 + $0x180] sm:$0xff] 0.0
    %67 = vst [vmem:[#allocation2 + $0x188] sm:$0xff] 0.0
    %68 = vst [vmem:[#allocation2 + $0x190] sm:$0xff] 0.0
    %69 = vst [vmem:[#allocation2 + $0x198] sm:$0xff] 0.0
    %70 = vst [vmem:[#allocation2 + $0x1a0] sm:$0xff] 0.0
    %71 = vst [vmem:[#allocation2 + $0x1a8] sm:$0xff] 0.0
    %72 = vst [vmem:[#allocation2 + $0x1b0] sm:$0xff] 0.0
    %73 = vst [vmem:[#allocation2 + $0x1b8] sm:$0xff] 0.0
    %74 = vst [vmem:[#allocation2 + $0x1c0] sm:$0xff] 0.0
    %75 = vst [vmem:[#allocation2 + $0x1c8] sm:$0xff] 0.0
    %76 = vst [vmem:[#allocation2 + $0x1d0] sm:$0xff] 0.0
    %77 = vst [vmem:[#allocation2 + $0x1d8] sm:$0xff] 0.0
    %78 = vst [vmem:[#allocation2 + $0x1e0] sm:$0xff] 0.0
    %79 = vst [vmem:[#allocation2 + $0x1e8] sm:$0xff] 0.0
    %80 = vst [vmem:[#allocation2 + $0x1f0] sm:$0xff] 0.0
    %81 = vst [vmem:[#allocation2 + $0x1f8] sm:$0xff] 0.0
  $region17: #{graphsage_forward.5} parent=0 // pred_fallthru
    _
  %s82 = smul.u32 0, 512
  %s83 = scalar_lea.vmem %s1, %s82
  %v84 = vld [vmem:[%s83] sm:$0xff]
  %v85 = vld [vmem:[%s83 + $0x8] sm:$0xff]
  %v86 = vld [vmem:[%s83 + $0x10] sm:$0xff]
  %v87 = vld [vmem:[%s83 + $0x18] sm:$0xff]
  %v88 = vld [vmem:[%s83 + $0x20] sm:$0xff]
  %v89 = vld [vmem:[%s83 + $0x28] sm:$0xff]
  %v90 = vld [vmem:[%s83 + $0x30] sm:$0xff]
  %v91 = vld [vmem:[%s83 + $0x38] sm:$0xff]
  %v92 = vld [vmem:[%s83 + $0x40] sm:$0xff]
  %v93 = vld [vmem:[%s83 + $0x48] sm:$0xff]
  %v94 = vld [vmem:[%s83 + $0x50] sm:$0xff]
  %v95 = vld [vmem:[%s83 + $0x58] sm:$0xff]
  %v96 = vld [vmem:[%s83 + $0x60] sm:$0xff]
  %v97 = vld [vmem:[%s83 + $0x68] sm:$0xff]
  %v98 = vld [vmem:[%s83 + $0x70] sm:$0xff]
  %v99 = vld [vmem:[%s83 + $0x78] sm:$0xff]
  %v100 = vld [vmem:[%s83 + $0x80] sm:$0xff]
  %v101 = vld [vmem:[%s83 + $0x88] sm:$0xff]
  %v102 = vld [vmem:[%s83 + $0x90] sm:$0xff]
  %v103 = vld [vmem:[%s83 + $0x98] sm:$0xff]
  %v104 = vld [vmem:[%s83 + $0xa0] sm:$0xff]
  %v105 = vld [vmem:[%s83 + $0xa8] sm:$0xff]
  %v106 = vld [vmem:[%s83 + $0xb0] sm:$0xff]
  %v107 = vld [vmem:[%s83 + $0xb8] sm:$0xff]
  %v108 = vld [vmem:[%s83 + $0xc0] sm:$0xff]
  %v109 = vld [vmem:[%s83 + $0xc8] sm:$0xff]
  %v110 = vld [vmem:[%s83 + $0xd0] sm:$0xff]
  %v111 = vld [vmem:[%s83 + $0xd8] sm:$0xff]
  %v112 = vld [vmem:[%s83 + $0xe0] sm:$0xff]
  %v113 = vld [vmem:[%s83 + $0xe8] sm:$0xff]
  %v114 = vld [vmem:[%s83 + $0xf0] sm:$0xff]
  %v115 = vld [vmem:[%s83 + $0xf8] sm:$0xff]
  %v116 = vld [vmem:[%s83 + $0x100] sm:$0xff]
  %v117 = vld [vmem:[%s83 + $0x108] sm:$0xff]
  %v118 = vld [vmem:[%s83 + $0x110] sm:$0xff]
  %v119 = vld [vmem:[%s83 + $0x118] sm:$0xff]
  %v120 = vld [vmem:[%s83 + $0x120] sm:$0xff]
  %v121 = vld [vmem:[%s83 + $0x128] sm:$0xff]
  %v122 = vld [vmem:[%s83 + $0x130] sm:$0xff]
  %v123 = vld [vmem:[%s83 + $0x138] sm:$0xff]
  %v124 = vld [vmem:[%s83 + $0x140] sm:$0xff]
  %v125 = vld [vmem:[%s83 + $0x148] sm:$0xff]
  %v126 = vld [vmem:[%s83 + $0x150] sm:$0xff]
  %v127 = vld [vmem:[%s83 + $0x158] sm:$0xff]
  %v128 = vld [vmem:[%s83 + $0x160] sm:$0xff]
  %v129 = vld [vmem:[%s83 + $0x168] sm:$0xff]
  %v130 = vld [vmem:[%s83 + $0x170] sm:$0xff]
  %v131 = vld [vmem:[%s83 + $0x178] sm:$0xff]
  %v132 = vld [vmem:[%s83 + $0x180] sm:$0xff]
  %v133 = vld [vmem:[%s83 + $0x188] sm:$0xff]
  %v134 = vld [vmem:[%s83 + $0x190] sm:$0xff]
  %v135 = vld [vmem:[%s83 + $0x198] sm:$0xff]
  %v136 = vld [vmem:[%s83 + $0x1a0] sm:$0xff]
  %v137 = vld [vmem:[%s83 + $0x1a8] sm:$0xff]
  %v138 = vld [vmem:[%s83 + $0x1b0] sm:$0xff]
  %v139 = vld [vmem:[%s83 + $0x1b8] sm:$0xff]
  %v140 = vld [vmem:[%s83 + $0x1c0] sm:$0xff]
  %v141 = vld [vmem:[%s83 + $0x1c8] sm:$0xff]
  %v142 = vld [vmem:[%s83 + $0x1d0] sm:$0xff]
  %v143 = vld [vmem:[%s83 + $0x1d8] sm:$0xff]
  %v144 = vld [vmem:[%s83 + $0x1e0] sm:$0xff]
  %v145 = vld [vmem:[%s83 + $0x1e8] sm:$0xff]
  %v146 = vld [vmem:[%s83 + $0x1f0] sm:$0xff]
  %v147 = vld [vmem:[%s83 + $0x1f8] sm:$0xff]
  %v148 = vld [vmem:[#allocation2] sm:$0xff]
  %v149 = vld [vmem:[#allocation2 + $0x8] sm:$0xff]
  %v150 = vld [vmem:[#allocation2 + $0x10] sm:$0xff]
  %v151 = vld [vmem:[#allocation2 + $0x18] sm:$0xff]
  %v152 = vld [vmem:[#allocation2 + $0x20] sm:$0xff]
  %v153 = vld [vmem:[#allocation2 + $0x28] sm:$0xff]
  %v154 = vld [vmem:[#allocation2 + $0x30] sm:$0xff]
  %v155 = vld [vmem:[#allocation2 + $0x38] sm:$0xff]
  %v156 = vld [vmem:[#allocation2 + $0x40] sm:$0xff]
  %v157 = vld [vmem:[#allocation2 + $0x48] sm:$0xff]
  %v158 = vld [vmem:[#allocation2 + $0x50] sm:$0xff]
  %v159 = vld [vmem:[#allocation2 + $0x58] sm:$0xff]
  %v160 = vld [vmem:[#allocation2 + $0x60] sm:$0xff]
  %v161 = vld [vmem:[#allocation2 + $0x68] sm:$0xff]
  %v162 = vld [vmem:[#allocation2 + $0x70] sm:$0xff]
  %v163 = vld [vmem:[#allocation2 + $0x78] sm:$0xff]
  %v164 = vld [vmem:[#allocation2 + $0x80] sm:$0xff]
  %v165 = vld [vmem:[#allocation2 + $0x88] sm:$0xff]
  %v166 = vld [vmem:[#allocation2 + $0x90] sm:$0xff]
  %v167 = vld [vmem:[#allocation2 + $0x98] sm:$0xff]
  %v168 = vld [vmem:[#allocation2 + $0xa0] sm:$0xff]
  %v169 = vld [vmem:[#allocation2 + $0xa8] sm:$0xff]
  %v170 = vld [vmem:[#allocation2 + $0xb0] sm:$0xff]
  %v171 = vld [vmem:[#allocation2 + $0xb8] sm:$0xff]
  %v172 = vld [vmem:[#allocation2 + $0xc0] sm:$0xff]
  %v173 = vld [vmem:[#allocation2 + $0xc8] sm:$0xff]
  %v174 = vld [vmem:[#allocation2 + $0xd0] sm:$0xff]
  %v175 = vld [vmem:[#allocation2 + $0xd8] sm:$0xff]
  %v176 = vld [vmem:[#allocation2 + $0xe0] sm:$0xff]
  %v177 = vld [vmem:[#allocation2 + $0xe8] sm:$0xff]
  %v178 = vld [vmem:[#allocation2 + $0xf0] sm:$0xff]
  %v179 = vld [vmem:[#allocation2 + $0xf8] sm:$0xff]
  %v180 = vld [vmem:[#allocation2 + $0x100] sm:$0xff]
  %v181 = vld [vmem:[#allocation2 + $0x108] sm:$0xff]
  %v182 = vld [vmem:[#allocation2 + $0x110] sm:$0xff]
  %v183 = vld [vmem:[#allocation2 + $0x118] sm:$0xff]
  %v184 = vld [vmem:[#allocation2 + $0x120] sm:$0xff]
  %v185 = vld [vmem:[#allocation2 + $0x128] sm:$0xff]
  %v186 = vld [vmem:[#allocation2 + $0x130] sm:$0xff]
  %v187 = vld [vmem:[#allocation2 + $0x138] sm:$0xff]
  %v188 = vld [vmem:[#allocation2 + $0x140] sm:$0xff]
  %v189 = vld [vmem:[#allocation2 + $0x148] sm:$0xff]
  %v190 = vld [vmem:[#allocation2 + $0x150] sm:$0xff]
  %v191 = vld [vmem:[#allocation2 + $0x158] sm:$0xff]
  %v192 = vld [vmem:[#allocation2 + $0x160] sm:$0xff]
  %v193 = vld [vmem:[#allocation2 + $0x168] sm:$0xff]
  %v194 = vld [vmem:[#allocation2 + $0x170] sm:$0xff]
  %v195 = vld [vmem:[#allocation2 + $0x178] sm:$0xff]
  %v196 = vld [vmem:[#allocation2 + $0x180] sm:$0xff]
  %v197 = vld [vmem:[#allocation2 + $0x188] sm:$0xff]
  %v198 = vld [vmem:[#allocation2 + $0x190] sm:$0xff]
  %v199 = vld [vmem:[#allocation2 + $0x198] sm:$0xff]
  %v200 = vld [vmem:[#allocation2 + $0x1a0] sm:$0xff]
  %v201 = vld [vmem:[#allocation2 + $0x1a8] sm:$0xff]
  %v202 = vld [vmem:[#allocation2 + $0x1b0] sm:$0xff]
  %v203 = vld [vmem:[#allocation2 + $0x1b8] sm:$0xff]
  %v204 = vld [vmem:[#allocation2 + $0x1c0] sm:$0xff]
  %v205 = vld [vmem:[#allocation2 + $0x1c8] sm:$0xff]
  %v206 = vld [vmem:[#allocation2 + $0x1d0] sm:$0xff]
  %v207 = vld [vmem:[#allocation2 + $0x1d8] sm:$0xff]
  %v208 = vld [vmem:[#allocation2 + $0x1e0] sm:$0xff]
  %v209 = vld [vmem:[#allocation2 + $0x1e8] sm:$0xff]
  %v210 = vld [vmem:[#allocation2 + $0x1f0] sm:$0xff]
  %v211 = vld [vmem:[#allocation2 + $0x1f8] sm:$0xff]
  %v212 = vld [vmem:[%s0] sm:$0xff]
  %v213 = vld [vmem:[%s0 + $0x8] sm:$0xff]
  %v214 = vld [vmem:[%s0 + $0x10] sm:$0xff]
  %v215 = vld [vmem:[%s0 + $0x18] sm:$0xff]
  %v216 = vld [vmem:[%s0 + $0x20] sm:$0xff]
  %v217 = vld [vmem:[%s0 + $0x28] sm:$0xff]
  %v218 = vld [vmem:[%s0 + $0x30] sm:$0xff]
  %v219 = vld [vmem:[%s0 + $0x38] sm:$0xff]
  %v220 = vld [vmem:[%s0 + $0x40] sm:$0xff]
  %v221 = vld [vmem:[%s0 + $0x48] sm:$0xff]
  %v222 = vld [vmem:[%s0 + $0x50] sm:$0xff]
  %v223 = vld [vmem:[%s0 + $0x58] sm:$0xff]
  %v224 = vld [vmem:[%s0 + $0x60] sm:$0xff]
  %v225 = vld [vmem:[%s0 + $0x68] sm:$0xff]
  %v226 = vld [vmem:[%s0 + $0x70] sm:$0xff]
  %v227 = vld [vmem:[%s0 + $0x78] sm:$0xff]
  %v228 = vld [vmem:[%s0 + $0x80] sm:$0xff]
  %v229 = vld [vmem:[%s0 + $0x88] sm:$0xff]
  %v230 = vld [vmem:[%s0 + $0x90] sm:$0xff]
  %v231 = vld [vmem:[%s0 + $0x98] sm:$0xff]
  %v232 = vld [vmem:[%s0 + $0xa0] sm:$0xff]
  %v233 = vld [vmem:[%s0 + $0xa8] sm:$0xff]
  %v234 = vld [vmem:[%s0 + $0xb0] sm:$0xff]
  %v235 = vld [vmem:[%s0 + $0xb8] sm:$0xff]
  %v236 = vld [vmem:[%s0 + $0xc0] sm:$0xff]
  %v237 = vld [vmem:[%s0 + $0xc8] sm:$0xff]
  %v238 = vld [vmem:[%s0 + $0xd0] sm:$0xff]
  %v239 = vld [vmem:[%s0 + $0xd8] sm:$0xff]
  %v240 = vld [vmem:[%s0 + $0xe0] sm:$0xff]
  %v241 = vld [vmem:[%s0 + $0xe8] sm:$0xff]
  %v242 = vld [vmem:[%s0 + $0xf0] sm:$0xff]
  %v243 = vld [vmem:[%s0 + $0xf8] sm:$0xff]
  %v244 = vld [vmem:[%s0 + $0x100] sm:$0xff]
  %v245 = vld [vmem:[%s0 + $0x108] sm:$0xff]
  %v246 = vld [vmem:[%s0 + $0x110] sm:$0xff]
  %v247 = vld [vmem:[%s0 + $0x118] sm:$0xff]
  %v248 = vld [vmem:[%s0 + $0x120] sm:$0xff]
  %v249 = vld [vmem:[%s0 + $0x128] sm:$0xff]
  %v250 = vld [vmem:[%s0 + $0x130] sm:$0xff]
  %v251 = vld [vmem:[%s0 + $0x138] sm:$0xff]
  %v252 = vld [vmem:[%s0 + $0x140] sm:$0xff]
  %v253 = vld [vmem:[%s0 + $0x148] sm:$0xff]
  %v254 = vld [vmem:[%s0 + $0x150] sm:$0xff]
  %v255 = vld [vmem:[%s0 + $0x158] sm:$0xff]
  %v256 = vld [vmem:[%s0 + $0x160] sm:$0xff]
  %v257 = vld [vmem:[%s0 + $0x168] sm:$0xff]
  %v258 = vld [vmem:[%s0 + $0x170] sm:$0xff]
  %v259 = vld [vmem:[%s0 + $0x178] sm:$0xff]
  %v260 = vld [vmem:[%s0 + $0x180] sm:$0xff]
  %v261 = vld [vmem:[%s0 + $0x188] sm:$0xff]
  %v262 = vld [vmem:[%s0 + $0x190] sm:$0xff]
  %v263 = vld [vmem:[%s0 + $0x198] sm:$0xff]
  %v264 = vld [vmem:[%s0 + $0x1a0] sm:$0xff]
  %v265 = vld [vmem:[%s0 + $0x1a8] sm:$0xff]
  %v266 = vld [vmem:[%s0 + $0x1b0] sm:$0xff]
  %v267 = vld [vmem:[%s0 + $0x1b8] sm:$0xff]
  %v268 = vld [vmem:[%s0 + $0x1c0] sm:$0xff]
  %v269 = vld [vmem:[%s0 + $0x1c8] sm:$0xff]
  %v270 = vld [vmem:[%s0 + $0x1d0] sm:$0xff]
  %v271 = vld [vmem:[%s0 + $0x1d8] sm:$0xff]
  %v272 = vld [vmem:[%s0 + $0x1e0] sm:$0xff]
  %v273 = vld [vmem:[%s0 + $0x1e8] sm:$0xff]
  %v274 = vld [vmem:[%s0 + $0x1f0] sm:$0xff]
  %v275 = vld [vmem:[%s0 + $0x1f8] sm:$0xff]
  %v276 = vld [vmem:[%s0 + $0x200] sm:$0xff]
  %v277 = vld [vmem:[%s0 + $0x208] sm:$0xff]
  %v278 = vld [vmem:[%s0 + $0x210] sm:$0xff]
  %v279 = vld [vmem:[%s0 + $0x218] sm:$0xff]
  %v280 = vld [vmem:[%s0 + $0x220] sm:$0xff]
  %v281 = vld [vmem:[%s0 + $0x228] sm:$0xff]
  %v282 = vld [vmem:[%s0 + $0x230] sm:$0xff]
  %v283 = vld [vmem:[%s0 + $0x238] sm:$0xff]
  %v284 = vld [vmem:[%s0 + $0x240] sm:$0xff]
  %v285 = vld [vmem:[%s0 + $0x248] sm:$0xff]
  %v286 = vld [vmem:[%s0 + $0x250] sm:$0xff]
  %v287 = vld [vmem:[%s0 + $0x258] sm:$0xff]
  %v288 = vld [vmem:[%s0 + $0x260] sm:$0xff]
  %v289 = vld [vmem:[%s0 + $0x268] sm:$0xff]
  %v290 = vld [vmem:[%s0 + $0x270] sm:$0xff]
  %v291 = vld [vmem:[%s0 + $0x278] sm:$0xff]
  %v292 = vld [vmem:[%s0 + $0x280] sm:$0xff]
  %v293 = vld [vmem:[%s0 + $0x288] sm:$0xff]
  %v294 = vld [vmem:[%s0 + $0x290] sm:$0xff]
  %v295 = vld [vmem:[%s0 + $0x298] sm:$0xff]
  %v296 = vld [vmem:[%s0 + $0x2a0] sm:$0xff]
  %v297 = vld [vmem:[%s0 + $0x2a8] sm:$0xff]
  %v298 = vld [vmem:[%s0 + $0x2b0] sm:$0xff]
  %v299 = vld [vmem:[%s0 + $0x2b8] sm:$0xff]
  %v300 = vld [vmem:[%s0 + $0x2c0] sm:$0xff]
  %v301 = vld [vmem:[%s0 + $0x2c8] sm:$0xff]
  %v302 = vld [vmem:[%s0 + $0x2d0] sm:$0xff]
  %v303 = vld [vmem:[%s0 + $0x2d8] sm:$0xff]
  %v304 = vld [vmem:[%s0 + $0x2e0] sm:$0xff]
  %v305 = vld [vmem:[%s0 + $0x2e8] sm:$0xff]
  %v306 = vld [vmem:[%s0 + $0x2f0] sm:$0xff]
  %v307 = vld [vmem:[%s0 + $0x2f8] sm:$0xff]
  %v308 = vld [vmem:[%s0 + $0x300] sm:$0xff]
  %v309 = vld [vmem:[%s0 + $0x308] sm:$0xff]
  %v310 = vld [vmem:[%s0 + $0x310] sm:$0xff]
  %v311 = vld [vmem:[%s0 + $0x318] sm:$0xff]
  %v312 = vld [vmem:[%s0 + $0x320] sm:$0xff]
  %v313 = vld [vmem:[%s0 + $0x328] sm:$0xff]
  %v314 = vld [vmem:[%s0 + $0x330] sm:$0xff]
  %v315 = vld [vmem:[%s0 + $0x338] sm:$0xff]
  %v316 = vld [vmem:[%s0 + $0x340] sm:$0xff]
  %v317 = vld [vmem:[%s0 + $0x348] sm:$0xff]
  %v318 = vld [vmem:[%s0 + $0x350] sm:$0xff]
  %v319 = vld [vmem:[%s0 + $0x358] sm:$0xff]
  %v320 = vld [vmem:[%s0 + $0x360] sm:$0xff]
  %v321 = vld [vmem:[%s0 + $0x368] sm:$0xff]
  %v322 = vld [vmem:[%s0 + $0x370] sm:$0xff]
  %v323 = vld [vmem:[%s0 + $0x378] sm:$0xff]
  %v324 = vld [vmem:[%s0 + $0x380] sm:$0xff]
  %v325 = vld [vmem:[%s0 + $0x388] sm:$0xff]
  %v326 = vld [vmem:[%s0 + $0x390] sm:$0xff]
  %v327 = vld [vmem:[%s0 + $0x398] sm:$0xff]
  %v328 = vld [vmem:[%s0 + $0x3a0] sm:$0xff]
  %v329 = vld [vmem:[%s0 + $0x3a8] sm:$0xff]
  %v330 = vld [vmem:[%s0 + $0x3b0] sm:$0xff]
  %v331 = vld [vmem:[%s0 + $0x3b8] sm:$0xff]
  %v332 = vld [vmem:[%s0 + $0x3c0] sm:$0xff]
  %v333 = vld [vmem:[%s0 + $0x3c8] sm:$0xff]
  %v334 = vld [vmem:[%s0 + $0x3d0] sm:$0xff]
  %v335 = vld [vmem:[%s0 + $0x3d8] sm:$0xff]
  %v336 = vld [vmem:[%s0 + $0x3e0] sm:$0xff]
  %v337 = vld [vmem:[%s0 + $0x3e8] sm:$0xff]
  %v338 = vld [vmem:[%s0 + $0x3f0] sm:$0xff]
  %v339 = vld [vmem:[%s0 + $0x3f8] sm:$0xff]
  %v340 = vld [vmem:[%s0 + $0x400] sm:$0xff]
  %v341 = vld [vmem:[%s0 + $0x408] sm:$0xff]
  %v342 = vld [vmem:[%s0 + $0x410] sm:$0xff]
  %v343 = vld [vmem:[%s0 + $0x418] sm:$0xff]
  %v344 = vld [vmem:[%s0 + $0x420] sm:$0xff]
  %v345 = vld [vmem:[%s0 + $0x428] sm:$0xff]
  %v346 = vld [vmem:[%s0 + $0x430] sm:$0xff]
  %v347 = vld [vmem:[%s0 + $0x438] sm:$0xff]
  %v348 = vld [vmem:[%s0 + $0x440] sm:$0xff]
  %v349 = vld [vmem:[%s0 + $0x448] sm:$0xff]
  %v350 = vld [vmem:[%s0 + $0x450] sm:$0xff]
  %v351 = vld [vmem:[%s0 + $0x458] sm:$0xff]
  %v352 = vld [vmem:[%s0 + $0x460] sm:$0xff]
  %v353 = vld [vmem:[%s0 + $0x468] sm:$0xff]
  %v354 = vld [vmem:[%s0 + $0x470] sm:$0xff]
  %v355 = vld [vmem:[%s0 + $0x478] sm:$0xff]
  %v356 = vld [vmem:[%s0 + $0x480] sm:$0xff]
  %v357 = vld [vmem:[%s0 + $0x488] sm:$0xff]
  %v358 = vld [vmem:[%s0 + $0x490] sm:$0xff]
  %v359 = vld [vmem:[%s0 + $0x498] sm:$0xff]
  %v360 = vld [vmem:[%s0 + $0x4a0] sm:$0xff]
  %v361 = vld [vmem:[%s0 + $0x4a8] sm:$0xff]
  %v362 = vld [vmem:[%s0 + $0x4b0] sm:$0xff]
  %v363 = vld [vmem:[%s0 + $0x4b8] sm:$0xff]
  %v364 = vld [vmem:[%s0 + $0x4c0] sm:$0xff]
  %v365 = vld [vmem:[%s0 + $0x4c8] sm:$0xff]
  %v366 = vld [vmem:[%s0 + $0x4d0] sm:$0xff]
  %v367 = vld [vmem:[%s0 + $0x4d8] sm:$0xff]
  %v368 = vld [vmem:[%s0 + $0x4e0] sm:$0xff]
  %v369 = vld [vmem:[%s0 + $0x4e8] sm:$0xff]
  %v370 = vld [vmem:[%s0 + $0x4f0] sm:$0xff]
  %v371 = vld [vmem:[%s0 + $0x4f8] sm:$0xff]
  %v372 = vld [vmem:[%s0 + $0x500] sm:$0xff]
  %v373 = vld [vmem:[%s0 + $0x508] sm:$0xff]
  %v374 = vld [vmem:[%s0 + $0x510] sm:$0xff]
  %v375 = vld [vmem:[%s0 + $0x518] sm:$0xff]
  %v376 = vld [vmem:[%s0 + $0x520] sm:$0xff]
  %v377 = vld [vmem:[%s0 + $0x528] sm:$0xff]
  %v378 = vld [vmem:[%s0 + $0x530] sm:$0xff]
  %v379 = vld [vmem:[%s0 + $0x538] sm:$0xff]
  %v380 = vld [vmem:[%s0 + $0x540] sm:$0xff]
  %v381 = vld [vmem:[%s0 + $0x548] sm:$0xff]
  %v382 = vld [vmem:[%s0 + $0x550] sm:$0xff]
  %v383 = vld [vmem:[%s0 + $0x558] sm:$0xff]
  %v384 = vld [vmem:[%s0 + $0x560] sm:$0xff]
  %v385 = vld [vmem:[%s0 + $0x568] sm:$0xff]
  %v386 = vld [vmem:[%s0 + $0x570] sm:$0xff]
  %v387 = vld [vmem:[%s0 + $0x578] sm:$0xff]
  %v388 = vld [vmem:[%s0 + $0x580] sm:$0xff]
  %v389 = vld [vmem:[%s0 + $0x588] sm:$0xff]
  %v390 = vld [vmem:[%s0 + $0x590] sm:$0xff]
  %v391 = vld [vmem:[%s0 + $0x598] sm:$0xff]
  %v392 = vld [vmem:[%s0 + $0x5a0] sm:$0xff]
  %v393 = vld [vmem:[%s0 + $0x5a8] sm:$0xff]
  %v394 = vld [vmem:[%s0 + $0x5b0] sm:$0xff]
  %v395 = vld [vmem:[%s0 + $0x5b8] sm:$0xff]
  %v396 = vld [vmem:[%s0 + $0x5c0] sm:$0xff]
  %v397 = vld [vmem:[%s0 + $0x5c8] sm:$0xff]
  %v398 = vld [vmem:[%s0 + $0x5d0] sm:$0xff]
  %v399 = vld [vmem:[%s0 + $0x5d8] sm:$0xff]
  %v400 = vld [vmem:[%s0 + $0x5e0] sm:$0xff]
  %v401 = vld [vmem:[%s0 + $0x5e8] sm:$0xff]
  %v402 = vld [vmem:[%s0 + $0x5f0] sm:$0xff]
  %v403 = vld [vmem:[%s0 + $0x5f8] sm:$0xff]
  %v404 = vld [vmem:[%s0 + $0x600] sm:$0xff]
  %v405 = vld [vmem:[%s0 + $0x608] sm:$0xff]
  %v406 = vld [vmem:[%s0 + $0x610] sm:$0xff]
  %v407 = vld [vmem:[%s0 + $0x618] sm:$0xff]
  %v408 = vld [vmem:[%s0 + $0x620] sm:$0xff]
  %v409 = vld [vmem:[%s0 + $0x628] sm:$0xff]
  %v410 = vld [vmem:[%s0 + $0x630] sm:$0xff]
  %v411 = vld [vmem:[%s0 + $0x638] sm:$0xff]
  %v412 = vld [vmem:[%s0 + $0x640] sm:$0xff]
  %v413 = vld [vmem:[%s0 + $0x648] sm:$0xff]
  %v414 = vld [vmem:[%s0 + $0x650] sm:$0xff]
  %v415 = vld [vmem:[%s0 + $0x658] sm:$0xff]
  %v416 = vld [vmem:[%s0 + $0x660] sm:$0xff]
  %v417 = vld [vmem:[%s0 + $0x668] sm:$0xff]
  %v418 = vld [vmem:[%s0 + $0x670] sm:$0xff]
  %v419 = vld [vmem:[%s0 + $0x678] sm:$0xff]
  %v420 = vld [vmem:[%s0 + $0x680] sm:$0xff]
  %v421 = vld [vmem:[%s0 + $0x688] sm:$0xff]
  %v422 = vld [vmem:[%s0 + $0x690] sm:$0xff]
  %v423 = vld [vmem:[%s0 + $0x698] sm:$0xff]
  %v424 = vld [vmem:[%s0 + $0x6a0] sm:$0xff]
  %v425 = vld [vmem:[%s0 + $0x6a8] sm:$0xff]
  %v426 = vld [vmem:[%s0 + $0x6b0] sm:$0xff]
  %v427 = vld [vmem:[%s0 + $0x6b8] sm:$0xff]
  %v428 = vld [vmem:[%s0 + $0x6c0] sm:$0xff]
  %v429 = vld [vmem:[%s0 + $0x6c8] sm:$0xff]
  %v430 = vld [vmem:[%s0 + $0x6d0] sm:$0xff]
  %v431 = vld [vmem:[%s0 + $0x6d8] sm:$0xff]
  %v432 = vld [vmem:[%s0 + $0x6e0] sm:$0xff]
  %v433 = vld [vmem:[%s0 + $0x6e8] sm:$0xff]
  %v434 = vld [vmem:[%s0 + $0x6f0] sm:$0xff]
  %v435 = vld [vmem:[%s0 + $0x6f8] sm:$0xff]
  %v436 = vld [vmem:[%s0 + $0x700] sm:$0xff]
  %v437 = vld [vmem:[%s0 + $0x708] sm:$0xff]
  %v438 = vld [vmem:[%s0 + $0x710] sm:$0xff]
  %v439 = vld [vmem:[%s0 + $0x718] sm:$0xff]
  %v440 = vld [vmem:[%s0 + $0x720] sm:$0xff]
  %v441 = vld [vmem:[%s0 + $0x728] sm:$0xff]
  %v442 = vld [vmem:[%s0 + $0x730] sm:$0xff]
  %v443 = vld [vmem:[%s0 + $0x738] sm:$0xff]
  %v444 = vld [vmem:[%s0 + $0x740] sm:$0xff]
  %v445 = vld [vmem:[%s0 + $0x748] sm:$0xff]
  %v446 = vld [vmem:[%s0 + $0x750] sm:$0xff]
  %v447 = vld [vmem:[%s0 + $0x758] sm:$0xff]
  %v448 = vld [vmem:[%s0 + $0x760] sm:$0xff]
  %v449 = vld [vmem:[%s0 + $0x768] sm:$0xff]
  %v450 = vld [vmem:[%s0 + $0x770] sm:$0xff]
  %v451 = vld [vmem:[%s0 + $0x778] sm:$0xff]
  %v452 = vld [vmem:[%s0 + $0x780] sm:$0xff]
  %v453 = vld [vmem:[%s0 + $0x788] sm:$0xff]
  %v454 = vld [vmem:[%s0 + $0x790] sm:$0xff]
  %v455 = vld [vmem:[%s0 + $0x798] sm:$0xff]
  %v456 = vld [vmem:[%s0 + $0x7a0] sm:$0xff]
  %v457 = vld [vmem:[%s0 + $0x7a8] sm:$0xff]
  %v458 = vld [vmem:[%s0 + $0x7b0] sm:$0xff]
  %v459 = vld [vmem:[%s0 + $0x7b8] sm:$0xff]
  %v460 = vld [vmem:[%s0 + $0x7c0] sm:$0xff]
  %v461 = vld [vmem:[%s0 + $0x7c8] sm:$0xff]
  %v462 = vld [vmem:[%s0 + $0x7d0] sm:$0xff]
  %v463 = vld [vmem:[%s0 + $0x7d8] sm:$0xff]
  %v464 = vld [vmem:[%s0 + $0x7e0] sm:$0xff]
  %v465 = vld [vmem:[%s0 + $0x7e8] sm:$0xff]
  %v466 = vld [vmem:[%s0 + $0x7f0] sm:$0xff]
  %v467 = vld [vmem:[%s0 + $0x7f8] sm:$0xff]
  %468 = vmatprep.subr.mxu0 0.0
  %469 = vmatpush1.msra.mxu0 %v84
  %470 = vmatprep.subr.mxu0 0.0
  %471 = vmatpush1.msra.mxu0 %v85
  %472 = vmatprep.subr.mxu0 0.0
  %473 = vmatpush1.msra.mxu0 %v86
  %474 = vmatprep.subr.mxu0 0.0
  %475 = vmatpush1.msra.mxu0 %v87
  %476 = vmatprep.subr.mxu0 0.0
  %477 = vmatpush1.msra.mxu0 %v88
  %478 = vmatprep.subr.mxu0 0.0
  %479 = vmatpush1.msra.mxu0 %v89
  %480 = vmatprep.subr.mxu0 0.0
  %481 = vmatpush1.msra.mxu0 %v90
  %482 = vmatprep.subr.mxu0 0.0
  %483 = vmatpush1.msra.mxu0 %v91
  %484 = vmatprep.subr.mxu0 0.0
  %485 = vmatpush1.msra.mxu0 %v92
  %486 = vmatprep.subr.mxu0 0.0
  %487 = vmatpush1.msra.mxu0 %v93
  %488 = vmatprep.subr.mxu0 0.0
  %489 = vmatpush1.msra.mxu0 %v94
  %490 = vmatprep.subr.mxu0 0.0
  %491 = vmatpush1.msra.mxu0 %v95
  %492 = vmatprep.subr.mxu0 0.0
  %493 = vmatpush1.msra.mxu0 %v96
  %494 = vmatprep.subr.mxu0 0.0
  %495 = vmatpush1.msra.mxu0 %v97
  %496 = vmatprep.subr.mxu0 0.0
  %497 = vmatpush1.msra.mxu0 %v98
  %498 = vmatprep.subr.mxu0 0.0
  %499 = vmatpush1.msra.mxu0 %v99
  %500 = vmatprep.subr.mxu0 0.0
  %501 = vmatpush1.msra.mxu0 %v100
  %502 = vmatprep.subr.mxu0 0.0
  %503 = vmatpush1.msra.mxu0 %v101
  %504 = vmatprep.subr.mxu0 0.0
  %505 = vmatpush1.msra.mxu0 %v102
  %506 = vmatprep.subr.mxu0 0.0
  %507 = vmatpush1.msra.mxu0 %v103
  %508 = vmatprep.subr.mxu0 0.0
  %509 = vmatpush1.msra.mxu0 %v104
  %510 = vmatprep.subr.mxu0 0.0
  %511 = vmatpush1.msra.mxu0 %v105
  %512 = vmatprep.subr.mxu0 0.0
  %513 = vmatpush1.msra.mxu0 %v106
  %514 = vmatprep.subr.mxu0 0.0
  %515 = vmatpush1.msra.mxu0 %v107
  %516 = vmatprep.subr.mxu0 0.0
  %517 = vmatpush1.msra.mxu0 %v108
  %518 = vmatprep.subr.mxu0 0.0
  %519 = vmatpush1.msra.mxu0 %v109
  %520 = vmatprep.subr.mxu0 0.0
  %521 = vmatpush1.msra.mxu0 %v110
  %522 = vmatprep.subr.mxu0 0.0
  %523 = vmatpush1.msra.mxu0 %v111
  %524 = vmatprep.subr.mxu0 0.0
  %525 = vmatpush1.msra.mxu0 %v112
  %526 = vmatprep.subr.mxu0 0.0
  %527 = vmatpush1.msra.mxu0 %v113
  %528 = vmatprep.subr.mxu0 0.0
  %529 = vmatpush1.msra.mxu0 %v114
  %530 = vmatprep.subr.mxu0 0.0
  %531 = vmatpush1.msra.mxu0 %v115
  %532 = vmatprep.mubr.f32.mxu0 %v213
  %533 = vmatmul.mubr.f32.gmra.mrb[0].mxu0 %v212
  %v534 = vpop.f32.mrb[0].mxu0
  %v535 = vadd.f32 0.0, %v534
  %v536 = vpop.f32.mrb[0].mxu0
  %537 = vmatprep.mubr.f32.mxu0 %v217
  %538 = vmatmul.mubr.f32.gmra.mrb[0].mxu0 %v216
  %v539 = vpop.f32.mrb[0].mxu0
  %v540 = vadd.f32 0.0, %v539
  %v541 = vpop.f32.mrb[0].mxu0
  %542 = vmatprep.mubr.f32.mxu0 %v221
  %543 = vmatmul.mubr.f32.gmra.mrb[0].mxu0 %v220
  %v544 = vpop.f32.mrb[0].mxu0
  %v545 = vadd.f32 0.0, %v544
  %v546 = vpop.f32.mrb[0].mxu0
  %547 = vmatprep.mubr.f32.mxu0 %v225
  %548 = vmatmul.mubr.f32.gmra.mrb[0].mxu0 %v224
  %v549 = vpop.f32.mrb[0].mxu0
  %v550 = vadd.f32 0.0, %v549
  %v551 = vpop.f32.mrb[0].mxu0
  %552 = vmatprep.mubr.f32.mxu0 %v229
  %553 = vmatmul.mubr.f32.gmra.mrb[0].mxu0 %v228
  %v554 = vpop.f32.mrb[0].mxu0
  %v555 = vadd.f32 0.0, %v554
  %v556 = vpop.f32.mrb[0].mxu0
  %557 = vmatprep.mubr.f32.mxu0 %v233
  %558 = vmatmul.mubr.f32.gmra.mrb[0].mxu0 %v232
  %v559 = vpop.f32.mrb[0].mxu0
  %v560 = vadd.f32 0.0, %v559
  %v561 = vpop.f32.mrb[0].mxu0
  %562 = vmatprep.mubr.f32.mxu0 %v237
  %563 = vmatmul.mubr.f32.gmra.mrb[0].mxu0 %v236
  %v564 = vpop.f32.mrb[0].mxu0
  %v565 = vadd.f32 0.0, %v564
  %v566 = vpop.f32.mrb[0].mxu0
  %567 = vmatprep.mubr.f32.mxu0 %v241
  %568 = vmatmul.mubr.f32.gmra.mrb[0].mxu0 %v240
  %v569 = vpop.f32.mrb[0].mxu0
  %v570 = vadd.f32 0.0, %v569
  %v571 = vpop.f32.mrb[0].mxu0
  %572 = vmatprep.mubr.f32.mxu0 %v245
  %573 = vmatmul.mubr.f32.gmra.mrb[0].mxu0 %v244
  %v574 = vpop.f32.mrb[0].mxu0
  %v575 = vadd.f32 0.0, %v574
  %v576 = vpop.f32.mrb[0].mxu0
  %577 = vmatprep.mubr.f32.mxu0 %v249
  %578 = vmatmul.mubr.f32.gmra.mrb[0].mxu0 %v248
  %v579 = vpop.f32.mrb[0].mxu0
  %v580 = vadd.f32 0.0, %v579
  %v581 = vpop.f32.mrb[0].mxu0
  %582 = vmatprep.mubr.f32.mxu0 %v253
  %583 = vmatmul.mubr.f32.gmra.mrb[0].mxu0 %v252
  %v584 = vpop.f32.mrb[0].mxu0
  %v585 = vadd.f32 0.0, %v584
  %v586 = vpop.f32.mrb[0].mxu0
  %587 = vmatprep.mubr.f32.mxu0 %v257
  %588 = vmatmul.mubr.f32.gmra.mrb[0].mxu0 %v256
  %v589 = vpop.f32.mrb[0].mxu0
  %v590 = vadd.f32 0.0, %v589
  %v591 = vpop.f32.mrb[0].mxu0
  %592 = vmatprep.mubr.f32.mxu0 %v261
  %593 = vmatmul.mubr.f32.gmra.mrb[0].mxu0 %v260
  %v594 = vpop.f32.mrb[0].mxu0
  %v595 = vadd.f32 0.0, %v594
  %v596 = vpop.f32.mrb[0].mxu0
  %597 = vmatprep.mubr.f32.mxu0 %v265
  %598 = vmatmul.mubr.f32.gmra.mrb[0].mxu0 %v264
  %v599 = vpop.f32.mrb[0].mxu0
  %v600 = vadd.f32 0.0, %v599
  %v601 = vpop.f32.mrb[0].mxu0
  %602 = vmatprep.mubr.f32.mxu0 %v269
  %603 = vmatmul.mubr.f32.gmra.mrb[0].mxu0 %v268
  %v604 = vpop.f32.mrb[0].mxu0
  %v605 = vadd.f32 0.0, %v604
  %v606 = vpop.f32.mrb[0].mxu0
  %607 = vmatprep.mubr.f32.mxu0 %v273
  %608 = vmatmul.mubr.f32.gmra.mrb[0].mxu0 %v272
  %v609 = vpop.f32.mrb[0].mxu0
  %v610 = vadd.f32 0.0, %v609
  %v611 = vpop.f32.mrb[0].mxu0
  %612 = vmatprep.mubr.f32.mxu0 %v277
  %613 = vmatmul.mubr.f32.gmra.mrb[0].mxu0 %v276
  %v614 = vpop.f32.mrb[0].mxu0
  %v615 = vadd.f32 0.0, %v614
  %v616 = vpop.f32.mrb[0].mxu0
  %617 = vmatprep.mubr.f32.mxu0 %v281
  %618 = vmatmul.mubr.f32.gmra.mrb[0].mxu0 %v280
  %v619 = vpop.f32.mrb[0].mxu0
  %v620 = vadd.f32 0.0, %v619
  %v621 = vpop.f32.mrb[0].mxu0
  %622 = vmatprep.mubr.f32.mxu0 %v285
  %623 = vmatmul.mubr.f32.gmra.mrb[0].mxu0 %v284
  %v624 = vpop.f32.mrb[0].mxu0
  %v625 = vadd.f32 0.0, %v624
  %v626 = vpop.f32.mrb[0].mxu0
  %627 = vmatprep.mubr.f32.mxu0 %v289
  %628 = vmatmul.mubr.f32.gmra.mrb[0].mxu0 %v288
  %v629 = vpop.f32.mrb[0].mxu0
  %v630 = vadd.f32 0.0, %v629
  %v631 = vpop.f32.mrb[0].mxu0
  %632 = vmatprep.mubr.f32.mxu0 %v293
  %633 = vmatmul.mubr.f32.gmra.mrb[0].mxu0 %v292
  %v634 = vpop.f32.mrb[0].mxu0
  %v635 = vadd.f32 0.0, %v634
  %v636 = vpop.f32.mrb[0].mxu0
  %637 = vmatprep.mubr.f32.mxu0 %v297
  %638 = vmatmul.mubr.f32.gmra.mrb[0].mxu0 %v296
  %v639 = vpop.f32.mrb[0].mxu0
  %v640 = vadd.f32 0.0, %v639
  %v641 = vpop.f32.mrb[0].mxu0
  %642 = vmatprep.mubr.f32.mxu0 %v301
  %643 = vmatmul.mubr.f32.gmra.mrb[0].mxu0 %v300
  %v644 = vpop.f32.mrb[0].mxu0
  %v645 = vadd.f32 0.0, %v644
  %v646 = vpop.f32.mrb[0].mxu0
  %647 = vmatprep.mubr.f32.mxu0 %v305
  %648 = vmatmul.mubr.f32.gmra.mrb[0].mxu0 %v304
  %v649 = vpop.f32.mrb[0].mxu0
  %v650 = vadd.f32 0.0, %v649
  %v651 = vpop.f32.mrb[0].mxu0
  %652 = vmatprep.mubr.f32.mxu0 %v309
  %653 = vmatmul.mubr.f32.gmra.mrb[0].mxu0 %v308
  %v654 = vpop.f32.mrb[0].mxu0
  %v655 = vadd.f32 0.0, %v654
  %v656 = vpop.f32.mrb[0].mxu0
  %657 = vmatprep.mubr.f32.mxu0 %v313
  %658 = vmatmul.mubr.f32.gmra.mrb[0].mxu0 %v312
  %v659 = vpop.f32.mrb[0].mxu0
  %v660 = vadd.f32 0.0, %v659
  %v661 = vpop.f32.mrb[0].mxu0
  %662 = vmatprep.mubr.f32.mxu0 %v317
  %663 = vmatmul.mubr.f32.gmra.mrb[0].mxu0 %v316
  %v664 = vpop.f32.mrb[0].mxu0
  %v665 = vadd.f32 0.0, %v664
  %v666 = vpop.f32.mrb[0].mxu0
  %667 = vmatprep.mubr.f32.mxu0 %v321
  %668 = vmatmul.mubr.f32.gmra.mrb[0].mxu0 %v320
  %v669 = vpop.f32.mrb[0].mxu0
  %v670 = vadd.f32 0.0, %v669
  %v671 = vpop.f32.mrb[0].mxu0
  %672 = vmatprep.mubr.f32.mxu0 %v325
  %673 = vmatmul.mubr.f32.gmra.mrb[0].mxu0 %v324
  %v674 = vpop.f32.mrb[0].mxu0
  %v675 = vadd.f32 0.0, %v674
  %v676 = vpop.f32.mrb[0].mxu0
  %677 = vmatprep.mubr.f32.mxu0 %v329
  %678 = vmatmul.mubr.f32.gmra.mrb[0].mxu0 %v328
  %v679 = vpop.f32.mrb[0].mxu0
  %v680 = vadd.f32 0.0, %v679
  %v681 = vpop.f32.mrb[0].mxu0
  %682 = vmatprep.mubr.f32.mxu0 %v333
  %683 = vmatmul.mubr.f32.gmra.mrb[0].mxu0 %v332
  %v684 = vpop.f32.mrb[0].mxu0
  %v685 = vadd.f32 0.0, %v684
  %v686 = vpop.f32.mrb[0].mxu0
  %687 = vmatprep.mubr.f32.mxu0 %v337
  %688 = vmatmul.mubr.f32.gmra.mrb[0].mxu0 %v336
  %v689 = vpop.f32.mrb[0].mxu0
  %v690 = vadd.f32 0.0, %v689
  %v691 = vpop.f32.mrb[0].mxu0
  %692 = vmatprep.mubr.f32.mxu0 %v341
  %693 = vmatmul.mubr.f32.gmra.mrb[0].mxu0 %v340
  %v694 = vpop.f32.mrb[0].mxu0
  %v695 = vadd.f32 0.0, %v694
  %v696 = vpop.f32.mrb[0].mxu0
  %697 = vmatprep.mubr.f32.mxu0 %v345
  %698 = vmatmul.mubr.f32.gmra.mrb[0].mxu0 %v344
  %v699 = vpop.f32.mrb[0].mxu0
  %v700 = vadd.f32 0.0, %v699
  %v701 = vpop.f32.mrb[0].mxu0
  %702 = vmatprep.mubr.f32.mxu0 %v349
  %703 = vmatmul.mubr.f32.gmra.mrb[0].mxu0 %v348
  %v704 = vpop.f32.mrb[0].mxu0
  %v705 = vadd.f32 0.0, %v704
  %v706 = vpop.f32.mrb[0].mxu0
  %707 = vmatprep.mubr.f32.mxu0 %v353
  %708 = vmatmul.mubr.f32.gmra.mrb[0].mxu0 %v352
  %v709 = vpop.f32.mrb[0].mxu0
  %v710 = vadd.f32 0.0, %v709
  %v711 = vpop.f32.mrb[0].mxu0
  %712 = vmatprep.mubr.f32.mxu0 %v357
  %713 = vmatmul.mubr.f32.gmra.mrb[0].mxu0 %v356
  %v714 = vpop.f32.mrb[0].mxu0
  %v715 = vadd.f32 0.0, %v714
  %v716 = vpop.f32.mrb[0].mxu0
  %717 = vmatprep.mubr.f32.mxu0 %v361
  %718 = vmatmul.mubr.f32.gmra.mrb[0].mxu0 %v360
  %v719 = vpop.f32.mrb[0].mxu0
  %v720 = vadd.f32 0.0, %v719
  %v721 = vpop.f32.mrb[0].mxu0
  %722 = vmatprep.mubr.f32.mxu0 %v365
  %723 = vmatmul.mubr.f32.gmra.mrb[0].mxu0 %v364
  %v724 = vpop.f32.mrb[0].mxu0
  %v725 = vadd.f32 0.0, %v724
  %v726 = vpop.f32.mrb[0].mxu0
  %727 = vmatprep.mubr.f32.mxu0 %v369
  %728 = vmatmul.mubr.f32.gmra.mrb[0].mxu0 %v368
  %v729 = vpop.f32.mrb[0].mxu0
  %v730 = vadd.f32 0.0, %v729
  %v731 = vpop.f32.mrb[0].mxu0
  %732 = vmatprep.mubr.f32.mxu0 %v373
  %733 = vmatmul.mubr.f32.gmra.mrb[0].mxu0 %v372
  %v734 = vpop.f32.mrb[0].mxu0
  %v735 = vadd.f32 0.0, %v734
  %v736 = vpop.f32.mrb[0].mxu0
  %737 = vmatprep.mubr.f32.mxu0 %v377
  %738 = vmatmul.mubr.f32.gmra.mrb[0].mxu0 %v376
  %v739 = vpop.f32.mrb[0].mxu0
  %v740 = vadd.f32 0.0, %v739
  %v741 = vpop.f32.mrb[0].mxu0
  %742 = vmatprep.mubr.f32.mxu0 %v381
  %743 = vmatmul.mubr.f32.gmra.mrb[0].mxu0 %v380
  %v744 = vpop.f32.mrb[0].mxu0
  %v745 = vadd.f32 0.0, %v744
  %v746 = vpop.f32.mrb[0].mxu0
  %747 = vmatprep.mubr.f32.mxu0 %v385
  %748 = vmatmul.mubr.f32.gmra.mrb[0].mxu0 %v384
  %v749 = vpop.f32.mrb[0].mxu0
  %v750 = vadd.f32 0.0, %v749
  %v751 = vpop.f32.mrb[0].mxu0
  %752 = vmatprep.mubr.f32.mxu0 %v389
  %753 = vmatmul.mubr.f32.gmra.mrb[0].mxu0 %v388
  %v754 = vpop.f32.mrb[0].mxu0
  %v755 = vadd.f32 0.0, %v754
  %v756 = vpop.f32.mrb[0].mxu0
  %757 = vmatprep.mubr.f32.mxu0 %v393
  %758 = vmatmul.mubr.f32.gmra.mrb[0].mxu0 %v392
  %v759 = vpop.f32.mrb[0].mxu0
  %v760 = vadd.f32 0.0, %v759
  %v761 = vpop.f32.mrb[0].mxu0
  %762 = vmatprep.mubr.f32.mxu0 %v397
  %763 = vmatmul.mubr.f32.gmra.mrb[0].mxu0 %v396
  %v764 = vpop.f32.mrb[0].mxu0
  %v765 = vadd.f32 0.0, %v764
  %v766 = vpop.f32.mrb[0].mxu0
  %767 = vmatprep.mubr.f32.mxu0 %v401
  %768 = vmatmul.mubr.f32.gmra.mrb[0].mxu0 %v400
  %v769 = vpop.f32.mrb[0].mxu0
  %v770 = vadd.f32 0.0, %v769
  %v771 = vpop.f32.mrb[0].mxu0
  %772 = vmatprep.mubr.f32.mxu0 %v405
  %773 = vmatmul.mubr.f32.gmra.mrb[0].mxu0 %v404
  %v774 = vpop.f32.mrb[0].mxu0
  %v775 = vadd.f32 0.0, %v774
  %v776 = vpop.f32.mrb[0].mxu0
  %777 = vmatprep.mubr.f32.mxu0 %v409
  %778 = vmatmul.mubr.f32.gmra.mrb[0].mxu0 %v408
  %v779 = vpop.f32.mrb[0].mxu0
  %v780 = vadd.f32 0.0, %v779
  %v781 = vpop.f32.mrb[0].mxu0
  %782 = vmatprep.mubr.f32.mxu0 %v413
  %783 = vmatmul.mubr.f32.gmra.mrb[0].mxu0 %v412
  %v784 = vpop.f32.mrb[0].mxu0
  %v785 = vadd.f32 0.0, %v784
  %v786 = vpop.f32.mrb[0].mxu0
  %787 = vmatprep.mubr.f32.mxu0 %v417
  %788 = vmatmul.mubr.f32.gmra.mrb[0].mxu0 %v416
  %v789 = vpop.f32.mrb[0].mxu0
  %v790 = vadd.f32 0.0, %v789
  %v791 = vpop.f32.mrb[0].mxu0
  %792 = vmatprep.mubr.f32.mxu0 %v421
  %793 = vmatmul.mubr.f32.gmra.mrb[0].mxu0 %v420
  %v794 = vpop.f32.mrb[0].mxu0
  %v795 = vadd.f32 0.0, %v794
  %v796 = vpop.f32.mrb[0].mxu0
  %797 = vmatprep.mubr.f32.mxu0 %v425
  %798 = vmatmul.mubr.f32.gmra.mrb[0].mxu0 %v424
  %v799 = vpop.f32.mrb[0].mxu0
  %v800 = vadd.f32 0.0, %v799
  %v801 = vpop.f32.mrb[0].mxu0
  %802 = vmatprep.mubr.f32.mxu0 %v429
  %803 = vmatmul.mubr.f32.gmra.mrb[0].mxu0 %v428
  %v804 = vpop.f32.mrb[0].mxu0
  %v805 = vadd.f32 0.0, %v804
  %v806 = vpop.f32.mrb[0].mxu0
  %807 = vmatprep.mubr.f32.mxu0 %v433
  %808 = vmatmul.mubr.f32.gmra.mrb[0].mxu0 %v432
  %v809 = vpop.f32.mrb[0].mxu0
  %v810 = vadd.f32 0.0, %v809
  %v811 = vpop.f32.mrb[0].mxu0
  %812 = vmatprep.mubr.f32.mxu0 %v437
  %813 = vmatmul.mubr.f32.gmra.mrb[0].mxu0 %v436
  %v814 = vpop.f32.mrb[0].mxu0
  %v815 = vadd.f32 0.0, %v814
  %v816 = vpop.f32.mrb[0].mxu0
  %817 = vmatprep.mubr.f32.mxu0 %v441
  %818 = vmatmul.mubr.f32.gmra.mrb[0].mxu0 %v440
  %v819 = vpop.f32.mrb[0].mxu0
  %v820 = vadd.f32 0.0, %v819
  %v821 = vpop.f32.mrb[0].mxu0
  %822 = vmatprep.mubr.f32.mxu0 %v445
  %823 = vmatmul.mubr.f32.gmra.mrb[0].mxu0 %v444
  %v824 = vpop.f32.mrb[0].mxu0
  %v825 = vadd.f32 0.0, %v824
  %v826 = vpop.f32.mrb[0].mxu0
  %827 = vmatprep.mubr.f32.mxu0 %v449
  %828 = vmatmul.mubr.f32.gmra.mrb[0].mxu0 %v448
  %v829 = vpop.f32.mrb[0].mxu0
  %v830 = vadd.f32 0.0, %v829
  %v831 = vpop.f32.mrb[0].mxu0
  %832 = vmatprep.mubr.f32.mxu0 %v453
  %833 = vmatmul.mubr.f32.gmra.mrb[0].mxu0 %v452
  %v834 = vpop.f32.mrb[0].mxu0
  %v835 = vadd.f32 0.0, %v834
  %v836 = vpop.f32.mrb[0].mxu0
  %837 = vmatprep.mubr.f32.mxu0 %v457
  %838 = vmatmul.mubr.f32.gmra.mrb[0].mxu0 %v456
  %v839 = vpop.f32.mrb[0].mxu0
  %v840 = vadd.f32 0.0, %v839
  %v841 = vpop.f32.mrb[0].mxu0
  %842 = vmatprep.mubr.f32.mxu0 %v461
  %843 = vmatmul.mubr.f32.gmra.mrb[0].mxu0 %v460
  %v844 = vpop.f32.mrb[0].mxu0
  %v845 = vadd.f32 0.0, %v844
  %v846 = vpop.f32.mrb[0].mxu0
  %847 = vmatprep.mubr.f32.mxu0 %v465
  %848 = vmatmul.mubr.f32.gmra.mrb[0].mxu0 %v464
  %v849 = vpop.f32.mrb[0].mxu0
  %v850 = vadd.f32 0.0, %v849
  %v851 = vpop.f32.mrb[0].mxu0
  %852 = vdwg.mxu0
  %853 = vmatprep.subr.mxu0 0.0
  %854 = vmatpush1.msra.mxu0 %v116
  %855 = vmatprep.subr.mxu0 0.0
  %856 = vmatpush1.msra.mxu0 %v117
  %857 = vmatprep.subr.mxu0 0.0
  %858 = vmatpush1.msra.mxu0 %v118
  %859 = vmatprep.subr.mxu0 0.0
  %860 = vmatpush1.msra.mxu0 %v119
  %861 = vmatprep.subr.mxu0 0.0
  %862 = vmatpush1.msra.mxu0 %v120
  %863 = vmatprep.subr.mxu0 0.0
  %864 = vmatpush1.msra.mxu0 %v121
  %865 = vmatprep.subr.mxu0 0.0
  %866 = vmatpush1.msra.mxu0 %v122
  %867 = vmatprep.subr.mxu0 0.0
  %868 = vmatpush1.msra.mxu0 %v123
  %869 = vmatprep.subr.mxu0 0.0
  %870 = vmatpush1.msra.mxu0 %v124
  %871 = vmatprep.subr.mxu0 0.0
  %872 = vmatpush1.msra.mxu0 %v125
  %873 = vmatprep.subr.mxu0 0.0
  %874 = vmatpush1.msra.mxu0 %v126
  %875 = vmatprep.subr.mxu0 0.0
  %876 = vmatpush1.msra.mxu0 %v127
  %877 = vmatprep.subr.mxu0 0.0
  %878 = vmatpush1.msra.mxu0 %v128
  %879 = vmatprep.subr.mxu0 0.0
  %880 = vmatpush1.msra.mxu0 %v129
  %881 = vmatprep.subr.mxu0 0.0
  %882 = vmatpush1.msra.mxu0 %v130
  %883 = vmatprep.subr.mxu0 0.0
  %884 = vmatpush1.msra.mxu0 %v131
  %885 = vmatprep.subr.mxu0 0.0
  %886 = vmatpush1.msra.mxu0 %v132
  %887 = vmatprep.subr.mxu0 0.0
  %888 = vmatpush1.msra.mxu0 %v133
  %889 = vmatprep.subr.mxu0 0.0
  %890 = vmatpush1.msra.mxu0 %v134
  %891 = vmatprep.subr.mxu0 0.0
  %892 = vmatpush1.msra.mxu0 %v135
  %893 = vmatprep.subr.mxu0 0.0
  %894 = vmatpush1.msra.mxu0 %v136
  %895 = vmatprep.subr.mxu0 0.0
  %896 = vmatpush1.msra.mxu0 %v137
  %897 = vmatprep.subr.mxu0 0.0
  %898 = vmatpush1.msra.mxu0 %v138
  %899 = vmatprep.subr.mxu0 0.0
  %900 = vmatpush1.msra.mxu0 %v139
  %901 = vmatprep.subr.mxu0 0.0
  %902 = vmatpush1.msra.mxu0 %v140
  %903 = vmatprep.subr.mxu0 0.0
  %904 = vmatpush1.msra.mxu0 %v141
  %905 = vmatprep.subr.mxu0 0.0
  %906 = vmatpush1.msra.mxu0 %v142
  %907 = vmatprep.subr.mxu0 0.0
  %908 = vmatpush1.msra.mxu0 %v143
  %909 = vmatprep.subr.mxu0 0.0
  %910 = vmatpush1.msra.mxu0 %v144
  %911 = vmatprep.subr.mxu0 0.0
  %912 = vmatpush1.msra.mxu0 %v145
  %913 = vmatprep.subr.mxu0 0.0
  %914 = vmatpush1.msra.mxu0 %v146
  %915 = vmatprep.subr.mxu0 0.0
  %916 = vmatpush1.msra.mxu0 %v147
  %917 = vmatprep.mubr.f32.mxu0 %v215
  %918 = vmatmul.mubr.f32.gmra.mrb[0].mxu0 %v214
  %v919 = vpop.f32.mrb[0].mxu0
  %v920 = vadd.f32 %v535, %v919
  %v921 = vpop.f32.mrb[0].mxu0
  %922 = vmatprep.mubr.f32.mxu0 %v219
  %923 = vmatmul.mubr.f32.gmra.mrb[0].mxu0 %v218
  %v924 = vpop.f32.mrb[0].mxu0
  %v925 = vadd.f32 %v540, %v924
  %v926 = vpop.f32.mrb[0].mxu0
  %927 = vmatprep.mubr.f32.mxu0 %v223
  %928 = vmatmul.mubr.f32.gmra.mrb[0].mxu0 %v222
  %v929 = vpop.f32.mrb[0].mxu0
  %v930 = vadd.f32 %v545, %v929
  %v931 = vpop.f32.mrb[0].mxu0
  %932 = vmatprep.mubr.f32.mxu0 %v227
  %933 = vmatmul.mubr.f32.gmra.mrb[0].mxu0 %v226
  %v934 = vpop.f32.mrb[0].mxu0
  %v935 = vadd.f32 %v550, %v934
  %v936 = vpop.f32.mrb[0].mxu0
  %937 = vmatprep.mubr.f32.mxu0 %v231
  %938 = vmatmul.mubr.f32.gmra.mrb[0].mxu0 %v230
  %v939 = vpop.f32.mrb[0].mxu0
  %v940 = vadd.f32 %v555, %v939
  %v941 = vpop.f32.mrb[0].mxu0
  %942 = vmatprep.mubr.f32.mxu0 %v235
  %943 = vmatmul.mubr.f32.gmra.mrb[0].mxu0 %v234
  %v944 = vpop.f32.mrb[0].mxu0
  %v945 = vadd.f32 %v560, %v944
  %v946 = vpop.f32.mrb[0].mxu0
  %947 = vmatprep.mubr.f32.mxu0 %v239
  %948 = vmatmul.mubr.f32.gmra.mrb[0].mxu0 %v238
  %v949 = vpop.f32.mrb[0].mxu0
  %v950 = vadd.f32 %v565, %v949
  %v951 = vpop.f32.mrb[0].mxu0
  %952 = vmatprep.mubr.f32.mxu0 %v243
  %953 = vmatmul.mubr.f32.gmra.mrb[0].mxu0 %v242
  %v954 = vpop.f32.mrb[0].mxu0
  %v955 = vadd.f32 %v570, %v954
  %v956 = vpop.f32.mrb[0].mxu0
  %957 = vmatprep.mubr.f32.mxu0 %v247
  %958 = vmatmul.mubr.f32.gmra.mrb[0].mxu0 %v246
  %v959 = vpop.f32.mrb[0].mxu0
  %v960 = vadd.f32 %v575, %v959
  %v961 = vpop.f32.mrb[0].mxu0
  %962 = vmatprep.mubr.f32.mxu0 %v251
  %963 = vmatmul.mubr.f32.gmra.mrb[0].mxu0 %v250
  %v964 = vpop.f32.mrb[0].mxu0
  %v965 = vadd.f32 %v580, %v964
  %v966 = vpop.f32.mrb[0].mxu0
  %967 = vmatprep.mubr.f32.mxu0 %v255
  %968 = vmatmul.mubr.f32.gmra.mrb[0].mxu0 %v254
  %v969 = vpop.f32.mrb[0].mxu0
  %v970 = vadd.f32 %v585, %v969
  %v971 = vpop.f32.mrb[0].mxu0
  %972 = vmatprep.mubr.f32.mxu0 %v259
  %973 = vmatmul.mubr.f32.gmra.mrb[0].mxu0 %v258
  %v974 = vpop.f32.mrb[0].mxu0
  %v975 = vadd.f32 %v590, %v974
  %v976 = vpop.f32.mrb[0].mxu0
  %977 = vmatprep.mubr.f32.mxu0 %v263
  %978 = vmatmul.mubr.f32.gmra.mrb[0].mxu0 %v262
  %v979 = vpop.f32.mrb[0].mxu0
  %v980 = vadd.f32 %v595, %v979
  %v981 = vpop.f32.mrb[0].mxu0
  %982 = vmatprep.mubr.f32.mxu0 %v267
  %983 = vmatmul.mubr.f32.gmra.mrb[0].mxu0 %v266
  %v984 = vpop.f32.mrb[0].mxu0
  %v985 = vadd.f32 %v600, %v984
  %v986 = vpop.f32.mrb[0].mxu0
  %987 = vmatprep.mubr.f32.mxu0 %v271
  %988 = vmatmul.mubr.f32.gmra.mrb[0].mxu0 %v270
  %v989 = vpop.f32.mrb[0].mxu0
  %v990 = vadd.f32 %v605, %v989
  %v991 = vpop.f32.mrb[0].mxu0
  %992 = vmatprep.mubr.f32.mxu0 %v275
  %993 = vmatmul.mubr.f32.gmra.mrb[0].mxu0 %v274
  %v994 = vpop.f32.mrb[0].mxu0
  %v995 = vadd.f32 %v610, %v994
  %v996 = vpop.f32.mrb[0].mxu0
  %997 = vmatprep.mubr.f32.mxu0 %v279
  %998 = vmatmul.mubr.f32.gmra.mrb[0].mxu0 %v278
  %v999 = vpop.f32.mrb[0].mxu0
  %v1000 = vadd.f32 %v615, %v999
  %v1001 = vpop.f32.mrb[0].mxu0
  %1002 = vmatprep.mubr.f32.mxu0 %v283
  %1003 = vmatmul.mubr.f32.gmra.mrb[0].mxu0 %v282
  %v1004 = vpop.f32.mrb[0].mxu0
  %v1005 = vadd.f32 %v620, %v1004
  %v1006 = vpop.f32.mrb[0].mxu0
  %1007 = vmatprep.mubr.f32.mxu0 %v287
  %1008 = vmatmul.mubr.f32.gmra.mrb[0].mxu0 %v286
  %v1009 = vpop.f32.mrb[0].mxu0
  %v1010 = vadd.f32 %v625, %v1009
  %v1011 = vpop.f32.mrb[0].mxu0
  %1012 = vmatprep.mubr.f32.mxu0 %v291
  %1013 = vmatmul.mubr.f32.gmra.mrb[0].mxu0 %v290
  %v1014 = vpop.f32.mrb[0].mxu0
  %v1015 = vadd.f32 %v630, %v1014
  %v1016 = vpop.f32.mrb[0].mxu0
  %1017 = vmatprep.mubr.f32.mxu0 %v295
  %1018 = vmatmul.mubr.f32.gmra.mrb[0].mxu0 %v294
  %v1019 = vpop.f32.mrb[0].mxu0
  %v1020 = vadd.f32 %v635, %v1019
  %v1021 = vpop.f32.mrb[0].mxu0
  %1022 = vmatprep.mubr.f32.mxu0 %v299
  %1023 = vmatmul.mubr.f32.gmra.mrb[0].mxu0 %v298
  %v1024 = vpop.f32.mrb[0].mxu0
  %v1025 = vadd.f32 %v640, %v1024
  %v1026 = vpop.f32.mrb[0].mxu0
  %1027 = vmatprep.mubr.f32.mxu0 %v303
  %1028 = vmatmul.mubr.f32.gmra.mrb[0].mxu0 %v302
  %v1029 = vpop.f32.mrb[0].mxu0
  %v1030 = vadd.f32 %v645, %v1029
  %v1031 = vpop.f32.mrb[0].mxu0
  %1032 = vmatprep.mubr.f32.mxu0 %v307
  %1033 = vmatmul.mubr.f32.gmra.mrb[0].mxu0 %v306
  %v1034 = vpop.f32.mrb[0].mxu0
  %v1035 = vadd.f32 %v650, %v1034
  %v1036 = vpop.f32.mrb[0].mxu0
  %1037 = vmatprep.mubr.f32.mxu0 %v311
  %1038 = vmatmul.mubr.f32.gmra.mrb[0].mxu0 %v310
  %v1039 = vpop.f32.mrb[0].mxu0
  %v1040 = vadd.f32 %v655, %v1039
  %v1041 = vpop.f32.mrb[0].mxu0
  %1042 = vmatprep.mubr.f32.mxu0 %v315
  %1043 = vmatmul.mubr.f32.gmra.mrb[0].mxu0 %v314
  %v1044 = vpop.f32.mrb[0].mxu0
  %v1045 = vadd.f32 %v660, %v1044
  %v1046 = vpop.f32.mrb[0].mxu0
  %1047 = vmatprep.mubr.f32.mxu0 %v319
  %1048 = vmatmul.mubr.f32.gmra.mrb[0].mxu0 %v318
  %v1049 = vpop.f32.mrb[0].mxu0
  %v1050 = vadd.f32 %v665, %v1049
  %v1051 = vpop.f32.mrb[0].mxu0
  %1052 = vmatprep.mubr.f32.mxu0 %v323
  %1053 = vmatmul.mubr.f32.gmra.mrb[0].mxu0 %v322
  %v1054 = vpop.f32.mrb[0].mxu0
  %v1055 = vadd.f32 %v670, %v1054
  %v1056 = vpop.f32.mrb[0].mxu0
  %1057 = vmatprep.mubr.f32.mxu0 %v327
  %1058 = vmatmul.mubr.f32.gmra.mrb[0].mxu0 %v326
  %v1059 = vpop.f32.mrb[0].mxu0
  %v1060 = vadd.f32 %v675, %v1059
  %v1061 = vpop.f32.mrb[0].mxu0
  %1062 = vmatprep.mubr.f32.mxu0 %v331
  %1063 = vmatmul.mubr.f32.gmra.mrb[0].mxu0 %v330
  %v1064 = vpop.f32.mrb[0].mxu0
  %v1065 = vadd.f32 %v680, %v1064
  %v1066 = vpop.f32.mrb[0].mxu0
  %1067 = vmatprep.mubr.f32.mxu0 %v335
  %1068 = vmatmul.mubr.f32.gmra.mrb[0].mxu0 %v334
  %v1069 = vpop.f32.mrb[0].mxu0
  %v1070 = vadd.f32 %v685, %v1069
  %v1071 = vpop.f32.mrb[0].mxu0
  %1072 = vmatprep.mubr.f32.mxu0 %v339
  %1073 = vmatmul.mubr.f32.gmra.mrb[0].mxu0 %v338
  %v1074 = vpop.f32.mrb[0].mxu0
  %v1075 = vadd.f32 %v690, %v1074
  %v1076 = vpop.f32.mrb[0].mxu0
  %1077 = vmatprep.mubr.f32.mxu0 %v343
  %1078 = vmatmul.mubr.f32.gmra.mrb[0].mxu0 %v342
  %v1079 = vpop.f32.mrb[0].mxu0
  %v1080 = vadd.f32 %v695, %v1079
  %v1081 = vpop.f32.mrb[0].mxu0
  %1082 = vmatprep.mubr.f32.mxu0 %v347
  %1083 = vmatmul.mubr.f32.gmra.mrb[0].mxu0 %v346
  %v1084 = vpop.f32.mrb[0].mxu0
  %v1085 = vadd.f32 %v700, %v1084
  %v1086 = vpop.f32.mrb[0].mxu0
  %1087 = vmatprep.mubr.f32.mxu0 %v351
  %1088 = vmatmul.mubr.f32.gmra.mrb[0].mxu0 %v350
  %v1089 = vpop.f32.mrb[0].mxu0
  %v1090 = vadd.f32 %v705, %v1089
  %v1091 = vpop.f32.mrb[0].mxu0
  %1092 = vmatprep.mubr.f32.mxu0 %v355
  %1093 = vmatmul.mubr.f32.gmra.mrb[0].mxu0 %v354
  %v1094 = vpop.f32.mrb[0].mxu0
  %v1095 = vadd.f32 %v710, %v1094
  %v1096 = vpop.f32.mrb[0].mxu0
  %1097 = vmatprep.mubr.f32.mxu0 %v359
  %1098 = vmatmul.mubr.f32.gmra.mrb[0].mxu0 %v358
  %v1099 = vpop.f32.mrb[0].mxu0
  %v1100 = vadd.f32 %v715, %v1099
  %v1101 = vpop.f32.mrb[0].mxu0
  %1102 = vmatprep.mubr.f32.mxu0 %v363
  %1103 = vmatmul.mubr.f32.gmra.mrb[0].mxu0 %v362
  %v1104 = vpop.f32.mrb[0].mxu0
  %v1105 = vadd.f32 %v720, %v1104
  %v1106 = vpop.f32.mrb[0].mxu0
  %1107 = vmatprep.mubr.f32.mxu0 %v367
  %1108 = vmatmul.mubr.f32.gmra.mrb[0].mxu0 %v366
  %v1109 = vpop.f32.mrb[0].mxu0
  %v1110 = vadd.f32 %v725, %v1109
  %v1111 = vpop.f32.mrb[0].mxu0
  %1112 = vmatprep.mubr.f32.mxu0 %v371
  %1113 = vmatmul.mubr.f32.gmra.mrb[0].mxu0 %v370
  %v1114 = vpop.f32.mrb[0].mxu0
  %v1115 = vadd.f32 %v730, %v1114
  %v1116 = vpop.f32.mrb[0].mxu0
  %1117 = vmatprep.mubr.f32.mxu0 %v375
  %1118 = vmatmul.mubr.f32.gmra.mrb[0].mxu0 %v374
  %v1119 = vpop.f32.mrb[0].mxu0
  %v1120 = vadd.f32 %v735, %v1119
  %v1121 = vpop.f32.mrb[0].mxu0
  %1122 = vmatprep.mubr.f32.mxu0 %v379
  %1123 = vmatmul.mubr.f32.gmra.mrb[0].mxu0 %v378
  %v1124 = vpop.f32.mrb[0].mxu0
  %v1125 = vadd.f32 %v740, %v1124
  %v1126 = vpop.f32.mrb[0].mxu0
  %1127 = vmatprep.mubr.f32.mxu0 %v383
  %1128 = vmatmul.mubr.f32.gmra.mrb[0].mxu0 %v382
  %v1129 = vpop.f32.mrb[0].mxu0
  %v1130 = vadd.f32 %v745, %v1129
  %v1131 = vpop.f32.mrb[0].mxu0
  %1132 = vmatprep.mubr.f32.mxu0 %v387
  %1133 = vmatmul.mubr.f32.gmra.mrb[0].mxu0 %v386
  %v1134 = vpop.f32.mrb[0].mxu0
  %v1135 = vadd.f32 %v750, %v1134
  %v1136 = vpop.f32.mrb[0].mxu0
  %1137 = vmatprep.mubr.f32.mxu0 %v391
  %1138 = vmatmul.mubr.f32.gmra.mrb[0].mxu0 %v390
  %v1139 = vpop.f32.mrb[0].mxu0
  %v1140 = vadd.f32 %v755, %v1139
  %v1141 = vpop.f32.mrb[0].mxu0
  %1142 = vmatprep.mubr.f32.mxu0 %v395
  %1143 = vmatmul.mubr.f32.gmra.mrb[0].mxu0 %v394
  %v1144 = vpop.f32.mrb[0].mxu0
  %v1145 = vadd.f32 %v760, %v1144
  %v1146 = vpop.f32.mrb[0].mxu0
  %1147 = vmatprep.mubr.f32.mxu0 %v399
  %1148 = vmatmul.mubr.f32.gmra.mrb[0].mxu0 %v398
  %v1149 = vpop.f32.mrb[0].mxu0
  %v1150 = vadd.f32 %v765, %v1149
  %v1151 = vpop.f32.mrb[0].mxu0
  %1152 = vmatprep.mubr.f32.mxu0 %v403
  %1153 = vmatmul.mubr.f32.gmra.mrb[0].mxu0 %v402
  %v1154 = vpop.f32.mrb[0].mxu0
  %v1155 = vadd.f32 %v770, %v1154
  %v1156 = vpop.f32.mrb[0].mxu0
  %1157 = vmatprep.mubr.f32.mxu0 %v407
  %1158 = vmatmul.mubr.f32.gmra.mrb[0].mxu0 %v406
  %v1159 = vpop.f32.mrb[0].mxu0
  %v1160 = vadd.f32 %v775, %v1159
  %v1161 = vpop.f32.mrb[0].mxu0
  %1162 = vmatprep.mubr.f32.mxu0 %v411
  %1163 = vmatmul.mubr.f32.gmra.mrb[0].mxu0 %v410
  %v1164 = vpop.f32.mrb[0].mxu0
  %v1165 = vadd.f32 %v780, %v1164
  %v1166 = vpop.f32.mrb[0].mxu0
  %1167 = vmatprep.mubr.f32.mxu0 %v415
  %1168 = vmatmul.mubr.f32.gmra.mrb[0].mxu0 %v414
  %v1169 = vpop.f32.mrb[0].mxu0
  %v1170 = vadd.f32 %v785, %v1169
  %v1171 = vpop.f32.mrb[0].mxu0
  %1172 = vmatprep.mubr.f32.mxu0 %v419
  %1173 = vmatmul.mubr.f32.gmra.mrb[0].mxu0 %v418
  %v1174 = vpop.f32.mrb[0].mxu0
  %v1175 = vadd.f32 %v790, %v1174
  %v1176 = vpop.f32.mrb[0].mxu0
  %1177 = vmatprep.mubr.f32.mxu0 %v423
  %1178 = vmatmul.mubr.f32.gmra.mrb[0].mxu0 %v422
  %v1179 = vpop.f32.mrb[0].mxu0
  %v1180 = vadd.f32 %v795, %v1179
  %v1181 = vpop.f32.mrb[0].mxu0
  %1182 = vmatprep.mubr.f32.mxu0 %v427
  %1183 = vmatmul.mubr.f32.gmra.mrb[0].mxu0 %v426
  %v1184 = vpop.f32.mrb[0].mxu0
  %v1185 = vadd.f32 %v800, %v1184
  %v1186 = vpop.f32.mrb[0].mxu0
  %1187 = vmatprep.mubr.f32.mxu0 %v431
  %1188 = vmatmul.mubr.f32.gmra.mrb[0].mxu0 %v430
  %v1189 = vpop.f32.mrb[0].mxu0
  %v1190 = vadd.f32 %v805, %v1189
  %v1191 = vpop.f32.mrb[0].mxu0
  %1192 = vmatprep.mubr.f32.mxu0 %v435
  %1193 = vmatmul.mubr.f32.gmra.mrb[0].mxu0 %v434
  %v1194 = vpop.f32.mrb[0].mxu0
  %v1195 = vadd.f32 %v810, %v1194
  %v1196 = vpop.f32.mrb[0].mxu0
  %1197 = vmatprep.mubr.f32.mxu0 %v439
  %1198 = vmatmul.mubr.f32.gmra.mrb[0].mxu0 %v438
  %v1199 = vpop.f32.mrb[0].mxu0
  %v1200 = vadd.f32 %v815, %v1199
  %v1201 = vpop.f32.mrb[0].mxu0
  %1202 = vmatprep.mubr.f32.mxu0 %v443
  %1203 = vmatmul.mubr.f32.gmra.mrb[0].mxu0 %v442
  %v1204 = vpop.f32.mrb[0].mxu0
  %v1205 = vadd.f32 %v820, %v1204
  %v1206 = vpop.f32.mrb[0].mxu0
  %1207 = vmatprep.mubr.f32.mxu0 %v447
  %1208 = vmatmul.mubr.f32.gmra.mrb[0].mxu0 %v446
  %v1209 = vpop.f32.mrb[0].mxu0
  %v1210 = vadd.f32 %v825, %v1209
  %v1211 = vpop.f32.mrb[0].mxu0
  %1212 = vmatprep.mubr.f32.mxu0 %v451
  %1213 = vmatmul.mubr.f32.gmra.mrb[0].mxu0 %v450
  %v1214 = vpop.f32.mrb[0].mxu0
  %v1215 = vadd.f32 %v830, %v1214
  %v1216 = vpop.f32.mrb[0].mxu0
  %1217 = vmatprep.mubr.f32.mxu0 %v455
  %1218 = vmatmul.mubr.f32.gmra.mrb[0].mxu0 %v454
  %v1219 = vpop.f32.mrb[0].mxu0
  %v1220 = vadd.f32 %v835, %v1219
  %v1221 = vpop.f32.mrb[0].mxu0
  %1222 = vmatprep.mubr.f32.mxu0 %v459
  %1223 = vmatmul.mubr.f32.gmra.mrb[0].mxu0 %v458
  %v1224 = vpop.f32.mrb[0].mxu0
  %v1225 = vadd.f32 %v840, %v1224
  %v1226 = vpop.f32.mrb[0].mxu0
  %1227 = vmatprep.mubr.f32.mxu0 %v463
  %1228 = vmatmul.mubr.f32.gmra.mrb[0].mxu0 %v462
  %v1229 = vpop.f32.mrb[0].mxu0
  %v1230 = vadd.f32 %v845, %v1229
  %v1231 = vpop.f32.mrb[0].mxu0
  %1232 = vmatprep.mubr.f32.mxu0 %v467
  %1233 = vmatmul.mubr.f32.gmra.mrb[0].mxu0 %v466
  %v1234 = vpop.f32.mrb[0].mxu0
  %v1235 = vadd.f32 %v850, %v1234
  %v1236 = vpop.f32.mrb[0].mxu0
  %1237 = vdwg.mxu0
  %v1238 = vadd.f32 %v148, %v920
  %v1239 = vadd.f32 %v149, %v925
  %v1240 = vadd.f32 %v150, %v930
  %v1241 = vadd.f32 %v151, %v935
  %v1242 = vadd.f32 %v152, %v940
  %v1243 = vadd.f32 %v153, %v945
  %v1244 = vadd.f32 %v154, %v950
  %v1245 = vadd.f32 %v155, %v955
  %v1246 = vadd.f32 %v156, %v960
  %v1247 = vadd.f32 %v157, %v965
  %v1248 = vadd.f32 %v158, %v970
  %v1249 = vadd.f32 %v159, %v975
  %v1250 = vadd.f32 %v160, %v980
  %v1251 = vadd.f32 %v161, %v985
  %v1252 = vadd.f32 %v162, %v990
  %v1253 = vadd.f32 %v163, %v995
  %v1254 = vadd.f32 %v164, %v1000
  %v1255 = vadd.f32 %v165, %v1005
  %v1256 = vadd.f32 %v166, %v1010
  %v1257 = vadd.f32 %v167, %v1015
  %v1258 = vadd.f32 %v168, %v1020
  %v1259 = vadd.f32 %v169, %v1025
  %v1260 = vadd.f32 %v170, %v1030
  %v1261 = vadd.f32 %v171, %v1035
  %v1262 = vadd.f32 %v172, %v1040
  %v1263 = vadd.f32 %v173, %v1045
  %v1264 = vadd.f32 %v174, %v1050
  %v1265 = vadd.f32 %v175, %v1055
  %v1266 = vadd.f32 %v176, %v1060
  %v1267 = vadd.f32 %v177, %v1065
  %v1268 = vadd.f32 %v178, %v1070
  %v1269 = vadd.f32 %v179, %v1075
  %v1270 = vadd.f32 %v180, %v1080
  %v1271 = vadd.f32 %v181, %v1085
  %v1272 = vadd.f32 %v182, %v1090
  %v1273 = vadd.f32 %v183, %v1095
  %v1274 = vadd.f32 %v184, %v1100
  %v1275 = vadd.f32 %v185, %v1105
  %v1276 = vadd.f32 %v186, %v1110
  %v1277 = vadd.f32 %v187, %v1115
  %v1278 = vadd.f32 %v188, %v1120
  %v1279 = vadd.f32 %v189, %v1125
  %v1280 = vadd.f32 %v190, %v1130
  %v1281 = vadd.f32 %v191, %v1135
  %v1282 = vadd.f32 %v192, %v1140
  %v1283 = vadd.f32 %v193, %v1145
  %v1284 = vadd.f32 %v194, %v1150
  %v1285 = vadd.f32 %v195, %v1155
  %v1286 = vadd.f32 %v196, %v1160
  %v1287 = vadd.f32 %v197, %v1165
  %v1288 = vadd.f32 %v198, %v1170
  %v1289 = vadd.f32 %v199, %v1175
  %v1290 = vadd.f32 %v200, %v1180
  %v1291 = vadd.f32 %v201, %v1185
  %v1292 = vadd.f32 %v202, %v1190
  %v1293 = vadd.f32 %v203, %v1195
  %v1294 = vadd.f32 %v204, %v1200
  %v1295 = vadd.f32 %v205, %v1205
  %v1296 = vadd.f32 %v206, %v1210
  %v1297 = vadd.f32 %v207, %v1215
  %v1298 = vadd.f32 %v208, %v1220
  %v1299 = vadd.f32 %v209, %v1225
  %v1300 = vadd.f32 %v210, %v1230
  %v1301 = vadd.f32 %v211, %v1235
  %1302 = vst [vmem:[#allocation2] sm:$0xff] %v1238
  %1303 = vst [vmem:[#allocation2 + $0x8] sm:$0xff] %v1239
  %1304 = vst [vmem:[#allocation2 + $0x10] sm:$0xff] %v1240
  %1305 = vst [vmem:[#allocation2 + $0x18] sm:$0xff] %v1241
  %1306 = vst [vmem:[#allocation2 + $0x20] sm:$0xff] %v1242
  %1307 = vst [vmem:[#allocation2 + $0x28] sm:$0xff] %v1243
  %1308 = vst [vmem:[#allocation2 + $0x30] sm:$0xff] %v1244
  %1309 = vst [vmem:[#allocation2 + $0x38] sm:$0xff] %v1245
  %1310 = vst [vmem:[#allocation2 + $0x40] sm:$0xff] %v1246
  %1311 = vst [vmem:[#allocation2 + $0x48] sm:$0xff] %v1247
  %1312 = vst [vmem:[#allocation2 + $0x50] sm:$0xff] %v1248
  %1313 = vst [vmem:[#allocation2 + $0x58] sm:$0xff] %v1249
  %1314 = vst [vmem:[#allocation2 + $0x60] sm:$0xff] %v1250
  %1315 = vst [vmem:[#allocation2 + $0x68] sm:$0xff] %v1251
  %1316 = vst [vmem:[#allocation2 + $0x70] sm:$0xff] %v1252
  %1317 = vst [vmem:[#allocation2 + $0x78] sm:$0xff] %v1253
  %1318 = vst [vmem:[#allocation2 + $0x80] sm:$0xff] %v1254
  %1319 = vst [vmem:[#allocation2 + $0x88] sm:$0xff] %v1255
  %1320 = vst [vmem:[#allocation2 + $0x90] sm:$0xff] %v1256
  %1321 = vst [vmem:[#allocation2 + $0x98] sm:$0xff] %v1257
  %1322 = vst [vmem:[#allocation2 + $0xa0] sm:$0xff] %v1258
  %1323 = vst [vmem:[#allocation2 + $0xa8] sm:$0xff] %v1259
  %1324 = vst [vmem:[#allocation2 + $0xb0] sm:$0xff] %v1260
  %1325 = vst [vmem:[#allocation2 + $0xb8] sm:$0xff] %v1261
  %1326 = vst [vmem:[#allocation2 + $0xc0] sm:$0xff] %v1262
  %1327 = vst [vmem:[#allocation2 + $0xc8] sm:$0xff] %v1263
  %1328 = vst [vmem:[#allocation2 + $0xd0] sm:$0xff] %v1264
  %1329 = vst [vmem:[#allocation2 + $0xd8] sm:$0xff] %v1265
  %1330 = vst [vmem:[#allocation2 + $0xe0] sm:$0xff] %v1266
  %1331 = vst [vmem:[#allocation2 + $0xe8] sm:$0xff] %v1267
  %1332 = vst [vmem:[#allocation2 + $0xf0] sm:$0xff] %v1268
  %1333 = vst [vmem:[#allocation2 + $0xf8] sm:$0xff] %v1269
  %1334 = vst [vmem:[#allocation2 + $0x100] sm:$0xff] %v1270
  %1335 = vst [vmem:[#allocation2 + $0x108] sm:$0xff] %v1271
  %1336 = vst [vmem:[#allocation2 + $0x110] sm:$0xff] %v1272
  %1337 = vst [vmem:[#allocation2 + $0x118] sm:$0xff] %v1273
  %1338 = vst [vmem:[#allocation2 + $0x120] sm:$0xff] %v1274
  %1339 = vst [vmem:[#allocation2 + $0x128] sm:$0xff] %v1275
  %1340 = vst [vmem:[#allocation2 + $0x130] sm:$0xff] %v1276
  %1341 = vst [vmem:[#allocation2 + $0x138] sm:$0xff] %v1277
  %1342 = vst [vmem:[#allocation2 + $0x140] sm:$0xff] %v1278
  %1343 = vst [vmem:[#allocation2 + $0x148] sm:$0xff] %v1279
  %1344 = vst [vmem:[#allocation2 + $0x150] sm:$0xff] %v1280
  %1345 = vst [vmem:[#allocation2 + $0x158] sm:$0xff] %v1281
  %1346 = vst [vmem:[#allocation2 + $0x160] sm:$0xff] %v1282
  %1347 = vst [vmem:[#allocation2 + $0x168] sm:$0xff] %v1283
  %1348 = vst [vmem:[#allocation2 + $0x170] sm:$0xff] %v1284
  %1349 = vst [vmem:[#allocation2 + $0x178] sm:$0xff] %v1285
  %1350 = vst [vmem:[#allocation2 + $0x180] sm:$0xff] %v1286
  %1351 = vst [vmem:[#allocation2 + $0x188] sm:$0xff] %v1287
  %1352 = vst [vmem:[#allocation2 + $0x190] sm:$0xff] %v1288
  %1353 = vst [vmem:[#allocation2 + $0x198] sm:$0xff] %v1289
  %1354 = vst [vmem:[#allocation2 + $0x1a0] sm:$0xff] %v1290
  %1355 = vst [vmem:[#allocation2 + $0x1a8] sm:$0xff] %v1291
  %1356 = vst [vmem:[#allocation2 + $0x1b0] sm:$0xff] %v1292
  %1357 = vst [vmem:[#allocation2 + $0x1b8] sm:$0xff] %v1293
  %1358 = vst [vmem:[#allocation2 + $0x1c0] sm:$0xff] %v1294
  %1359 = vst [vmem:[#allocation2 + $0x1c8] sm:$0xff] %v1295
  %1360 = vst [vmem:[#allocation2 + $0x1d0] sm:$0xff] %v1296
  %1361 = vst [vmem:[#allocation2 + $0x1d8] sm:$0xff] %v1297
  %1362 = vst [vmem:[#allocation2 + $0x1e0] sm:$0xff] %v1298
  %1363 = vst [vmem:[#allocation2 + $0x1e8] sm:$0xff] %v1299
  %1364 = vst [vmem:[#allocation2 + $0x1f0] sm:$0xff] %v1300
  %1365 = vst [vmem:[#allocation2 + $0x1f8] sm:$0xff] %v1301
  // Predicated region
  $region18: #{graphsage_forward.5} parent=0 // pred_check
    %p1366 = pneg %p14
  $region19: #{graphsage_forward.5} parent=0 // pred_check_branch
    %1368 = sbr.rel (%p1366) target = $region21
  $region20: #{graphsage_forward.5} parent=0 // pred_region
    %v1369 = vld [vmem:[#allocation2] sm:$0xff]
    %v1370 = vld [vmem:[#allocation2 + $0x8] sm:$0xff]
    %v1371 = vld [vmem:[#allocation2 + $0x10] sm:$0xff]
    %v1372 = vld [vmem:[#allocation2 + $0x18] sm:$0xff]
    %v1373 = vld [vmem:[#allocation2 + $0x20] sm:$0xff]
    %v1374 = vld [vmem:[#allocation2 + $0x28] sm:$0xff]
    %v1375 = vld [vmem:[#allocation2 + $0x30] sm:$0xff]
    %v1376 = vld [vmem:[#allocation2 + $0x38] sm:$0xff]
    %v1377 = vld [vmem:[#allocation2 + $0x40] sm:$0xff]
    %v1378 = vld [vmem:[#allocation2 + $0x48] sm:$0xff]
    %v1379 = vld [vmem:[#allocation2 + $0x50] sm:$0xff]
    %v1380 = vld [vmem:[#allocation2 + $0x58] sm:$0xff]
    %v1381 = vld [vmem:[#allocation2 + $0x60] sm:$0xff]
    %v1382 = vld [vmem:[#allocation2 + $0x68] sm:$0xff]
    %v1383 = vld [vmem:[#allocation2 + $0x70] sm:$0xff]
    %v1384 = vld [vmem:[#allocation2 + $0x78] sm:$0xff]
    %v1385 = vld [vmem:[#allocation2 + $0x80] sm:$0xff]
    %v1386 = vld [vmem:[#allocation2 + $0x88] sm:$0xff]
    %v1387 = vld [vmem:[#allocation2 + $0x90] sm:$0xff]
    %v1388 = vld [vmem:[#allocation2 + $0x98] sm:$0xff]
    %v1389 = vld [vmem:[#allocation2 + $0xa0] sm:$0xff]
    %v1390 = vld [vmem:[#allocation2 + $0xa8] sm:$0xff]
    %v1391 = vld [vmem:[#allocation2 + $0xb0] sm:$0xff]
    %v1392 = vld [vmem:[#allocation2 + $0xb8] sm:$0xff]
    %v1393 = vld [vmem:[#allocation2 + $0xc0] sm:$0xff]
    %v1394 = vld [vmem:[#allocation2 + $0xc8] sm:$0xff]
    %v1395 = vld [vmem:[#allocation2 + $0xd0] sm:$0xff]
    %v1396 = vld [vmem:[#allocation2 + $0xd8] sm:$0xff]
    %v1397 = vld [vmem:[#allocation2 + $0xe0] sm:$0xff]
    %v1398 = vld [vmem:[#allocation2 + $0xe8] sm:$0xff]
    %v1399 = vld [vmem:[#allocation2 + $0xf0] sm:$0xff]
    %v1400 = vld [vmem:[#allocation2 + $0xf8] sm:$0xff]
    %v1401 = vld [vmem:[#allocation2 + $0x100] sm:$0xff]
    %v1402 = vld [vmem:[#allocation2 + $0x108] sm:$0xff]
    %v1403 = vld [vmem:[#allocation2 + $0x110] sm:$0xff]
    %v1404 = vld [vmem:[#allocation2 + $0x118] sm:$0xff]
    %v1405 = vld [vmem:[#allocation2 + $0x120] sm:$0xff]
    %v1406 = vld [vmem:[#allocation2 + $0x128] sm:$0xff]
    %v1407 = vld [vmem:[#allocation2 + $0x130] sm:$0xff]
    %v1408 = vld [vmem:[#allocation2 + $0x138] sm:$0xff]
    %v1409 = vld [vmem:[#allocation2 + $0x140] sm:$0xff]
    %v1410 = vld [vmem:[#allocation2 + $0x148] sm:$0xff]
    %v1411 = vld [vmem:[#allocation2 + $0x150] sm:$0xff]
    %v1412 = vld [vmem:[#allocation2 + $0x158] sm:$0xff]
    %v1413 = vld [vmem:[#allocation2 + $0x160] sm:$0xff]
    %v1414 = vld [vmem:[#allocation2 + $0x168] sm:$0xff]
    %v1415 = vld [vmem:[#allocation2 + $0x170] sm:$0xff]
    %v1416 = vld [vmem:[#allocation2 + $0x178] sm:$0xff]
    %v1417 = vld [vmem:[#allocation2 + $0x180] sm:$0xff]
    %v1418 = vld [vmem:[#allocation2 + $0x188] sm:$0xff]
    %v1419 = vld [vmem:[#allocation2 + $0x190] sm:$0xff]
    %v1420 = vld [vmem:[#allocation2 + $0x198] sm:$0xff]
    %v1421 = vld [vmem:[#allocation2 + $0x1a0] sm:$0xff]
    %v1422 = vld [vmem:[#allocation2 + $0x1a8] sm:$0xff]
    %v1423 = vld [vmem:[#allocation2 + $0x1b0] sm:$0xff]
    %v1424 = vld [vmem:[#allocation2 + $0x1b8] sm:$0xff]
    %v1425 = vld [vmem:[#allocation2 + $0x1c0] sm:$0xff]
    %v1426 = vld [vmem:[#allocation2 + $0x1c8] sm:$0xff]
    %v1427 = vld [vmem:[#allocation2 + $0x1d0] sm:$0xff]
    %v1428 = vld [vmem:[#allocation2 + $0x1d8] sm:$0xff]
    %v1429 = vld [vmem:[#allocation2 + $0x1e0] sm:$0xff]
    %v1430 = vld [vmem:[#allocation2 + $0x1e8] sm:$0xff]
    %v1431 = vld [vmem:[#allocation2 + $0x1f0] sm:$0xff]
    %v1432 = vld [vmem:[#allocation2 + $0x1f8] sm:$0xff]
    %v1433 = vld [vmem:[%s2] sm:$0xff]
    %v1434 = vld [vmem:[%s2 + $0x8] sm:$0xff]
    %v1435 = vld [vmem:[%s2 + $0x10] sm:$0xff]
    %v1436 = vld [vmem:[%s2 + $0x18] sm:$0xff]
    %v1437 = vld [vmem:[%s2 + $0x20] sm:$0xff]
    %v1438 = vld [vmem:[%s2 + $0x28] sm:$0xff]
    %v1439 = vld [vmem:[%s2 + $0x30] sm:$0xff]
    %v1440 = vld [vmem:[%s2 + $0x38] sm:$0xff]
    %v1441 = vld [vmem:[%s2 + $0x40] sm:$0xff]
    %v1442 = vld [vmem:[%s2 + $0x48] sm:$0xff]
    %v1443 = vld [vmem:[%s2 + $0x50] sm:$0xff]
    %v1444 = vld [vmem:[%s2 + $0x58] sm:$0xff]
    %v1445 = vld [vmem:[%s2 + $0x60] sm:$0xff]
    %v1446 = vld [vmem:[%s2 + $0x68] sm:$0xff]
    %v1447 = vld [vmem:[%s2 + $0x70] sm:$0xff]
    %v1448 = vld [vmem:[%s2 + $0x78] sm:$0xff]
    %v1449 = vld [vmem:[%s2 + $0x80] sm:$0xff]
    %v1450 = vld [vmem:[%s2 + $0x88] sm:$0xff]
    %v1451 = vld [vmem:[%s2 + $0x90] sm:$0xff]
    %v1452 = vld [vmem:[%s2 + $0x98] sm:$0xff]
    %v1453 = vld [vmem:[%s2 + $0xa0] sm:$0xff]
    %v1454 = vld [vmem:[%s2 + $0xa8] sm:$0xff]
    %v1455 = vld [vmem:[%s2 + $0xb0] sm:$0xff]
    %v1456 = vld [vmem:[%s2 + $0xb8] sm:$0xff]
    %v1457 = vld [vmem:[%s2 + $0xc0] sm:$0xff]
    %v1458 = vld [vmem:[%s2 + $0xc8] sm:$0xff]
    %v1459 = vld [vmem:[%s2 + $0xd0] sm:$0xff]
    %v1460 = vld [vmem:[%s2 + $0xd8] sm:$0xff]
    %v1461 = vld [vmem:[%s2 + $0xe0] sm:$0xff]
    %v1462 = vld [vmem:[%s2 + $0xe8] sm:$0xff]
    %v1463 = vld [vmem:[%s2 + $0xf0] sm:$0xff]
    %v1464 = vld [vmem:[%s2 + $0xf8] sm:$0xff]
    %v1465 = vld [vmem:[%s2 + $0x100] sm:$0xff]
    %v1466 = vld [vmem:[%s2 + $0x108] sm:$0xff]
    %v1467 = vld [vmem:[%s2 + $0x110] sm:$0xff]
    %v1468 = vld [vmem:[%s2 + $0x118] sm:$0xff]
    %v1469 = vld [vmem:[%s2 + $0x120] sm:$0xff]
    %v1470 = vld [vmem:[%s2 + $0x128] sm:$0xff]
    %v1471 = vld [vmem:[%s2 + $0x130] sm:$0xff]
    %v1472 = vld [vmem:[%s2 + $0x138] sm:$0xff]
    %v1473 = vld [vmem:[%s2 + $0x140] sm:$0xff]
    %v1474 = vld [vmem:[%s2 + $0x148] sm:$0xff]
    %v1475 = vld [vmem:[%s2 + $0x150] sm:$0xff]
    %v1476 = vld [vmem:[%s2 + $0x158] sm:$0xff]
    %v1477 = vld [vmem:[%s2 + $0x160] sm:$0xff]
    %v1478 = vld [vmem:[%s2 + $0x168] sm:$0xff]
    %v1479 = vld [vmem:[%s2 + $0x170] sm:$0xff]
    %v1480 = vld [vmem:[%s2 + $0x178] sm:$0xff]
    %v1481 = vld [vmem:[%s2 + $0x180] sm:$0xff]
    %v1482 = vld [vmem:[%s2 + $0x188] sm:$0xff]
    %v1483 = vld [vmem:[%s2 + $0x190] sm:$0xff]
    %v1484 = vld [vmem:[%s2 + $0x198] sm:$0xff]
    %v1485 = vld [vmem:[%s2 + $0x1a0] sm:$0xff]
    %v1486 = vld [vmem:[%s2 + $0x1a8] sm:$0xff]
    %v1487 = vld [vmem:[%s2 + $0x1b0] sm:$0xff]
    %v1488 = vld [vmem:[%s2 + $0x1b8] sm:$0xff]
    %v1489 = vld [vmem:[%s2 + $0x1c0] sm:$0xff]
    %v1490 = vld [vmem:[%s2 + $0x1c8] sm:$0xff]
    %v1491 = vld [vmem:[%s2 + $0x1d0] sm:$0xff]
    %v1492 = vld [vmem:[%s2 + $0x1d8] sm:$0xff]
    %v1493 = vld [vmem:[%s2 + $0x1e0] sm:$0xff]
    %v1494 = vld [vmem:[%s2 + $0x1e8] sm:$0xff]
    %v1495 = vld [vmem:[%s2 + $0x1f0] sm:$0xff]
    %v1496 = vld [vmem:[%s2 + $0x1f8] sm:$0xff]
    %v1497 = vadd.f32 %v1369, %v1433
    %v1498 = vadd.f32 %v1370, %v1434
    %v1499 = vadd.f32 %v1371, %v1435
    %v1500 = vadd.f32 %v1372, %v1436
    %v1501 = vadd.f32 %v1373, %v1437
    %v1502 = vadd.f32 %v1374, %v1438
    %v1503 = vadd.f32 %v1375, %v1439
    %v1504 = vadd.f32 %v1376, %v1440
    %v1505 = vadd.f32 %v1377, %v1441
    %v1506 = vadd.f32 %v1378, %v1442
    %v1507 = vadd.f32 %v1379, %v1443
    %v1508 = vadd.f32 %v1380, %v1444
    %v1509 = vadd.f32 %v1381, %v1445
    %v1510 = vadd.f32 %v1382, %v1446
    %v1511 = vadd.f32 %v1383, %v1447
    %v1512 = vadd.f32 %v1384, %v1448
    %v1513 = vadd.f32 %v1385, %v1449
    %v1514 = vadd.f32 %v1386, %v1450
    %v1515 = vadd.f32 %v1387, %v1451
    %v1516 = vadd.f32 %v1388, %v1452
    %v1517 = vadd.f32 %v1389, %v1453
    %v1518 = vadd.f32 %v1390, %v1454
    %v1519 = vadd.f32 %v1391, %v1455
    %v1520 = vadd.f32 %v1392, %v1456
    %v1521 = vadd.f32 %v1393, %v1457
    %v1522 = vadd.f32 %v1394, %v1458
    %v1523 = vadd.f32 %v1395, %v1459
    %v1524 = vadd.f32 %v1396, %v1460
    %v1525 = vadd.f32 %v1397, %v1461
    %v1526 = vadd.f32 %v1398, %v1462
    %v1527 = vadd.f32 %v1399, %v1463
    %v1528 = vadd.f32 %v1400, %v1464
    %v1529 = vadd.f32 %v1401, %v1465
    %v1530 = vadd.f32 %v1402, %v1466
    %v1531 = vadd.f32 %v1403, %v1467
    %v1532 = vadd.f32 %v1404, %v1468
    %v1533 = vadd.f32 %v1405, %v1469
    %v1534 = vadd.f32 %v1406, %v1470
    %v1535 = vadd.f32 %v1407, %v1471
    %v1536 = vadd.f32 %v1408, %v1472
    %v1537 = vadd.f32 %v1409, %v1473
    %v1538 = vadd.f32 %v1410, %v1474
    %v1539 = vadd.f32 %v1411, %v1475
    %v1540 = vadd.f32 %v1412, %v1476
    %v1541 = vadd.f32 %v1413, %v1477
    %v1542 = vadd.f32 %v1414, %v1478
    %v1543 = vadd.f32 %v1415, %v1479
    %v1544 = vadd.f32 %v1416, %v1480
    %v1545 = vadd.f32 %v1417, %v1481
    %v1546 = vadd.f32 %v1418, %v1482
    %v1547 = vadd.f32 %v1419, %v1483
    %v1548 = vadd.f32 %v1420, %v1484
    %v1549 = vadd.f32 %v1421, %v1485
    %v1550 = vadd.f32 %v1422, %v1486
    %v1551 = vadd.f32 %v1423, %v1487
    %v1552 = vadd.f32 %v1424, %v1488
    %v1553 = vadd.f32 %v1425, %v1489
    %v1554 = vadd.f32 %v1426, %v1490
    %v1555 = vadd.f32 %v1427, %v1491
    %v1556 = vadd.f32 %v1428, %v1492
    %v1557 = vadd.f32 %v1429, %v1493
    %v1558 = vadd.f32 %v1430, %v1494
    %v1559 = vadd.f32 %v1431, %v1495
    %v1560 = vadd.f32 %v1432, %v1496
    %v1561 = vmax.f32 %v1497, 0.0
    %v1562 = vmax.f32 %v1498, 0.0
    %v1563 = vmax.f32 %v1499, 0.0
    %v1564 = vmax.f32 %v1500, 0.0
    %v1565 = vmax.f32 %v1501, 0.0
    %v1566 = vmax.f32 %v1502, 0.0
    %v1567 = vmax.f32 %v1503, 0.0
    %v1568 = vmax.f32 %v1504, 0.0
    %v1569 = vmax.f32 %v1505, 0.0
    %v1570 = vmax.f32 %v1506, 0.0
    %v1571 = vmax.f32 %v1507, 0.0
    %v1572 = vmax.f32 %v1508, 0.0
    %v1573 = vmax.f32 %v1509, 0.0
    %v1574 = vmax.f32 %v1510, 0.0
    %v1575 = vmax.f32 %v1511, 0.0
    %v1576 = vmax.f32 %v1512, 0.0
    %v1577 = vmax.f32 %v1513, 0.0
    %v1578 = vmax.f32 %v1514, 0.0
    %v1579 = vmax.f32 %v1515, 0.0
    %v1580 = vmax.f32 %v1516, 0.0
    %v1581 = vmax.f32 %v1517, 0.0
    %v1582 = vmax.f32 %v1518, 0.0
    %v1583 = vmax.f32 %v1519, 0.0
    %v1584 = vmax.f32 %v1520, 0.0
    %v1585 = vmax.f32 %v1521, 0.0
    %v1586 = vmax.f32 %v1522, 0.0
    %v1587 = vmax.f32 %v1523, 0.0
    %v1588 = vmax.f32 %v1524, 0.0
    %v1589 = vmax.f32 %v1525, 0.0
    %v1590 = vmax.f32 %v1526, 0.0
    %v1591 = vmax.f32 %v1527, 0.0
    %v1592 = vmax.f32 %v1528, 0.0
    %v1593 = vmax.f32 %v1529, 0.0
    %v1594 = vmax.f32 %v1530, 0.0
    %v1595 = vmax.f32 %v1531, 0.0
    %v1596 = vmax.f32 %v1532, 0.0
    %v1597 = vmax.f32 %v1533, 0.0
    %v1598 = vmax.f32 %v1534, 0.0
    %v1599 = vmax.f32 %v1535, 0.0
    %v1600 = vmax.f32 %v1536, 0.0
    %v1601 = vmax.f32 %v1537, 0.0
    %v1602 = vmax.f32 %v1538, 0.0
    %v1603 = vmax.f32 %v1539, 0.0
    %v1604 = vmax.f32 %v1540, 0.0
    %v1605 = vmax.f32 %v1541, 0.0
    %v1606 = vmax.f32 %v1542, 0.0
    %v1607 = vmax.f32 %v1543, 0.0
    %v1608 = vmax.f32 %v1544, 0.0
    %v1609 = vmax.f32 %v1545, 0.0
    %v1610 = vmax.f32 %v1546, 0.0
    %v1611 = vmax.f32 %v1547, 0.0
    %v1612 = vmax.f32 %v1548, 0.0
    %v1613 = vmax.f32 %v1549, 0.0
    %v1614 = vmax.f32 %v1550, 0.0
    %v1615 = vmax.f32 %v1551, 0.0
    %v1616 = vmax.f32 %v1552, 0.0
    %v1617 = vmax.f32 %v1553, 0.0
    %v1618 = vmax.f32 %v1554, 0.0
    %v1619 = vmax.f32 %v1555, 0.0
    %v1620 = vmax.f32 %v1556, 0.0
    %v1621 = vmax.f32 %v1557, 0.0
    %v1622 = vmax.f32 %v1558, 0.0
    %v1623 = vmax.f32 %v1559, 0.0
    %v1624 = vmax.f32 %v1560, 0.0
    %1625 = vst [vmem:[%s3] sm:$0xff] %v1561
    %1626 = vst [vmem:[%s3 + $0x8] sm:$0xff] %v1562
    %1627 = vst [vmem:[%s3 + $0x10] sm:$0xff] %v1563
    %1628 = vst [vmem:[%s3 + $0x18] sm:$0xff] %v1564
    %1629 = vst [vmem:[%s3 + $0x20] sm:$0xff] %v1565
    %1630 = vst [vmem:[%s3 + $0x28] sm:$0xff] %v1566
    %1631 = vst [vmem:[%s3 + $0x30] sm:$0xff] %v1567
    %1632 = vst [vmem:[%s3 + $0x38] sm:$0xff] %v1568
    %1633 = vst [vmem:[%s3 + $0x40] sm:$0xff] %v1569
    %1634 = vst [vmem:[%s3 + $0x48] sm:$0xff] %v1570
    %1635 = vst [vmem:[%s3 + $0x50] sm:$0xff] %v1571
    %1636 = vst [vmem:[%s3 + $0x58] sm:$0xff] %v1572
    %1637 = vst [vmem:[%s3 + $0x60] sm:$0xff] %v1573
    %1638 = vst [vmem:[%s3 + $0x68] sm:$0xff] %v1574
    %1639 = vst [vmem:[%s3 + $0x70] sm:$0xff] %v1575
    %1640 = vst [vmem:[%s3 + $0x78] sm:$0xff] %v1576
    %1641 = vst [vmem:[%s3 + $0x80] sm:$0xff] %v1577
    %1642 = vst [vmem:[%s3 + $0x88] sm:$0xff] %v1578
    %1643 = vst [vmem:[%s3 + $0x90] sm:$0xff] %v1579
    %1644 = vst [vmem:[%s3 + $0x98] sm:$0xff] %v1580
    %1645 = vst [vmem:[%s3 + $0xa0] sm:$0xff] %v1581
    %1646 = vst [vmem:[%s3 + $0xa8] sm:$0xff] %v1582
    %1647 = vst [vmem:[%s3 + $0xb0] sm:$0xff] %v1583
    %1648 = vst [vmem:[%s3 + $0xb8] sm:$0xff] %v1584
    %1649 = vst [vmem:[%s3 + $0xc0] sm:$0xff] %v1585
    %1650 = vst [vmem:[%s3 + $0xc8] sm:$0xff] %v1586
    %1651 = vst [vmem:[%s3 + $0xd0] sm:$0xff] %v1587
    %1652 = vst [vmem:[%s3 + $0xd8] sm:$0xff] %v1588
    %1653 = vst [vmem:[%s3 + $0xe0] sm:$0xff] %v1589
    %1654 = vst [vmem:[%s3 + $0xe8] sm:$0xff] %v1590
    %1655 = vst [vmem:[%s3 + $0xf0] sm:$0xff] %v1591
    %1656 = vst [vmem:[%s3 + $0xf8] sm:$0xff] %v1592
    %1657 = vst [vmem:[%s3 + $0x100] sm:$0xff] %v1593
    %1658 = vst [vmem:[%s3 + $0x108] sm:$0xff] %v1594
    %1659 = vst [vmem:[%s3 + $0x110] sm:$0xff] %v1595
    %1660 = vst [vmem:[%s3 + $0x118] sm:$0xff] %v1596
    %1661 = vst [vmem:[%s3 + $0x120] sm:$0xff] %v1597
    %1662 = vst [vmem:[%s3 + $0x128] sm:$0xff] %v1598
    %1663 = vst [vmem:[%s3 + $0x130] sm:$0xff] %v1599
    %1664 = vst [vmem:[%s3 + $0x138] sm:$0xff] %v1600
    %1665 = vst [vmem:[%s3 + $0x140] sm:$0xff] %v1601
    %1666 = vst [vmem:[%s3 + $0x148] sm:$0xff] %v1602
    %1667 = vst [vmem:[%s3 + $0x150] sm:$0xff] %v1603
    %1668 = vst [vmem:[%s3 + $0x158] sm:$0xff] %v1604
    %1669 = vst [vmem:[%s3 + $0x160] sm:$0xff] %v1605
    %1670 = vst [vmem:[%s3 + $0x168] sm:$0xff] %v1606
    %1671 = vst [vmem:[%s3 + $0x170] sm:$0xff] %v1607
    %1672 = vst [vmem:[%s3 + $0x178] sm:$0xff] %v1608
    %1673 = vst [vmem:[%s3 + $0x180] sm:$0xff] %v1609
    %1674 = vst [vmem:[%s3 + $0x188] sm:$0xff] %v1610
    %1675 = vst [vmem:[%s3 + $0x190] sm:$0xff] %v1611
    %1676 = vst [vmem:[%s3 + $0x198] sm:$0xff] %v1612
    %1677 = vst [vmem:[%s3 + $0x1a0] sm:$0xff] %v1613
    %1678 = vst [vmem:[%s3 + $0x1a8] sm:$0xff] %v1614
    %1679 = vst [vmem:[%s3 + $0x1b0] sm:$0xff] %v1615
    %1680 = vst [vmem:[%s3 + $0x1b8] sm:$0xff] %v1616
    %1681 = vst [vmem:[%s3 + $0x1c0] sm:$0xff] %v1617
    %1682 = vst [vmem:[%s3 + $0x1c8] sm:$0xff] %v1618
    %1683 = vst [vmem:[%s3 + $0x1d0] sm:$0xff] %v1619
    %1684 = vst [vmem:[%s3 + $0x1d8] sm:$0xff] %v1620
    %1685 = vst [vmem:[%s3 + $0x1e0] sm:$0xff] %v1621
    %1686 = vst [vmem:[%s3 + $0x1e8] sm:$0xff] %v1622
    %1687 = vst [vmem:[%s3 + $0x1f0] sm:$0xff] %v1623
    %1688 = vst [vmem:[%s3 + $0x1f8] sm:$0xff] %v1624
  $region21: #{graphsage_forward.5} parent=0 // pred_fallthru
    _
  // Predicated region
  $region22: #{graphsage_forward.5} parent=0 // pred_check
    _
  $region23: #{graphsage_forward.5} parent=0 // pred_check_branch
    %1690 = sbr.rel (0) target = $region25
  $region24: #{graphsage_forward.5} parent=0 // pred_region
    _
  $region25: #{graphsage_forward.5} parent=0 // pred_fallthru
    _
  // Predicated region
  $region26: #{graphsage_forward.5} parent=0 // pred_check
    _
  $region27: #{graphsage_forward.5} parent=0 // pred_check_branch
    %1692 = sbr.rel (0) target = $region29
  $region28: #{graphsage_forward.5} parent=0 // pred_region
    _
  $region29: #{graphsage_forward.5} parent=0 // pred_fallthru
    _

// kernel: graphsage_forward.7
$region0: #{graphsage_forward.7}
  #allocation0 [shape = 'u32[]', space=smem, size = 0x4, offset = 0x4, fixed_abs, tag = 'smem constant byte address 0x4 - core index']
  #allocation1 [shape = 'u32[144,128]{1,0:T(1,128)}', space=vmem, size = 0x12000, scoped, tag = 'internal scratch']
  #allocation2 [shape = 'f32[512,128]{1,0:T(8,128)}', space=vmem, size = 0x40000, scoped, tag = 'scratch operand']
  %s0 = inlined_call_operand.vmem [shape: f32[512,512], index: 0, kind: input, shape index: {}]
  %s1 = inlined_call_operand.vmem [shape: f32[512,128], index: 1, kind: input, shape index: {}]
  %s2 = inlined_call_operand.vmem [shape: f32[512,128], index: 2, kind: input, shape index: {}]
  %s3 = inlined_call_operand.vmem [shape: f32[512,128], index: 3, kind: output, shape index: {}]
  %s4 = sld [smem:[#allocation0]]
  $region30: #{graphsage_forward.7} parent=0
    _
  %s6 = ssub.s32 1, %s4
  %s7 = scalar_select 0, %s6, %s4
  // Predicated region
  $region2: #{graphsage_forward.7} parent=0 // pred_check
    _
  $region3: #{graphsage_forward.7} parent=0 // pred_check_branch
    %9 = sbr.rel (0) target = $region5
  $region4: #{graphsage_forward.7} parent=0 // pred_region
    _
  $region5: #{graphsage_forward.7} parent=0 // pred_fallthru
    _
  // Predicated region
  $region6: #{graphsage_forward.7} parent=0 // pred_check
    _
  $region7: #{graphsage_forward.7} parent=0 // pred_check_branch
    %11 = sbr.rel (0) target = $region9
  $region8: #{graphsage_forward.7} parent=0 // pred_region
    _
  $region9: #{graphsage_forward.7} parent=0 // pred_fallthru
    _
  // Predicated region
  $region10: #{graphsage_forward.7} parent=0 // pred_check
    _
  $region11: #{graphsage_forward.7} parent=0 // pred_check_branch
    %13 = sbr.rel (0) target = $region13
  $region12: #{graphsage_forward.7} parent=0 // pred_region
    _
  $region13: #{graphsage_forward.7} parent=0 // pred_fallthru
    _
  %p14 = scmp.eq.s32.totalorder 0, 0
  // Predicated region
  $region14: #{graphsage_forward.7} parent=0 // pred_check
    %p15 = pneg %p14
  $region15: #{graphsage_forward.7} parent=0 // pred_check_branch
    %17 = sbr.rel (%p15) target = $region17
  $region16: #{graphsage_forward.7} parent=0 // pred_region
    %18 = vst [vmem:[#allocation2] sm:$0xff] 0.0
    %19 = vst [vmem:[#allocation2 + $0x8] sm:$0xff] 0.0
    %20 = vst [vmem:[#allocation2 + $0x10] sm:$0xff] 0.0
    %21 = vst [vmem:[#allocation2 + $0x18] sm:$0xff] 0.0
    %22 = vst [vmem:[#allocation2 + $0x20] sm:$0xff] 0.0
    %23 = vst [vmem:[#allocation2 + $0x28] sm:$0xff] 0.0
    %24 = vst [vmem:[#allocation2 + $0x30] sm:$0xff] 0.0
    %25 = vst [vmem:[#allocation2 + $0x38] sm:$0xff] 0.0
    %26 = vst [vmem:[#allocation2 + $0x40] sm:$0xff] 0.0
    %27 = vst [vmem:[#allocation2 + $0x48] sm:$0xff] 0.0
    %28 = vst [vmem:[#allocation2 + $0x50] sm:$0xff] 0.0
    %29 = vst [vmem:[#allocation2 + $0x58] sm:$0xff] 0.0
    %30 = vst [vmem:[#allocation2 + $0x60] sm:$0xff] 0.0
    %31 = vst [vmem:[#allocation2 + $0x68] sm:$0xff] 0.0
    %32 = vst [vmem:[#allocation2 + $0x70] sm:$0xff] 0.0
    %33 = vst [vmem:[#allocation2 + $0x78] sm:$0xff] 0.0
    %34 = vst [vmem:[#allocation2 + $0x80] sm:$0xff] 0.0
    %35 = vst [vmem:[#allocation2 + $0x88] sm:$0xff] 0.0
    %36 = vst [vmem:[#allocation2 + $0x90] sm:$0xff] 0.0
    %37 = vst [vmem:[#allocation2 + $0x98] sm:$0xff] 0.0
    %38 = vst [vmem:[#allocation2 + $0xa0] sm:$0xff] 0.0
    %39 = vst [vmem:[#allocation2 + $0xa8] sm:$0xff] 0.0
    %40 = vst [vmem:[#allocation2 + $0xb0] sm:$0xff] 0.0
    %41 = vst [vmem:[#allocation2 + $0xb8] sm:$0xff] 0.0
    %42 = vst [vmem:[#allocation2 + $0xc0] sm:$0xff] 0.0
    %43 = vst [vmem:[#allocation2 + $0xc8] sm:$0xff] 0.0
    %44 = vst [vmem:[#allocation2 + $0xd0] sm:$0xff] 0.0
    %45 = vst [vmem:[#allocation2 + $0xd8] sm:$0xff] 0.0
    %46 = vst [vmem:[#allocation2 + $0xe0] sm:$0xff] 0.0
    %47 = vst [vmem:[#allocation2 + $0xe8] sm:$0xff] 0.0
    %48 = vst [vmem:[#allocation2 + $0xf0] sm:$0xff] 0.0
    %49 = vst [vmem:[#allocation2 + $0xf8] sm:$0xff] 0.0
    %50 = vst [vmem:[#allocation2 + $0x100] sm:$0xff] 0.0
    %51 = vst [vmem:[#allocation2 + $0x108] sm:$0xff] 0.0
    %52 = vst [vmem:[#allocation2 + $0x110] sm:$0xff] 0.0
    %53 = vst [vmem:[#allocation2 + $0x118] sm:$0xff] 0.0
    %54 = vst [vmem:[#allocation2 + $0x120] sm:$0xff] 0.0
    %55 = vst [vmem:[#allocation2 + $0x128] sm:$0xff] 0.0
    %56 = vst [vmem:[#allocation2 + $0x130] sm:$0xff] 0.0
    %57 = vst [vmem:[#allocation2 + $0x138] sm:$0xff] 0.0
    %58 = vst [vmem:[#allocation2 + $0x140] sm:$0xff] 0.0
    %59 = vst [vmem:[#allocation2 + $0x148] sm:$0xff] 0.0
    %60 = vst [vmem:[#allocation2 + $0x150] sm:$0xff] 0.0
    %61 = vst [vmem:[#allocation2 + $0x158] sm:$0xff] 0.0
    %62 = vst [vmem:[#allocation2 + $0x160] sm:$0xff] 0.0
    %63 = vst [vmem:[#allocation2 + $0x168] sm:$0xff] 0.0
    %64 = vst [vmem:[#allocation2 + $0x170] sm:$0xff] 0.0
    %65 = vst [vmem:[#allocation2 + $0x178] sm:$0xff] 0.0
    %66 = vst [vmem:[#allocation2 + $0x180] sm:$0xff] 0.0
    %67 = vst [vmem:[#allocation2 + $0x188] sm:$0xff] 0.0
    %68 = vst [vmem:[#allocation2 + $0x190] sm:$0xff] 0.0
    %69 = vst [vmem:[#allocation2 + $0x198] sm:$0xff] 0.0
    %70 = vst [vmem:[#allocation2 + $0x1a0] sm:$0xff] 0.0
    %71 = vst [vmem:[#allocation2 + $0x1a8] sm:$0xff] 0.0
    %72 = vst [vmem:[#allocation2 + $0x1b0] sm:$0xff] 0.0
    %73 = vst [vmem:[#allocation2 + $0x1b8] sm:$0xff] 0.0
    %74 = vst [vmem:[#allocation2 + $0x1c0] sm:$0xff] 0.0
    %75 = vst [vmem:[#allocation2 + $0x1c8] sm:$0xff] 0.0
    %76 = vst [vmem:[#allocation2 + $0x1d0] sm:$0xff] 0.0
    %77 = vst [vmem:[#allocation2 + $0x1d8] sm:$0xff] 0.0
    %78 = vst [vmem:[#allocation2 + $0x1e0] sm:$0xff] 0.0
    %79 = vst [vmem:[#allocation2 + $0x1e8] sm:$0xff] 0.0
    %80 = vst [vmem:[#allocation2 + $0x1f0] sm:$0xff] 0.0
    %81 = vst [vmem:[#allocation2 + $0x1f8] sm:$0xff] 0.0
  $region17: #{graphsage_forward.7} parent=0 // pred_fallthru
    _
  %s82 = smul.u32 0, 512
  %s83 = scalar_lea.vmem %s1, %s82
  %v84 = vld [vmem:[%s83] sm:$0xff]
  %v85 = vld [vmem:[%s83 + $0x8] sm:$0xff]
  %v86 = vld [vmem:[%s83 + $0x10] sm:$0xff]
  %v87 = vld [vmem:[%s83 + $0x18] sm:$0xff]
  %v88 = vld [vmem:[%s83 + $0x20] sm:$0xff]
  %v89 = vld [vmem:[%s83 + $0x28] sm:$0xff]
  %v90 = vld [vmem:[%s83 + $0x30] sm:$0xff]
  %v91 = vld [vmem:[%s83 + $0x38] sm:$0xff]
  %v92 = vld [vmem:[%s83 + $0x40] sm:$0xff]
  %v93 = vld [vmem:[%s83 + $0x48] sm:$0xff]
  %v94 = vld [vmem:[%s83 + $0x50] sm:$0xff]
  %v95 = vld [vmem:[%s83 + $0x58] sm:$0xff]
  %v96 = vld [vmem:[%s83 + $0x60] sm:$0xff]
  %v97 = vld [vmem:[%s83 + $0x68] sm:$0xff]
  %v98 = vld [vmem:[%s83 + $0x70] sm:$0xff]
  %v99 = vld [vmem:[%s83 + $0x78] sm:$0xff]
  %v100 = vld [vmem:[%s83 + $0x80] sm:$0xff]
  %v101 = vld [vmem:[%s83 + $0x88] sm:$0xff]
  %v102 = vld [vmem:[%s83 + $0x90] sm:$0xff]
  %v103 = vld [vmem:[%s83 + $0x98] sm:$0xff]
  %v104 = vld [vmem:[%s83 + $0xa0] sm:$0xff]
  %v105 = vld [vmem:[%s83 + $0xa8] sm:$0xff]
  %v106 = vld [vmem:[%s83 + $0xb0] sm:$0xff]
  %v107 = vld [vmem:[%s83 + $0xb8] sm:$0xff]
  %v108 = vld [vmem:[%s83 + $0xc0] sm:$0xff]
  %v109 = vld [vmem:[%s83 + $0xc8] sm:$0xff]
  %v110 = vld [vmem:[%s83 + $0xd0] sm:$0xff]
  %v111 = vld [vmem:[%s83 + $0xd8] sm:$0xff]
  %v112 = vld [vmem:[%s83 + $0xe0] sm:$0xff]
  %v113 = vld [vmem:[%s83 + $0xe8] sm:$0xff]
  %v114 = vld [vmem:[%s83 + $0xf0] sm:$0xff]
  %v115 = vld [vmem:[%s83 + $0xf8] sm:$0xff]
  %v116 = vld [vmem:[%s83 + $0x100] sm:$0xff]
  %v117 = vld [vmem:[%s83 + $0x108] sm:$0xff]
  %v118 = vld [vmem:[%s83 + $0x110] sm:$0xff]
  %v119 = vld [vmem:[%s83 + $0x118] sm:$0xff]
  %v120 = vld [vmem:[%s83 + $0x120] sm:$0xff]
  %v121 = vld [vmem:[%s83 + $0x128] sm:$0xff]
  %v122 = vld [vmem:[%s83 + $0x130] sm:$0xff]
  %v123 = vld [vmem:[%s83 + $0x138] sm:$0xff]
  %v124 = vld [vmem:[%s83 + $0x140] sm:$0xff]
  %v125 = vld [vmem:[%s83 + $0x148] sm:$0xff]
  %v126 = vld [vmem:[%s83 + $0x150] sm:$0xff]
  %v127 = vld [vmem:[%s83 + $0x158] sm:$0xff]
  %v128 = vld [vmem:[%s83 + $0x160] sm:$0xff]
  %v129 = vld [vmem:[%s83 + $0x168] sm:$0xff]
  %v130 = vld [vmem:[%s83 + $0x170] sm:$0xff]
  %v131 = vld [vmem:[%s83 + $0x178] sm:$0xff]
  %v132 = vld [vmem:[%s83 + $0x180] sm:$0xff]
  %v133 = vld [vmem:[%s83 + $0x188] sm:$0xff]
  %v134 = vld [vmem:[%s83 + $0x190] sm:$0xff]
  %v135 = vld [vmem:[%s83 + $0x198] sm:$0xff]
  %v136 = vld [vmem:[%s83 + $0x1a0] sm:$0xff]
  %v137 = vld [vmem:[%s83 + $0x1a8] sm:$0xff]
  %v138 = vld [vmem:[%s83 + $0x1b0] sm:$0xff]
  %v139 = vld [vmem:[%s83 + $0x1b8] sm:$0xff]
  %v140 = vld [vmem:[%s83 + $0x1c0] sm:$0xff]
  %v141 = vld [vmem:[%s83 + $0x1c8] sm:$0xff]
  %v142 = vld [vmem:[%s83 + $0x1d0] sm:$0xff]
  %v143 = vld [vmem:[%s83 + $0x1d8] sm:$0xff]
  %v144 = vld [vmem:[%s83 + $0x1e0] sm:$0xff]
  %v145 = vld [vmem:[%s83 + $0x1e8] sm:$0xff]
  %v146 = vld [vmem:[%s83 + $0x1f0] sm:$0xff]
  %v147 = vld [vmem:[%s83 + $0x1f8] sm:$0xff]
  %v148 = vld [vmem:[#allocation2] sm:$0xff]
  %v149 = vld [vmem:[#allocation2 + $0x8] sm:$0xff]
  %v150 = vld [vmem:[#allocation2 + $0x10] sm:$0xff]
  %v151 = vld [vmem:[#allocation2 + $0x18] sm:$0xff]
  %v152 = vld [vmem:[#allocation2 + $0x20] sm:$0xff]
  %v153 = vld [vmem:[#allocation2 + $0x28] sm:$0xff]
  %v154 = vld [vmem:[#allocation2 + $0x30] sm:$0xff]
  %v155 = vld [vmem:[#allocation2 + $0x38] sm:$0xff]
  %v156 = vld [vmem:[#allocation2 + $0x40] sm:$0xff]
  %v157 = vld [vmem:[#allocation2 + $0x48] sm:$0xff]
  %v158 = vld [vmem:[#allocation2 + $0x50] sm:$0xff]
  %v159 = vld [vmem:[#allocation2 + $0x58] sm:$0xff]
  %v160 = vld [vmem:[#allocation2 + $0x60] sm:$0xff]
  %v161 = vld [vmem:[#allocation2 + $0x68] sm:$0xff]
  %v162 = vld [vmem:[#allocation2 + $0x70] sm:$0xff]
  %v163 = vld [vmem:[#allocation2 + $0x78] sm:$0xff]
  %v164 = vld [vmem:[#allocation2 + $0x80] sm:$0xff]
  %v165 = vld [vmem:[#allocation2 + $0x88] sm:$0xff]
  %v166 = vld [vmem:[#allocation2 + $0x90] sm:$0xff]
  %v167 = vld [vmem:[#allocation2 + $0x98] sm:$0xff]
  %v168 = vld [vmem:[#allocation2 + $0xa0] sm:$0xff]
  %v169 = vld [vmem:[#allocation2 + $0xa8] sm:$0xff]
  %v170 = vld [vmem:[#allocation2 + $0xb0] sm:$0xff]
  %v171 = vld [vmem:[#allocation2 + $0xb8] sm:$0xff]
  %v172 = vld [vmem:[#allocation2 + $0xc0] sm:$0xff]
  %v173 = vld [vmem:[#allocation2 + $0xc8] sm:$0xff]
  %v174 = vld [vmem:[#allocation2 + $0xd0] sm:$0xff]
  %v175 = vld [vmem:[#allocation2 + $0xd8] sm:$0xff]
  %v176 = vld [vmem:[#allocation2 + $0xe0] sm:$0xff]
  %v177 = vld [vmem:[#allocation2 + $0xe8] sm:$0xff]
  %v178 = vld [vmem:[#allocation2 + $0xf0] sm:$0xff]
  %v179 = vld [vmem:[#allocation2 + $0xf8] sm:$0xff]
  %v180 = vld [vmem:[#allocation2 + $0x100] sm:$0xff]
  %v181 = vld [vmem:[#allocation2 + $0x108] sm:$0xff]
  %v182 = vld [vmem:[#allocation2 + $0x110] sm:$0xff]
  %v183 = vld [vmem:[#allocation2 + $0x118] sm:$0xff]
  %v184 = vld [vmem:[#allocation2 + $0x120] sm:$0xff]
  %v185 = vld [vmem:[#allocation2 + $0x128] sm:$0xff]
  %v186 = vld [vmem:[#allocation2 + $0x130] sm:$0xff]
  %v187 = vld [vmem:[#allocation2 + $0x138] sm:$0xff]
  %v188 = vld [vmem:[#allocation2 + $0x140] sm:$0xff]
  %v189 = vld [vmem:[#allocation2 + $0x148] sm:$0xff]
  %v190 = vld [vmem:[#allocation2 + $0x150] sm:$0xff]
  %v191 = vld [vmem:[#allocation2 + $0x158] sm:$0xff]
  %v192 = vld [vmem:[#allocation2 + $0x160] sm:$0xff]
  %v193 = vld [vmem:[#allocation2 + $0x168] sm:$0xff]
  %v194 = vld [vmem:[#allocation2 + $0x170] sm:$0xff]
  %v195 = vld [vmem:[#allocation2 + $0x178] sm:$0xff]
  %v196 = vld [vmem:[#allocation2 + $0x180] sm:$0xff]
  %v197 = vld [vmem:[#allocation2 + $0x188] sm:$0xff]
  %v198 = vld [vmem:[#allocation2 + $0x190] sm:$0xff]
  %v199 = vld [vmem:[#allocation2 + $0x198] sm:$0xff]
  %v200 = vld [vmem:[#allocation2 + $0x1a0] sm:$0xff]
  %v201 = vld [vmem:[#allocation2 + $0x1a8] sm:$0xff]
  %v202 = vld [vmem:[#allocation2 + $0x1b0] sm:$0xff]
  %v203 = vld [vmem:[#allocation2 + $0x1b8] sm:$0xff]
  %v204 = vld [vmem:[#allocation2 + $0x1c0] sm:$0xff]
  %v205 = vld [vmem:[#allocation2 + $0x1c8] sm:$0xff]
  %v206 = vld [vmem:[#allocation2 + $0x1d0] sm:$0xff]
  %v207 = vld [vmem:[#allocation2 + $0x1d8] sm:$0xff]
  %v208 = vld [vmem:[#allocation2 + $0x1e0] sm:$0xff]
  %v209 = vld [vmem:[#allocation2 + $0x1e8] sm:$0xff]
  %v210 = vld [vmem:[#allocation2 + $0x1f0] sm:$0xff]
  %v211 = vld [vmem:[#allocation2 + $0x1f8] sm:$0xff]
  %v212 = vld [vmem:[%s0] sm:$0xff]
  %v213 = vld [vmem:[%s0 + $0x8] sm:$0xff]
  %v214 = vld [vmem:[%s0 + $0x10] sm:$0xff]
  %v215 = vld [vmem:[%s0 + $0x18] sm:$0xff]
  %v216 = vld [vmem:[%s0 + $0x20] sm:$0xff]
  %v217 = vld [vmem:[%s0 + $0x28] sm:$0xff]
  %v218 = vld [vmem:[%s0 + $0x30] sm:$0xff]
  %v219 = vld [vmem:[%s0 + $0x38] sm:$0xff]
  %v220 = vld [vmem:[%s0 + $0x40] sm:$0xff]
  %v221 = vld [vmem:[%s0 + $0x48] sm:$0xff]
  %v222 = vld [vmem:[%s0 + $0x50] sm:$0xff]
  %v223 = vld [vmem:[%s0 + $0x58] sm:$0xff]
  %v224 = vld [vmem:[%s0 + $0x60] sm:$0xff]
  %v225 = vld [vmem:[%s0 + $0x68] sm:$0xff]
  %v226 = vld [vmem:[%s0 + $0x70] sm:$0xff]
  %v227 = vld [vmem:[%s0 + $0x78] sm:$0xff]
  %v228 = vld [vmem:[%s0 + $0x80] sm:$0xff]
  %v229 = vld [vmem:[%s0 + $0x88] sm:$0xff]
  %v230 = vld [vmem:[%s0 + $0x90] sm:$0xff]
  %v231 = vld [vmem:[%s0 + $0x98] sm:$0xff]
  %v232 = vld [vmem:[%s0 + $0xa0] sm:$0xff]
  %v233 = vld [vmem:[%s0 + $0xa8] sm:$0xff]
  %v234 = vld [vmem:[%s0 + $0xb0] sm:$0xff]
  %v235 = vld [vmem:[%s0 + $0xb8] sm:$0xff]
  %v236 = vld [vmem:[%s0 + $0xc0] sm:$0xff]
  %v237 = vld [vmem:[%s0 + $0xc8] sm:$0xff]
  %v238 = vld [vmem:[%s0 + $0xd0] sm:$0xff]
  %v239 = vld [vmem:[%s0 + $0xd8] sm:$0xff]
  %v240 = vld [vmem:[%s0 + $0xe0] sm:$0xff]
  %v241 = vld [vmem:[%s0 + $0xe8] sm:$0xff]
  %v242 = vld [vmem:[%s0 + $0xf0] sm:$0xff]
  %v243 = vld [vmem:[%s0 + $0xf8] sm:$0xff]
  %v244 = vld [vmem:[%s0 + $0x100] sm:$0xff]
  %v245 = vld [vmem:[%s0 + $0x108] sm:$0xff]
  %v246 = vld [vmem:[%s0 + $0x110] sm:$0xff]
  %v247 = vld [vmem:[%s0 + $0x118] sm:$0xff]
  %v248 = vld [vmem:[%s0 + $0x120] sm:$0xff]
  %v249 = vld [vmem:[%s0 + $0x128] sm:$0xff]
  %v250 = vld [vmem:[%s0 + $0x130] sm:$0xff]
  %v251 = vld [vmem:[%s0 + $0x138] sm:$0xff]
  %v252 = vld [vmem:[%s0 + $0x140] sm:$0xff]
  %v253 = vld [vmem:[%s0 + $0x148] sm:$0xff]
  %v254 = vld [vmem:[%s0 + $0x150] sm:$0xff]
  %v255 = vld [vmem:[%s0 + $0x158] sm:$0xff]
  %v256 = vld [vmem:[%s0 + $0x160] sm:$0xff]
  %v257 = vld [vmem:[%s0 + $0x168] sm:$0xff]
  %v258 = vld [vmem:[%s0 + $0x170] sm:$0xff]
  %v259 = vld [vmem:[%s0 + $0x178] sm:$0xff]
  %v260 = vld [vmem:[%s0 + $0x180] sm:$0xff]
  %v261 = vld [vmem:[%s0 + $0x188] sm:$0xff]
  %v262 = vld [vmem:[%s0 + $0x190] sm:$0xff]
  %v263 = vld [vmem:[%s0 + $0x198] sm:$0xff]
  %v264 = vld [vmem:[%s0 + $0x1a0] sm:$0xff]
  %v265 = vld [vmem:[%s0 + $0x1a8] sm:$0xff]
  %v266 = vld [vmem:[%s0 + $0x1b0] sm:$0xff]
  %v267 = vld [vmem:[%s0 + $0x1b8] sm:$0xff]
  %v268 = vld [vmem:[%s0 + $0x1c0] sm:$0xff]
  %v269 = vld [vmem:[%s0 + $0x1c8] sm:$0xff]
  %v270 = vld [vmem:[%s0 + $0x1d0] sm:$0xff]
  %v271 = vld [vmem:[%s0 + $0x1d8] sm:$0xff]
  %v272 = vld [vmem:[%s0 + $0x1e0] sm:$0xff]
  %v273 = vld [vmem:[%s0 + $0x1e8] sm:$0xff]
  %v274 = vld [vmem:[%s0 + $0x1f0] sm:$0xff]
  %v275 = vld [vmem:[%s0 + $0x1f8] sm:$0xff]
  %v276 = vld [vmem:[%s0 + $0x200] sm:$0xff]
  %v277 = vld [vmem:[%s0 + $0x208] sm:$0xff]
  %v278 = vld [vmem:[%s0 + $0x210] sm:$0xff]
  %v279 = vld [vmem:[%s0 + $0x218] sm:$0xff]
  %v280 = vld [vmem:[%s0 + $0x220] sm:$0xff]
  %v281 = vld [vmem:[%s0 + $0x228] sm:$0xff]
  %v282 = vld [vmem:[%s0 + $0x230] sm:$0xff]
  %v283 = vld [vmem:[%s0 + $0x238] sm:$0xff]
  %v284 = vld [vmem:[%s0 + $0x240] sm:$0xff]
  %v285 = vld [vmem:[%s0 + $0x248] sm:$0xff]
  %v286 = vld [vmem:[%s0 + $0x250] sm:$0xff]
  %v287 = vld [vmem:[%s0 + $0x258] sm:$0xff]
  %v288 = vld [vmem:[%s0 + $0x260] sm:$0xff]
  %v289 = vld [vmem:[%s0 + $0x268] sm:$0xff]
  %v290 = vld [vmem:[%s0 + $0x270] sm:$0xff]
  %v291 = vld [vmem:[%s0 + $0x278] sm:$0xff]
  %v292 = vld [vmem:[%s0 + $0x280] sm:$0xff]
  %v293 = vld [vmem:[%s0 + $0x288] sm:$0xff]
  %v294 = vld [vmem:[%s0 + $0x290] sm:$0xff]
  %v295 = vld [vmem:[%s0 + $0x298] sm:$0xff]
  %v296 = vld [vmem:[%s0 + $0x2a0] sm:$0xff]
  %v297 = vld [vmem:[%s0 + $0x2a8] sm:$0xff]
  %v298 = vld [vmem:[%s0 + $0x2b0] sm:$0xff]
  %v299 = vld [vmem:[%s0 + $0x2b8] sm:$0xff]
  %v300 = vld [vmem:[%s0 + $0x2c0] sm:$0xff]
  %v301 = vld [vmem:[%s0 + $0x2c8] sm:$0xff]
  %v302 = vld [vmem:[%s0 + $0x2d0] sm:$0xff]
  %v303 = vld [vmem:[%s0 + $0x2d8] sm:$0xff]
  %v304 = vld [vmem:[%s0 + $0x2e0] sm:$0xff]
  %v305 = vld [vmem:[%s0 + $0x2e8] sm:$0xff]
  %v306 = vld [vmem:[%s0 + $0x2f0] sm:$0xff]
  %v307 = vld [vmem:[%s0 + $0x2f8] sm:$0xff]
  %v308 = vld [vmem:[%s0 + $0x300] sm:$0xff]
  %v309 = vld [vmem:[%s0 + $0x308] sm:$0xff]
  %v310 = vld [vmem:[%s0 + $0x310] sm:$0xff]
  %v311 = vld [vmem:[%s0 + $0x318] sm:$0xff]
  %v312 = vld [vmem:[%s0 + $0x320] sm:$0xff]
  %v313 = vld [vmem:[%s0 + $0x328] sm:$0xff]
  %v314 = vld [vmem:[%s0 + $0x330] sm:$0xff]
  %v315 = vld [vmem:[%s0 + $0x338] sm:$0xff]
  %v316 = vld [vmem:[%s0 + $0x340] sm:$0xff]
  %v317 = vld [vmem:[%s0 + $0x348] sm:$0xff]
  %v318 = vld [vmem:[%s0 + $0x350] sm:$0xff]
  %v319 = vld [vmem:[%s0 + $0x358] sm:$0xff]
  %v320 = vld [vmem:[%s0 + $0x360] sm:$0xff]
  %v321 = vld [vmem:[%s0 + $0x368] sm:$0xff]
  %v322 = vld [vmem:[%s0 + $0x370] sm:$0xff]
  %v323 = vld [vmem:[%s0 + $0x378] sm:$0xff]
  %v324 = vld [vmem:[%s0 + $0x380] sm:$0xff]
  %v325 = vld [vmem:[%s0 + $0x388] sm:$0xff]
  %v326 = vld [vmem:[%s0 + $0x390] sm:$0xff]
  %v327 = vld [vmem:[%s0 + $0x398] sm:$0xff]
  %v328 = vld [vmem:[%s0 + $0x3a0] sm:$0xff]
  %v329 = vld [vmem:[%s0 + $0x3a8] sm:$0xff]
  %v330 = vld [vmem:[%s0 + $0x3b0] sm:$0xff]
  %v331 = vld [vmem:[%s0 + $0x3b8] sm:$0xff]
  %v332 = vld [vmem:[%s0 + $0x3c0] sm:$0xff]
  %v333 = vld [vmem:[%s0 + $0x3c8] sm:$0xff]
  %v334 = vld [vmem:[%s0 + $0x3d0] sm:$0xff]
  %v335 = vld [vmem:[%s0 + $0x3d8] sm:$0xff]
  %v336 = vld [vmem:[%s0 + $0x3e0] sm:$0xff]
  %v337 = vld [vmem:[%s0 + $0x3e8] sm:$0xff]
  %v338 = vld [vmem:[%s0 + $0x3f0] sm:$0xff]
  %v339 = vld [vmem:[%s0 + $0x3f8] sm:$0xff]
  %v340 = vld [vmem:[%s0 + $0x400] sm:$0xff]
  %v341 = vld [vmem:[%s0 + $0x408] sm:$0xff]
  %v342 = vld [vmem:[%s0 + $0x410] sm:$0xff]
  %v343 = vld [vmem:[%s0 + $0x418] sm:$0xff]
  %v344 = vld [vmem:[%s0 + $0x420] sm:$0xff]
  %v345 = vld [vmem:[%s0 + $0x428] sm:$0xff]
  %v346 = vld [vmem:[%s0 + $0x430] sm:$0xff]
  %v347 = vld [vmem:[%s0 + $0x438] sm:$0xff]
  %v348 = vld [vmem:[%s0 + $0x440] sm:$0xff]
  %v349 = vld [vmem:[%s0 + $0x448] sm:$0xff]
  %v350 = vld [vmem:[%s0 + $0x450] sm:$0xff]
  %v351 = vld [vmem:[%s0 + $0x458] sm:$0xff]
  %v352 = vld [vmem:[%s0 + $0x460] sm:$0xff]
  %v353 = vld [vmem:[%s0 + $0x468] sm:$0xff]
  %v354 = vld [vmem:[%s0 + $0x470] sm:$0xff]
  %v355 = vld [vmem:[%s0 + $0x478] sm:$0xff]
  %v356 = vld [vmem:[%s0 + $0x480] sm:$0xff]
  %v357 = vld [vmem:[%s0 + $0x488] sm:$0xff]
  %v358 = vld [vmem:[%s0 + $0x490] sm:$0xff]
  %v359 = vld [vmem:[%s0 + $0x498] sm:$0xff]
  %v360 = vld [vmem:[%s0 + $0x4a0] sm:$0xff]
  %v361 = vld [vmem:[%s0 + $0x4a8] sm:$0xff]
  %v362 = vld [vmem:[%s0 + $0x4b0] sm:$0xff]
  %v363 = vld [vmem:[%s0 + $0x4b8] sm:$0xff]
  %v364 = vld [vmem:[%s0 + $0x4c0] sm:$0xff]
  %v365 = vld [vmem:[%s0 + $0x4c8] sm:$0xff]
  %v366 = vld [vmem:[%s0 + $0x4d0] sm:$0xff]
  %v367 = vld [vmem:[%s0 + $0x4d8] sm:$0xff]
  %v368 = vld [vmem:[%s0 + $0x4e0] sm:$0xff]
  %v369 = vld [vmem:[%s0 + $0x4e8] sm:$0xff]
  %v370 = vld [vmem:[%s0 + $0x4f0] sm:$0xff]
  %v371 = vld [vmem:[%s0 + $0x4f8] sm:$0xff]
  %v372 = vld [vmem:[%s0 + $0x500] sm:$0xff]
  %v373 = vld [vmem:[%s0 + $0x508] sm:$0xff]
  %v374 = vld [vmem:[%s0 + $0x510] sm:$0xff]
  %v375 = vld [vmem:[%s0 + $0x518] sm:$0xff]
  %v376 = vld [vmem:[%s0 + $0x520] sm:$0xff]
  %v377 = vld [vmem:[%s0 + $0x528] sm:$0xff]
  %v378 = vld [vmem:[%s0 + $0x530] sm:$0xff]
  %v379 = vld [vmem:[%s0 + $0x538] sm:$0xff]
  %v380 = vld [vmem:[%s0 + $0x540] sm:$0xff]
  %v381 = vld [vmem:[%s0 + $0x548] sm:$0xff]
  %v382 = vld [vmem:[%s0 + $0x550] sm:$0xff]
  %v383 = vld [vmem:[%s0 + $0x558] sm:$0xff]
  %v384 = vld [vmem:[%s0 + $0x560] sm:$0xff]
  %v385 = vld [vmem:[%s0 + $0x568] sm:$0xff]
  %v386 = vld [vmem:[%s0 + $0x570] sm:$0xff]
  %v387 = vld [vmem:[%s0 + $0x578] sm:$0xff]
  %v388 = vld [vmem:[%s0 + $0x580] sm:$0xff]
  %v389 = vld [vmem:[%s0 + $0x588] sm:$0xff]
  %v390 = vld [vmem:[%s0 + $0x590] sm:$0xff]
  %v391 = vld [vmem:[%s0 + $0x598] sm:$0xff]
  %v392 = vld [vmem:[%s0 + $0x5a0] sm:$0xff]
  %v393 = vld [vmem:[%s0 + $0x5a8] sm:$0xff]
  %v394 = vld [vmem:[%s0 + $0x5b0] sm:$0xff]
  %v395 = vld [vmem:[%s0 + $0x5b8] sm:$0xff]
  %v396 = vld [vmem:[%s0 + $0x5c0] sm:$0xff]
  %v397 = vld [vmem:[%s0 + $0x5c8] sm:$0xff]
  %v398 = vld [vmem:[%s0 + $0x5d0] sm:$0xff]
  %v399 = vld [vmem:[%s0 + $0x5d8] sm:$0xff]
  %v400 = vld [vmem:[%s0 + $0x5e0] sm:$0xff]
  %v401 = vld [vmem:[%s0 + $0x5e8] sm:$0xff]
  %v402 = vld [vmem:[%s0 + $0x5f0] sm:$0xff]
  %v403 = vld [vmem:[%s0 + $0x5f8] sm:$0xff]
  %v404 = vld [vmem:[%s0 + $0x600] sm:$0xff]
  %v405 = vld [vmem:[%s0 + $0x608] sm:$0xff]
  %v406 = vld [vmem:[%s0 + $0x610] sm:$0xff]
  %v407 = vld [vmem:[%s0 + $0x618] sm:$0xff]
  %v408 = vld [vmem:[%s0 + $0x620] sm:$0xff]
  %v409 = vld [vmem:[%s0 + $0x628] sm:$0xff]
  %v410 = vld [vmem:[%s0 + $0x630] sm:$0xff]
  %v411 = vld [vmem:[%s0 + $0x638] sm:$0xff]
  %v412 = vld [vmem:[%s0 + $0x640] sm:$0xff]
  %v413 = vld [vmem:[%s0 + $0x648] sm:$0xff]
  %v414 = vld [vmem:[%s0 + $0x650] sm:$0xff]
  %v415 = vld [vmem:[%s0 + $0x658] sm:$0xff]
  %v416 = vld [vmem:[%s0 + $0x660] sm:$0xff]
  %v417 = vld [vmem:[%s0 + $0x668] sm:$0xff]
  %v418 = vld [vmem:[%s0 + $0x670] sm:$0xff]
  %v419 = vld [vmem:[%s0 + $0x678] sm:$0xff]
  %v420 = vld [vmem:[%s0 + $0x680] sm:$0xff]
  %v421 = vld [vmem:[%s0 + $0x688] sm:$0xff]
  %v422 = vld [vmem:[%s0 + $0x690] sm:$0xff]
  %v423 = vld [vmem:[%s0 + $0x698] sm:$0xff]
  %v424 = vld [vmem:[%s0 + $0x6a0] sm:$0xff]
  %v425 = vld [vmem:[%s0 + $0x6a8] sm:$0xff]
  %v426 = vld [vmem:[%s0 + $0x6b0] sm:$0xff]
  %v427 = vld [vmem:[%s0 + $0x6b8] sm:$0xff]
  %v428 = vld [vmem:[%s0 + $0x6c0] sm:$0xff]
  %v429 = vld [vmem:[%s0 + $0x6c8] sm:$0xff]
  %v430 = vld [vmem:[%s0 + $0x6d0] sm:$0xff]
  %v431 = vld [vmem:[%s0 + $0x6d8] sm:$0xff]
  %v432 = vld [vmem:[%s0 + $0x6e0] sm:$0xff]
  %v433 = vld [vmem:[%s0 + $0x6e8] sm:$0xff]
  %v434 = vld [vmem:[%s0 + $0x6f0] sm:$0xff]
  %v435 = vld [vmem:[%s0 + $0x6f8] sm:$0xff]
  %v436 = vld [vmem:[%s0 + $0x700] sm:$0xff]
  %v437 = vld [vmem:[%s0 + $0x708] sm:$0xff]
  %v438 = vld [vmem:[%s0 + $0x710] sm:$0xff]
  %v439 = vld [vmem:[%s0 + $0x718] sm:$0xff]
  %v440 = vld [vmem:[%s0 + $0x720] sm:$0xff]
  %v441 = vld [vmem:[%s0 + $0x728] sm:$0xff]
  %v442 = vld [vmem:[%s0 + $0x730] sm:$0xff]
  %v443 = vld [vmem:[%s0 + $0x738] sm:$0xff]
  %v444 = vld [vmem:[%s0 + $0x740] sm:$0xff]
  %v445 = vld [vmem:[%s0 + $0x748] sm:$0xff]
  %v446 = vld [vmem:[%s0 + $0x750] sm:$0xff]
  %v447 = vld [vmem:[%s0 + $0x758] sm:$0xff]
  %v448 = vld [vmem:[%s0 + $0x760] sm:$0xff]
  %v449 = vld [vmem:[%s0 + $0x768] sm:$0xff]
  %v450 = vld [vmem:[%s0 + $0x770] sm:$0xff]
  %v451 = vld [vmem:[%s0 + $0x778] sm:$0xff]
  %v452 = vld [vmem:[%s0 + $0x780] sm:$0xff]
  %v453 = vld [vmem:[%s0 + $0x788] sm:$0xff]
  %v454 = vld [vmem:[%s0 + $0x790] sm:$0xff]
  %v455 = vld [vmem:[%s0 + $0x798] sm:$0xff]
  %v456 = vld [vmem:[%s0 + $0x7a0] sm:$0xff]
  %v457 = vld [vmem:[%s0 + $0x7a8] sm:$0xff]
  %v458 = vld [vmem:[%s0 + $0x7b0] sm:$0xff]
  %v459 = vld [vmem:[%s0 + $0x7b8] sm:$0xff]
  %v460 = vld [vmem:[%s0 + $0x7c0] sm:$0xff]
  %v461 = vld [vmem:[%s0 + $0x7c8] sm:$0xff]
  %v462 = vld [vmem:[%s0 + $0x7d0] sm:$0xff]
  %v463 = vld [vmem:[%s0 + $0x7d8] sm:$0xff]
  %v464 = vld [vmem:[%s0 + $0x7e0] sm:$0xff]
  %v465 = vld [vmem:[%s0 + $0x7e8] sm:$0xff]
  %v466 = vld [vmem:[%s0 + $0x7f0] sm:$0xff]
  %v467 = vld [vmem:[%s0 + $0x7f8] sm:$0xff]
  %468 = vmatprep.subr.mxu0 0.0
  %469 = vmatpush1.msra.mxu0 %v84
  %470 = vmatprep.subr.mxu0 0.0
  %471 = vmatpush1.msra.mxu0 %v85
  %472 = vmatprep.subr.mxu0 0.0
  %473 = vmatpush1.msra.mxu0 %v86
  %474 = vmatprep.subr.mxu0 0.0
  %475 = vmatpush1.msra.mxu0 %v87
  %476 = vmatprep.subr.mxu0 0.0
  %477 = vmatpush1.msra.mxu0 %v88
  %478 = vmatprep.subr.mxu0 0.0
  %479 = vmatpush1.msra.mxu0 %v89
  %480 = vmatprep.subr.mxu0 0.0
  %481 = vmatpush1.msra.mxu0 %v90
  %482 = vmatprep.subr.mxu0 0.0
  %483 = vmatpush1.msra.mxu0 %v91
  %484 = vmatprep.subr.mxu0 0.0
  %485 = vmatpush1.msra.mxu0 %v92
  %486 = vmatprep.subr.mxu0 0.0
  %487 = vmatpush1.msra.mxu0 %v93
  %488 = vmatprep.subr.mxu0 0.0
  %489 = vmatpush1.msra.mxu0 %v94
  %490 = vmatprep.subr.mxu0 0.0
  %491 = vmatpush1.msra.mxu0 %v95
  %492 = vmatprep.subr.mxu0 0.0
  %493 = vmatpush1.msra.mxu0 %v96
  %494 = vmatprep.subr.mxu0 0.0
  %495 = vmatpush1.msra.mxu0 %v97
  %496 = vmatprep.subr.mxu0 0.0
  %497 = vmatpush1.msra.mxu0 %v98
  %498 = vmatprep.subr.mxu0 0.0
  %499 = vmatpush1.msra.mxu0 %v99
  %500 = vmatprep.subr.mxu0 0.0
  %501 = vmatpush1.msra.mxu0 %v100
  %502 = vmatprep.subr.mxu0 0.0
  %503 = vmatpush1.msra.mxu0 %v101
  %504 = vmatprep.subr.mxu0 0.0
  %505 = vmatpush1.msra.mxu0 %v102
  %506 = vmatprep.subr.mxu0 0.0
  %507 = vmatpush1.msra.mxu0 %v103
  %508 = vmatprep.subr.mxu0 0.0
  %509 = vmatpush1.msra.mxu0 %v104
  %510 = vmatprep.subr.mxu0 0.0
  %511 = vmatpush1.msra.mxu0 %v105
  %512 = vmatprep.subr.mxu0 0.0
  %513 = vmatpush1.msra.mxu0 %v106
  %514 = vmatprep.subr.mxu0 0.0
  %515 = vmatpush1.msra.mxu0 %v107
  %516 = vmatprep.subr.mxu0 0.0
  %517 = vmatpush1.msra.mxu0 %v108
  %518 = vmatprep.subr.mxu0 0.0
  %519 = vmatpush1.msra.mxu0 %v109
  %520 = vmatprep.subr.mxu0 0.0
  %521 = vmatpush1.msra.mxu0 %v110
  %522 = vmatprep.subr.mxu0 0.0
  %523 = vmatpush1.msra.mxu0 %v111
  %524 = vmatprep.subr.mxu0 0.0
  %525 = vmatpush1.msra.mxu0 %v112
  %526 = vmatprep.subr.mxu0 0.0
  %527 = vmatpush1.msra.mxu0 %v113
  %528 = vmatprep.subr.mxu0 0.0
  %529 = vmatpush1.msra.mxu0 %v114
  %530 = vmatprep.subr.mxu0 0.0
  %531 = vmatpush1.msra.mxu0 %v115
  %532 = vmatprep.mubr.f32.mxu0 %v213
  %533 = vmatmul.mubr.f32.gmra.mrb[0].mxu0 %v212
  %v534 = vpop.f32.mrb[0].mxu0
  %v535 = vadd.f32 0.0, %v534
  %v536 = vpop.f32.mrb[0].mxu0
  %537 = vmatprep.mubr.f32.mxu0 %v217
  %538 = vmatmul.mubr.f32.gmra.mrb[0].mxu0 %v216
  %v539 = vpop.f32.mrb[0].mxu0
  %v540 = vadd.f32 0.0, %v539
  %v541 = vpop.f32.mrb[0].mxu0
  %542 = vmatprep.mubr.f32.mxu0 %v221
  %543 = vmatmul.mubr.f32.gmra.mrb[0].mxu0 %v220
  %v544 = vpop.f32.mrb[0].mxu0
  %v545 = vadd.f32 0.0, %v544
  %v546 = vpop.f32.mrb[0].mxu0
  %547 = vmatprep.mubr.f32.mxu0 %v225
  %548 = vmatmul.mubr.f32.gmra.mrb[0].mxu0 %v224
  %v549 = vpop.f32.mrb[0].mxu0
  %v550 = vadd.f32 0.0, %v549
  %v551 = vpop.f32.mrb[0].mxu0
  %552 = vmatprep.mubr.f32.mxu0 %v229
  %553 = vmatmul.mubr.f32.gmra.mrb[0].mxu0 %v228
  %v554 = vpop.f32.mrb[0].mxu0
  %v555 = vadd.f32 0.0, %v554
  %v556 = vpop.f32.mrb[0].mxu0
  %557 = vmatprep.mubr.f32.mxu0 %v233
  %558 = vmatmul.mubr.f32.gmra.mrb[0].mxu0 %v232
  %v559 = vpop.f32.mrb[0].mxu0
  %v560 = vadd.f32 0.0, %v559
  %v561 = vpop.f32.mrb[0].mxu0
  %562 = vmatprep.mubr.f32.mxu0 %v237
  %563 = vmatmul.mubr.f32.gmra.mrb[0].mxu0 %v236
  %v564 = vpop.f32.mrb[0].mxu0
  %v565 = vadd.f32 0.0, %v564
  %v566 = vpop.f32.mrb[0].mxu0
  %567 = vmatprep.mubr.f32.mxu0 %v241
  %568 = vmatmul.mubr.f32.gmra.mrb[0].mxu0 %v240
  %v569 = vpop.f32.mrb[0].mxu0
  %v570 = vadd.f32 0.0, %v569
  %v571 = vpop.f32.mrb[0].mxu0
  %572 = vmatprep.mubr.f32.mxu0 %v245
  %573 = vmatmul.mubr.f32.gmra.mrb[0].mxu0 %v244
  %v574 = vpop.f32.mrb[0].mxu0
  %v575 = vadd.f32 0.0, %v574
  %v576 = vpop.f32.mrb[0].mxu0
  %577 = vmatprep.mubr.f32.mxu0 %v249
  %578 = vmatmul.mubr.f32.gmra.mrb[0].mxu0 %v248
  %v579 = vpop.f32.mrb[0].mxu0
  %v580 = vadd.f32 0.0, %v579
  %v581 = vpop.f32.mrb[0].mxu0
  %582 = vmatprep.mubr.f32.mxu0 %v253
  %583 = vmatmul.mubr.f32.gmra.mrb[0].mxu0 %v252
  %v584 = vpop.f32.mrb[0].mxu0
  %v585 = vadd.f32 0.0, %v584
  %v586 = vpop.f32.mrb[0].mxu0
  %587 = vmatprep.mubr.f32.mxu0 %v257
  %588 = vmatmul.mubr.f32.gmra.mrb[0].mxu0 %v256
  %v589 = vpop.f32.mrb[0].mxu0
  %v590 = vadd.f32 0.0, %v589
  %v591 = vpop.f32.mrb[0].mxu0
  %592 = vmatprep.mubr.f32.mxu0 %v261
  %593 = vmatmul.mubr.f32.gmra.mrb[0].mxu0 %v260
  %v594 = vpop.f32.mrb[0].mxu0
  %v595 = vadd.f32 0.0, %v594
  %v596 = vpop.f32.mrb[0].mxu0
  %597 = vmatprep.mubr.f32.mxu0 %v265
  %598 = vmatmul.mubr.f32.gmra.mrb[0].mxu0 %v264
  %v599 = vpop.f32.mrb[0].mxu0
  %v600 = vadd.f32 0.0, %v599
  %v601 = vpop.f32.mrb[0].mxu0
  %602 = vmatprep.mubr.f32.mxu0 %v269
  %603 = vmatmul.mubr.f32.gmra.mrb[0].mxu0 %v268
  %v604 = vpop.f32.mrb[0].mxu0
  %v605 = vadd.f32 0.0, %v604
  %v606 = vpop.f32.mrb[0].mxu0
  %607 = vmatprep.mubr.f32.mxu0 %v273
  %608 = vmatmul.mubr.f32.gmra.mrb[0].mxu0 %v272
  %v609 = vpop.f32.mrb[0].mxu0
  %v610 = vadd.f32 0.0, %v609
  %v611 = vpop.f32.mrb[0].mxu0
  %612 = vmatprep.mubr.f32.mxu0 %v277
  %613 = vmatmul.mubr.f32.gmra.mrb[0].mxu0 %v276
  %v614 = vpop.f32.mrb[0].mxu0
  %v615 = vadd.f32 0.0, %v614
  %v616 = vpop.f32.mrb[0].mxu0
  %617 = vmatprep.mubr.f32.mxu0 %v281
  %618 = vmatmul.mubr.f32.gmra.mrb[0].mxu0 %v280
  %v619 = vpop.f32.mrb[0].mxu0
  %v620 = vadd.f32 0.0, %v619
  %v621 = vpop.f32.mrb[0].mxu0
  %622 = vmatprep.mubr.f32.mxu0 %v285
  %623 = vmatmul.mubr.f32.gmra.mrb[0].mxu0 %v284
  %v624 = vpop.f32.mrb[0].mxu0
  %v625 = vadd.f32 0.0, %v624
  %v626 = vpop.f32.mrb[0].mxu0
  %627 = vmatprep.mubr.f32.mxu0 %v289
  %628 = vmatmul.mubr.f32.gmra.mrb[0].mxu0 %v288
  %v629 = vpop.f32.mrb[0].mxu0
  %v630 = vadd.f32 0.0, %v629
  %v631 = vpop.f32.mrb[0].mxu0
  %632 = vmatprep.mubr.f32.mxu0 %v293
  %633 = vmatmul.mubr.f32.gmra.mrb[0].mxu0 %v292
  %v634 = vpop.f32.mrb[0].mxu0
  %v635 = vadd.f32 0.0, %v634
  %v636 = vpop.f32.mrb[0].mxu0
  %637 = vmatprep.mubr.f32.mxu0 %v297
  %638 = vmatmul.mubr.f32.gmra.mrb[0].mxu0 %v296
  %v639 = vpop.f32.mrb[0].mxu0
  %v640 = vadd.f32 0.0, %v639
  %v641 = vpop.f32.mrb[0].mxu0
  %642 = vmatprep.mubr.f32.mxu0 %v301
  %643 = vmatmul.mubr.f32.gmra.mrb[0].mxu0 %v300
  %v644 = vpop.f32.mrb[0].mxu0
  %v645 = vadd.f32 0.0, %v644
  %v646 = vpop.f32.mrb[0].mxu0
  %647 = vmatprep.mubr.f32.mxu0 %v305
  %648 = vmatmul.mubr.f32.gmra.mrb[0].mxu0 %v304
  %v649 = vpop.f32.mrb[0].mxu0
  %v650 = vadd.f32 0.0, %v649
  %v651 = vpop.f32.mrb[0].mxu0
  %652 = vmatprep.mubr.f32.mxu0 %v309
  %653 = vmatmul.mubr.f32.gmra.mrb[0].mxu0 %v308
  %v654 = vpop.f32.mrb[0].mxu0
  %v655 = vadd.f32 0.0, %v654
  %v656 = vpop.f32.mrb[0].mxu0
  %657 = vmatprep.mubr.f32.mxu0 %v313
  %658 = vmatmul.mubr.f32.gmra.mrb[0].mxu0 %v312
  %v659 = vpop.f32.mrb[0].mxu0
  %v660 = vadd.f32 0.0, %v659
  %v661 = vpop.f32.mrb[0].mxu0
  %662 = vmatprep.mubr.f32.mxu0 %v317
  %663 = vmatmul.mubr.f32.gmra.mrb[0].mxu0 %v316
  %v664 = vpop.f32.mrb[0].mxu0
  %v665 = vadd.f32 0.0, %v664
  %v666 = vpop.f32.mrb[0].mxu0
  %667 = vmatprep.mubr.f32.mxu0 %v321
  %668 = vmatmul.mubr.f32.gmra.mrb[0].mxu0 %v320
  %v669 = vpop.f32.mrb[0].mxu0
  %v670 = vadd.f32 0.0, %v669
  %v671 = vpop.f32.mrb[0].mxu0
  %672 = vmatprep.mubr.f32.mxu0 %v325
  %673 = vmatmul.mubr.f32.gmra.mrb[0].mxu0 %v324
  %v674 = vpop.f32.mrb[0].mxu0
  %v675 = vadd.f32 0.0, %v674
  %v676 = vpop.f32.mrb[0].mxu0
  %677 = vmatprep.mubr.f32.mxu0 %v329
  %678 = vmatmul.mubr.f32.gmra.mrb[0].mxu0 %v328
  %v679 = vpop.f32.mrb[0].mxu0
  %v680 = vadd.f32 0.0, %v679
  %v681 = vpop.f32.mrb[0].mxu0
  %682 = vmatprep.mubr.f32.mxu0 %v333
  %683 = vmatmul.mubr.f32.gmra.mrb[0].mxu0 %v332
  %v684 = vpop.f32.mrb[0].mxu0
  %v685 = vadd.f32 0.0, %v684
  %v686 = vpop.f32.mrb[0].mxu0
  %687 = vmatprep.mubr.f32.mxu0 %v337
  %688 = vmatmul.mubr.f32.gmra.mrb[0].mxu0 %v336
  %v689 = vpop.f32.mrb[0].mxu0
  %v690 = vadd.f32 0.0, %v689
  %v691 = vpop.f32.mrb[0].mxu0
  %692 = vmatprep.mubr.f32.mxu0 %v341
  %693 = vmatmul.mubr.f32.gmra.mrb[0].mxu0 %v340
  %v694 = vpop.f32.mrb[0].mxu0
  %v695 = vadd.f32 0.0, %v694
  %v696 = vpop.f32.mrb[0].mxu0
  %697 = vmatprep.mubr.f32.mxu0 %v345
  %698 = vmatmul.mubr.f32.gmra.mrb[0].mxu0 %v344
  %v699 = vpop.f32.mrb[0].mxu0
  %v700 = vadd.f32 0.0, %v699
  %v701 = vpop.f32.mrb[0].mxu0
  %702 = vmatprep.mubr.f32.mxu0 %v349
  %703 = vmatmul.mubr.f32.gmra.mrb[0].mxu0 %v348
  %v704 = vpop.f32.mrb[0].mxu0
  %v705 = vadd.f32 0.0, %v704
  %v706 = vpop.f32.mrb[0].mxu0
  %707 = vmatprep.mubr.f32.mxu0 %v353
  %708 = vmatmul.mubr.f32.gmra.mrb[0].mxu0 %v352
  %v709 = vpop.f32.mrb[0].mxu0
  %v710 = vadd.f32 0.0, %v709
  %v711 = vpop.f32.mrb[0].mxu0
  %712 = vmatprep.mubr.f32.mxu0 %v357
  %713 = vmatmul.mubr.f32.gmra.mrb[0].mxu0 %v356
  %v714 = vpop.f32.mrb[0].mxu0
  %v715 = vadd.f32 0.0, %v714
  %v716 = vpop.f32.mrb[0].mxu0
  %717 = vmatprep.mubr.f32.mxu0 %v361
  %718 = vmatmul.mubr.f32.gmra.mrb[0].mxu0 %v360
  %v719 = vpop.f32.mrb[0].mxu0
  %v720 = vadd.f32 0.0, %v719
  %v721 = vpop.f32.mrb[0].mxu0
  %722 = vmatprep.mubr.f32.mxu0 %v365
  %723 = vmatmul.mubr.f32.gmra.mrb[0].mxu0 %v364
  %v724 = vpop.f32.mrb[0].mxu0
  %v725 = vadd.f32 0.0, %v724
  %v726 = vpop.f32.mrb[0].mxu0
  %727 = vmatprep.mubr.f32.mxu0 %v369
  %728 = vmatmul.mubr.f32.gmra.mrb[0].mxu0 %v368
  %v729 = vpop.f32.mrb[0].mxu0
  %v730 = vadd.f32 0.0, %v729
  %v731 = vpop.f32.mrb[0].mxu0
  %732 = vmatprep.mubr.f32.mxu0 %v373
  %733 = vmatmul.mubr.f32.gmra.mrb[0].mxu0 %v372
  %v734 = vpop.f32.mrb[0].mxu0
  %v735 = vadd.f32 0.0, %v734
  %v736 = vpop.f32.mrb[0].mxu0
  %737 = vmatprep.mubr.f32.mxu0 %v377
  %738 = vmatmul.mubr.f32.gmra.mrb[0].mxu0 %v376
  %v739 = vpop.f32.mrb[0].mxu0
  %v740 = vadd.f32 0.0, %v739
  %v741 = vpop.f32.mrb[0].mxu0
  %742 = vmatprep.mubr.f32.mxu0 %v381
  %743 = vmatmul.mubr.f32.gmra.mrb[0].mxu0 %v380
  %v744 = vpop.f32.mrb[0].mxu0
  %v745 = vadd.f32 0.0, %v744
  %v746 = vpop.f32.mrb[0].mxu0
  %747 = vmatprep.mubr.f32.mxu0 %v385
  %748 = vmatmul.mubr.f32.gmra.mrb[0].mxu0 %v384
  %v749 = vpop.f32.mrb[0].mxu0
  %v750 = vadd.f32 0.0, %v749
  %v751 = vpop.f32.mrb[0].mxu0
  %752 = vmatprep.mubr.f32.mxu0 %v389
  %753 = vmatmul.mubr.f32.gmra.mrb[0].mxu0 %v388
  %v754 = vpop.f32.mrb[0].mxu0
  %v755 = vadd.f32 0.0, %v754
  %v756 = vpop.f32.mrb[0].mxu0
  %757 = vmatprep.mubr.f32.mxu0 %v393
  %758 = vmatmul.mubr.f32.gmra.mrb[0].mxu0 %v392
  %v759 = vpop.f32.mrb[0].mxu0
  %v760 = vadd.f32 0.0, %v759
  %v761 = vpop.f32.mrb[0].mxu0
  %762 = vmatprep.mubr.f32.mxu0 %v397
  %763 = vmatmul.mubr.f32.gmra.mrb[0].mxu0 %v396
  %v764 = vpop.f32.mrb[0].mxu0
  %v765 = vadd.f32 0.0, %v764
  %v766 = vpop.f32.mrb[0].mxu0
  %767 = vmatprep.mubr.f32.mxu0 %v401
  %768 = vmatmul.mubr.f32.gmra.mrb[0].mxu0 %v400
  %v769 = vpop.f32.mrb[0].mxu0
  %v770 = vadd.f32 0.0, %v769
  %v771 = vpop.f32.mrb[0].mxu0
  %772 = vmatprep.mubr.f32.mxu0 %v405
  %773 = vmatmul.mubr.f32.gmra.mrb[0].mxu0 %v404
  %v774 = vpop.f32.mrb[0].mxu0
  %v775 = vadd.f32 0.0, %v774
  %v776 = vpop.f32.mrb[0].mxu0
  %777 = vmatprep.mubr.f32.mxu0 %v409
  %778 = vmatmul.mubr.f32.gmra.mrb[0].mxu0 %v408
  %v779 = vpop.f32.mrb[0].mxu0
  %v780 = vadd.f32 0.0, %v779
  %v781 = vpop.f32.mrb[0].mxu0
  %782 = vmatprep.mubr.f32.mxu0 %v413
  %783 = vmatmul.mubr.f32.gmra.mrb[0].mxu0 %v412
  %v784 = vpop.f32.mrb[0].mxu0
  %v785 = vadd.f32 0.0, %v784
  %v786 = vpop.f32.mrb[0].mxu0
  %787 = vmatprep.mubr.f32.mxu0 %v417
  %788 = vmatmul.mubr.f32.gmra.mrb[0].mxu0 %v416
  %v789 = vpop.f32.mrb[0].mxu0
  %v790 = vadd.f32 0.0, %v789
  %v791 = vpop.f32.mrb[0].mxu0
  %792 = vmatprep.mubr.f32.mxu0 %v421
  %793 = vmatmul.mubr.f32.gmra.mrb[0].mxu0 %v420
  %v794 = vpop.f32.mrb[0].mxu0
  %v795 = vadd.f32 0.0, %v794
  %v796 = vpop.f32.mrb[0].mxu0
  %797 = vmatprep.mubr.f32.mxu0 %v425
  %798 = vmatmul.mubr.f32.gmra.mrb[0].mxu0 %v424
  %v799 = vpop.f32.mrb[0].mxu0
  %v800 = vadd.f32 0.0, %v799
  %v801 = vpop.f32.mrb[0].mxu0
  %802 = vmatprep.mubr.f32.mxu0 %v429
  %803 = vmatmul.mubr.f32.gmra.mrb[0].mxu0 %v428
  %v804 = vpop.f32.mrb[0].mxu0
  %v805 = vadd.f32 0.0, %v804
  %v806 = vpop.f32.mrb[0].mxu0
  %807 = vmatprep.mubr.f32.mxu0 %v433
  %808 = vmatmul.mubr.f32.gmra.mrb[0].mxu0 %v432
  %v809 = vpop.f32.mrb[0].mxu0
  %v810 = vadd.f32 0.0, %v809
  %v811 = vpop.f32.mrb[0].mxu0
  %812 = vmatprep.mubr.f32.mxu0 %v437
  %813 = vmatmul.mubr.f32.gmra.mrb[0].mxu0 %v436
  %v814 = vpop.f32.mrb[0].mxu0
  %v815 = vadd.f32 0.0, %v814
  %v816 = vpop.f32.mrb[0].mxu0
  %817 = vmatprep.mubr.f32.mxu0 %v441
  %818 = vmatmul.mubr.f32.gmra.mrb[0].mxu0 %v440
  %v819 = vpop.f32.mrb[0].mxu0
  %v820 = vadd.f32 0.0, %v819
  %v821 = vpop.f32.mrb[0].mxu0
  %822 = vmatprep.mubr.f32.mxu0 %v445
  %823 = vmatmul.mubr.f32.gmra.mrb[0].mxu0 %v444
  %v824 = vpop.f32.mrb[0].mxu0
  %v825 = vadd.f32 0.0, %v824
  %v826 = vpop.f32.mrb[0].mxu0
  %827 = vmatprep.mubr.f32.mxu0 %v449
  %828 = vmatmul.mubr.f32.gmra.mrb[0].mxu0 %v448
  %v829 = vpop.f32.mrb[0].mxu0
  %v830 = vadd.f32 0.0, %v829
  %v831 = vpop.f32.mrb[0].mxu0
  %832 = vmatprep.mubr.f32.mxu0 %v453
  %833 = vmatmul.mubr.f32.gmra.mrb[0].mxu0 %v452
  %v834 = vpop.f32.mrb[0].mxu0
  %v835 = vadd.f32 0.0, %v834
  %v836 = vpop.f32.mrb[0].mxu0
  %837 = vmatprep.mubr.f32.mxu0 %v457
  %838 = vmatmul.mubr.f32.gmra.mrb[0].mxu0 %v456
  %v839 = vpop.f32.mrb[0].mxu0
  %v840 = vadd.f32 0.0, %v839
  %v841 = vpop.f32.mrb[0].mxu0
  %842 = vmatprep.mubr.f32.mxu0 %v461
  %843 = vmatmul.mubr.f32.gmra.mrb[0].mxu0 %v460
  %v844 = vpop.f32.mrb[0].mxu0
  %v845 = vadd.f32 0.0, %v844
  %v846 = vpop.f32.mrb[0].mxu0
  %847 = vmatprep.mubr.f32.mxu0 %v465
  %848 = vmatmul.mubr.f32.gmra.mrb[0].mxu0 %v464
  %v849 = vpop.f32.mrb[0].mxu0
  %v850 = vadd.f32 0.0, %v849
  %v851 = vpop.f32.mrb[0].mxu0
  %852 = vdwg.mxu0
  %853 = vmatprep.subr.mxu0 0.0
  %854 = vmatpush1.msra.mxu0 %v116
  %855 = vmatprep.subr.mxu0 0.0
  %856 = vmatpush1.msra.mxu0 %v117
  %857 = vmatprep.subr.mxu0 0.0
  %858 = vmatpush1.msra.mxu0 %v118
  %859 = vmatprep.subr.mxu0 0.0
  %860 = vmatpush1.msra.mxu0 %v119
  %861 = vmatprep.subr.mxu0 0.0
  %862 = vmatpush1.msra.mxu0 %v120
  %863 = vmatprep.subr.mxu0 0.0
  %864 = vmatpush1.msra.mxu0 %v121
  %865 = vmatprep.subr.mxu0 0.0
  %866 = vmatpush1.msra.mxu0 %v122
  %867 = vmatprep.subr.mxu0 0.0
  %868 = vmatpush1.msra.mxu0 %v123
  %869 = vmatprep.subr.mxu0 0.0
  %870 = vmatpush1.msra.mxu0 %v124
  %871 = vmatprep.subr.mxu0 0.0
  %872 = vmatpush1.msra.mxu0 %v125
  %873 = vmatprep.subr.mxu0 0.0
  %874 = vmatpush1.msra.mxu0 %v126
  %875 = vmatprep.subr.mxu0 0.0
  %876 = vmatpush1.msra.mxu0 %v127
  %877 = vmatprep.subr.mxu0 0.0
  %878 = vmatpush1.msra.mxu0 %v128
  %879 = vmatprep.subr.mxu0 0.0
  %880 = vmatpush1.msra.mxu0 %v129
  %881 = vmatprep.subr.mxu0 0.0
  %882 = vmatpush1.msra.mxu0 %v130
  %883 = vmatprep.subr.mxu0 0.0
  %884 = vmatpush1.msra.mxu0 %v131
  %885 = vmatprep.subr.mxu0 0.0
  %886 = vmatpush1.msra.mxu0 %v132
  %887 = vmatprep.subr.mxu0 0.0
  %888 = vmatpush1.msra.mxu0 %v133
  %889 = vmatprep.subr.mxu0 0.0
  %890 = vmatpush1.msra.mxu0 %v134
  %891 = vmatprep.subr.mxu0 0.0
  %892 = vmatpush1.msra.mxu0 %v135
  %893 = vmatprep.subr.mxu0 0.0
  %894 = vmatpush1.msra.mxu0 %v136
  %895 = vmatprep.subr.mxu0 0.0
  %896 = vmatpush1.msra.mxu0 %v137
  %897 = vmatprep.subr.mxu0 0.0
  %898 = vmatpush1.msra.mxu0 %v138
  %899 = vmatprep.subr.mxu0 0.0
  %900 = vmatpush1.msra.mxu0 %v139
  %901 = vmatprep.subr.mxu0 0.0
  %902 = vmatpush1.msra.mxu0 %v140
  %903 = vmatprep.subr.mxu0 0.0
  %904 = vmatpush1.msra.mxu0 %v141
  %905 = vmatprep.subr.mxu0 0.0
  %906 = vmatpush1.msra.mxu0 %v142
  %907 = vmatprep.subr.mxu0 0.0
  %908 = vmatpush1.msra.mxu0 %v143
  %909 = vmatprep.subr.mxu0 0.0
  %910 = vmatpush1.msra.mxu0 %v144
  %911 = vmatprep.subr.mxu0 0.0
  %912 = vmatpush1.msra.mxu0 %v145
  %913 = vmatprep.subr.mxu0 0.0
  %914 = vmatpush1.msra.mxu0 %v146
  %915 = vmatprep.subr.mxu0 0.0
  %916 = vmatpush1.msra.mxu0 %v147
  %917 = vmatprep.mubr.f32.mxu0 %v215
  %918 = vmatmul.mubr.f32.gmra.mrb[0].mxu0 %v214
  %v919 = vpop.f32.mrb[0].mxu0
  %v920 = vadd.f32 %v535, %v919
  %v921 = vpop.f32.mrb[0].mxu0
  %922 = vmatprep.mubr.f32.mxu0 %v219
  %923 = vmatmul.mubr.f32.gmra.mrb[0].mxu0 %v218
  %v924 = vpop.f32.mrb[0].mxu0
  %v925 = vadd.f32 %v540, %v924
  %v926 = vpop.f32.mrb[0].mxu0
  %927 = vmatprep.mubr.f32.mxu0 %v223
  %928 = vmatmul.mubr.f32.gmra.mrb[0].mxu0 %v222
  %v929 = vpop.f32.mrb[0].mxu0
  %v930 = vadd.f32 %v545, %v929
  %v931 = vpop.f32.mrb[0].mxu0
  %932 = vmatprep.mubr.f32.mxu0 %v227
  %933 = vmatmul.mubr.f32.gmra.mrb[0].mxu0 %v226
  %v934 = vpop.f32.mrb[0].mxu0
  %v935 = vadd.f32 %v550, %v934
  %v936 = vpop.f32.mrb[0].mxu0
  %937 = vmatprep.mubr.f32.mxu0 %v231
  %938 = vmatmul.mubr.f32.gmra.mrb[0].mxu0 %v230
  %v939 = vpop.f32.mrb[0].mxu0
  %v940 = vadd.f32 %v555, %v939
  %v941 = vpop.f32.mrb[0].mxu0
  %942 = vmatprep.mubr.f32.mxu0 %v235
  %943 = vmatmul.mubr.f32.gmra.mrb[0].mxu0 %v234
  %v944 = vpop.f32.mrb[0].mxu0
  %v945 = vadd.f32 %v560, %v944
  %v946 = vpop.f32.mrb[0].mxu0
  %947 = vmatprep.mubr.f32.mxu0 %v239
  %948 = vmatmul.mubr.f32.gmra.mrb[0].mxu0 %v238
  %v949 = vpop.f32.mrb[0].mxu0
  %v950 = vadd.f32 %v565, %v949
  %v951 = vpop.f32.mrb[0].mxu0
  %952 = vmatprep.mubr.f32.mxu0 %v243
  %953 = vmatmul.mubr.f32.gmra.mrb[0].mxu0 %v242
  %v954 = vpop.f32.mrb[0].mxu0
  %v955 = vadd.f32 %v570, %v954
  %v956 = vpop.f32.mrb[0].mxu0
  %957 = vmatprep.mubr.f32.mxu0 %v247
  %958 = vmatmul.mubr.f32.gmra.mrb[0].mxu0 %v246
  %v959 = vpop.f32.mrb[0].mxu0
  %v960 = vadd.f32 %v575, %v959
  %v961 = vpop.f32.mrb[0].mxu0
  %962 = vmatprep.mubr.f32.mxu0 %v251
  %963 = vmatmul.mubr.f32.gmra.mrb[0].mxu0 %v250
  %v964 = vpop.f32.mrb[0].mxu0
  %v965 = vadd.f32 %v580, %v964
  %v966 = vpop.f32.mrb[0].mxu0
  %967 = vmatprep.mubr.f32.mxu0 %v255
  %968 = vmatmul.mubr.f32.gmra.mrb[0].mxu0 %v254
  %v969 = vpop.f32.mrb[0].mxu0
  %v970 = vadd.f32 %v585, %v969
  %v971 = vpop.f32.mrb[0].mxu0
  %972 = vmatprep.mubr.f32.mxu0 %v259
  %973 = vmatmul.mubr.f32.gmra.mrb[0].mxu0 %v258
  %v974 = vpop.f32.mrb[0].mxu0
  %v975 = vadd.f32 %v590, %v974
  %v976 = vpop.f32.mrb[0].mxu0
  %977 = vmatprep.mubr.f32.mxu0 %v263
  %978 = vmatmul.mubr.f32.gmra.mrb[0].mxu0 %v262
  %v979 = vpop.f32.mrb[0].mxu0
  %v980 = vadd.f32 %v595, %v979
  %v981 = vpop.f32.mrb[0].mxu0
  %982 = vmatprep.mubr.f32.mxu0 %v267
  %983 = vmatmul.mubr.f32.gmra.mrb[0].mxu0 %v266
  %v984 = vpop.f32.mrb[0].mxu0
  %v985 = vadd.f32 %v600, %v984
  %v986 = vpop.f32.mrb[0].mxu0
  %987 = vmatprep.mubr.f32.mxu0 %v271
  %988 = vmatmul.mubr.f32.gmra.mrb[0].mxu0 %v270
  %v989 = vpop.f32.mrb[0].mxu0
  %v990 = vadd.f32 %v605, %v989
  %v991 = vpop.f32.mrb[0].mxu0
  %992 = vmatprep.mubr.f32.mxu0 %v275
  %993 = vmatmul.mubr.f32.gmra.mrb[0].mxu0 %v274
  %v994 = vpop.f32.mrb[0].mxu0
  %v995 = vadd.f32 %v610, %v994
  %v996 = vpop.f32.mrb[0].mxu0
  %997 = vmatprep.mubr.f32.mxu0 %v279
  %998 = vmatmul.mubr.f32.gmra.mrb[0].mxu0 %v278
  %v999 = vpop.f32.mrb[0].mxu0
  %v1000 = vadd.f32 %v615, %v999
  %v1001 = vpop.f32.mrb[0].mxu0
  %1002 = vmatprep.mubr.f32.mxu0 %v283
  %1003 = vmatmul.mubr.f32.gmra.mrb[0].mxu0 %v282
  %v1004 = vpop.f32.mrb[0].mxu0
  %v1005 = vadd.f32 %v620, %v1004
  %v1006 = vpop.f32.mrb[0].mxu0
  %1007 = vmatprep.mubr.f32.mxu0 %v287
  %1008 = vmatmul.mubr.f32.gmra.mrb[0].mxu0 %v286
  %v1009 = vpop.f32.mrb[0].mxu0
  %v1010 = vadd.f32 %v625, %v1009
  %v1011 = vpop.f32.mrb[0].mxu0
  %1012 = vmatprep.mubr.f32.mxu0 %v291
  %1013 = vmatmul.mubr.f32.gmra.mrb[0].mxu0 %v290
  %v1014 = vpop.f32.mrb[0].mxu0
  %v1015 = vadd.f32 %v630, %v1014
  %v1016 = vpop.f32.mrb[0].mxu0
  %1017 = vmatprep.mubr.f32.mxu0 %v295
  %1018 = vmatmul.mubr.f32.gmra.mrb[0].mxu0 %v294
  %v1019 = vpop.f32.mrb[0].mxu0
  %v1020 = vadd.f32 %v635, %v1019
  %v1021 = vpop.f32.mrb[0].mxu0
  %1022 = vmatprep.mubr.f32.mxu0 %v299
  %1023 = vmatmul.mubr.f32.gmra.mrb[0].mxu0 %v298
  %v1024 = vpop.f32.mrb[0].mxu0
  %v1025 = vadd.f32 %v640, %v1024
  %v1026 = vpop.f32.mrb[0].mxu0
  %1027 = vmatprep.mubr.f32.mxu0 %v303
  %1028 = vmatmul.mubr.f32.gmra.mrb[0].mxu0 %v302
  %v1029 = vpop.f32.mrb[0].mxu0
  %v1030 = vadd.f32 %v645, %v1029
  %v1031 = vpop.f32.mrb[0].mxu0
  %1032 = vmatprep.mubr.f32.mxu0 %v307
  %1033 = vmatmul.mubr.f32.gmra.mrb[0].mxu0 %v306
  %v1034 = vpop.f32.mrb[0].mxu0
  %v1035 = vadd.f32 %v650, %v1034
  %v1036 = vpop.f32.mrb[0].mxu0
  %1037 = vmatprep.mubr.f32.mxu0 %v311
  %1038 = vmatmul.mubr.f32.gmra.mrb[0].mxu0 %v310
  %v1039 = vpop.f32.mrb[0].mxu0
  %v1040 = vadd.f32 %v655, %v1039
  %v1041 = vpop.f32.mrb[0].mxu0
  %1042 = vmatprep.mubr.f32.mxu0 %v315
  %1043 = vmatmul.mubr.f32.gmra.mrb[0].mxu0 %v314
  %v1044 = vpop.f32.mrb[0].mxu0
  %v1045 = vadd.f32 %v660, %v1044
  %v1046 = vpop.f32.mrb[0].mxu0
  %1047 = vmatprep.mubr.f32.mxu0 %v319
  %1048 = vmatmul.mubr.f32.gmra.mrb[0].mxu0 %v318
  %v1049 = vpop.f32.mrb[0].mxu0
  %v1050 = vadd.f32 %v665, %v1049
  %v1051 = vpop.f32.mrb[0].mxu0
  %1052 = vmatprep.mubr.f32.mxu0 %v323
  %1053 = vmatmul.mubr.f32.gmra.mrb[0].mxu0 %v322
  %v1054 = vpop.f32.mrb[0].mxu0
  %v1055 = vadd.f32 %v670, %v1054
  %v1056 = vpop.f32.mrb[0].mxu0
  %1057 = vmatprep.mubr.f32.mxu0 %v327
  %1058 = vmatmul.mubr.f32.gmra.mrb[0].mxu0 %v326
  %v1059 = vpop.f32.mrb[0].mxu0
  %v1060 = vadd.f32 %v675, %v1059
  %v1061 = vpop.f32.mrb[0].mxu0
  %1062 = vmatprep.mubr.f32.mxu0 %v331
  %1063 = vmatmul.mubr.f32.gmra.mrb[0].mxu0 %v330
  %v1064 = vpop.f32.mrb[0].mxu0
  %v1065 = vadd.f32 %v680, %v1064
  %v1066 = vpop.f32.mrb[0].mxu0
  %1067 = vmatprep.mubr.f32.mxu0 %v335
  %1068 = vmatmul.mubr.f32.gmra.mrb[0].mxu0 %v334
  %v1069 = vpop.f32.mrb[0].mxu0
  %v1070 = vadd.f32 %v685, %v1069
  %v1071 = vpop.f32.mrb[0].mxu0
  %1072 = vmatprep.mubr.f32.mxu0 %v339
  %1073 = vmatmul.mubr.f32.gmra.mrb[0].mxu0 %v338
  %v1074 = vpop.f32.mrb[0].mxu0
  %v1075 = vadd.f32 %v690, %v1074
  %v1076 = vpop.f32.mrb[0].mxu0
  %1077 = vmatprep.mubr.f32.mxu0 %v343
  %1078 = vmatmul.mubr.f32.gmra.mrb[0].mxu0 %v342
  %v1079 = vpop.f32.mrb[0].mxu0
  %v1080 = vadd.f32 %v695, %v1079
  %v1081 = vpop.f32.mrb[0].mxu0
  %1082 = vmatprep.mubr.f32.mxu0 %v347
  %1083 = vmatmul.mubr.f32.gmra.mrb[0].mxu0 %v346
  %v1084 = vpop.f32.mrb[0].mxu0
  %v1085 = vadd.f32 %v700, %v1084
  %v1086 = vpop.f32.mrb[0].mxu0
  %1087 = vmatprep.mubr.f32.mxu0 %v351
  %1088 = vmatmul.mubr.f32.gmra.mrb[0].mxu0 %v350
  %v1089 = vpop.f32.mrb[0].mxu0
  %v1090 = vadd.f32 %v705, %v1089
  %v1091 = vpop.f32.mrb[0].mxu0
  %1092 = vmatprep.mubr.f32.mxu0 %v355
  %1093 = vmatmul.mubr.f32.gmra.mrb[0].mxu0 %v354
  %v1094 = vpop.f32.mrb[0].mxu0
  %v1095 = vadd.f32 %v710, %v1094
  %v1096 = vpop.f32.mrb[0].mxu0
  %1097 = vmatprep.mubr.f32.mxu0 %v359
  %1098 = vmatmul.mubr.f32.gmra.mrb[0].mxu0 %v358
  %v1099 = vpop.f32.mrb[0].mxu0
  %v1100 = vadd.f32 %v715, %v1099
  %v1101 = vpop.f32.mrb[0].mxu0
  %1102 = vmatprep.mubr.f32.mxu0 %v363
  %1103 = vmatmul.mubr.f32.gmra.mrb[0].mxu0 %v362
  %v1104 = vpop.f32.mrb[0].mxu0
  %v1105 = vadd.f32 %v720, %v1104
  %v1106 = vpop.f32.mrb[0].mxu0
  %1107 = vmatprep.mubr.f32.mxu0 %v367
  %1108 = vmatmul.mubr.f32.gmra.mrb[0].mxu0 %v366
  %v1109 = vpop.f32.mrb[0].mxu0
  %v1110 = vadd.f32 %v725, %v1109
  %v1111 = vpop.f32.mrb[0].mxu0
  %1112 = vmatprep.mubr.f32.mxu0 %v371
  %1113 = vmatmul.mubr.f32.gmra.mrb[0].mxu0 %v370
  %v1114 = vpop.f32.mrb[0].mxu0
  %v1115 = vadd.f32 %v730, %v1114
  %v1116 = vpop.f32.mrb[0].mxu0
  %1117 = vmatprep.mubr.f32.mxu0 %v375
  %1118 = vmatmul.mubr.f32.gmra.mrb[0].mxu0 %v374
  %v1119 = vpop.f32.mrb[0].mxu0
  %v1120 = vadd.f32 %v735, %v1119
  %v1121 = vpop.f32.mrb[0].mxu0
  %1122 = vmatprep.mubr.f32.mxu0 %v379
  %1123 = vmatmul.mubr.f32.gmra.mrb[0].mxu0 %v378
  %v1124 = vpop.f32.mrb[0].mxu0
  %v1125 = vadd.f32 %v740, %v1124
  %v1126 = vpop.f32.mrb[0].mxu0
  %1127 = vmatprep.mubr.f32.mxu0 %v383
  %1128 = vmatmul.mubr.f32.gmra.mrb[0].mxu0 %v382
  %v1129 = vpop.f32.mrb[0].mxu0
  %v1130 = vadd.f32 %v745, %v1129
  %v1131 = vpop.f32.mrb[0].mxu0
  %1132 = vmatprep.mubr.f32.mxu0 %v387
  %1133 = vmatmul.mubr.f32.gmra.mrb[0].mxu0 %v386
  %v1134 = vpop.f32.mrb[0].mxu0
  %v1135 = vadd.f32 %v750, %v1134
  %v1136 = vpop.f32.mrb[0].mxu0
  %1137 = vmatprep.mubr.f32.mxu0 %v391
  %1138 = vmatmul.mubr.f32.gmra.mrb[0].mxu0 %v390
  %v1139 = vpop.f32.mrb[0].mxu0
  %v1140 = vadd.f32 %v755, %v1139
  %v1141 = vpop.f32.mrb[0].mxu0
  %1142 = vmatprep.mubr.f32.mxu0 %v395
  %1143 = vmatmul.mubr.f32.gmra.mrb[0].mxu0 %v394
  %v1144 = vpop.f32.mrb[0].mxu0
  %v1145 = vadd.f32 %v760, %v1144
  %v1146 = vpop.f32.mrb[0].mxu0
  %1147 = vmatprep.mubr.f32.mxu0 %v399
  %1148 = vmatmul.mubr.f32.gmra.mrb[0].mxu0 %v398
  %v1149 = vpop.f32.mrb[0].mxu0
  %v1150 = vadd.f32 %v765, %v1149
  %v1151 = vpop.f32.mrb[0].mxu0
  %1152 = vmatprep.mubr.f32.mxu0 %v403
  %1153 = vmatmul.mubr.f32.gmra.mrb[0].mxu0 %v402
  %v1154 = vpop.f32.mrb[0].mxu0
  %v1155 = vadd.f32 %v770, %v1154
  %v1156 = vpop.f32.mrb[0].mxu0
  %1157 = vmatprep.mubr.f32.mxu0 %v407
  %1158 = vmatmul.mubr.f32.gmra.mrb[0].mxu0 %v406
  %v1159 = vpop.f32.mrb[0].mxu0
  %v1160 = vadd.f32 %v775, %v1159
  %v1161 = vpop.f32.mrb[0].mxu0
  %1162 = vmatprep.mubr.f32.mxu0 %v411
  %1163 = vmatmul.mubr.f32.gmra.mrb[0].mxu0 %v410
  %v1164 = vpop.f32.mrb[0].mxu0
  %v1165 = vadd.f32 %v780, %v1164
  %v1166 = vpop.f32.mrb[0].mxu0
  %1167 = vmatprep.mubr.f32.mxu0 %v415
  %1168 = vmatmul.mubr.f32.gmra.mrb[0].mxu0 %v414
  %v1169 = vpop.f32.mrb[0].mxu0
  %v1170 = vadd.f32 %v785, %v1169
  %v1171 = vpop.f32.mrb[0].mxu0
  %1172 = vmatprep.mubr.f32.mxu0 %v419
  %1173 = vmatmul.mubr.f32.gmra.mrb[0].mxu0 %v418
  %v1174 = vpop.f32.mrb[0].mxu0
  %v1175 = vadd.f32 %v790, %v1174
  %v1176 = vpop.f32.mrb[0].mxu0
  %1177 = vmatprep.mubr.f32.mxu0 %v423
  %1178 = vmatmul.mubr.f32.gmra.mrb[0].mxu0 %v422
  %v1179 = vpop.f32.mrb[0].mxu0
  %v1180 = vadd.f32 %v795, %v1179
  %v1181 = vpop.f32.mrb[0].mxu0
  %1182 = vmatprep.mubr.f32.mxu0 %v427
  %1183 = vmatmul.mubr.f32.gmra.mrb[0].mxu0 %v426
  %v1184 = vpop.f32.mrb[0].mxu0
  %v1185 = vadd.f32 %v800, %v1184
  %v1186 = vpop.f32.mrb[0].mxu0
  %1187 = vmatprep.mubr.f32.mxu0 %v431
  %1188 = vmatmul.mubr.f32.gmra.mrb[0].mxu0 %v430
  %v1189 = vpop.f32.mrb[0].mxu0
  %v1190 = vadd.f32 %v805, %v1189
  %v1191 = vpop.f32.mrb[0].mxu0
  %1192 = vmatprep.mubr.f32.mxu0 %v435
  %1193 = vmatmul.mubr.f32.gmra.mrb[0].mxu0 %v434
  %v1194 = vpop.f32.mrb[0].mxu0
  %v1195 = vadd.f32 %v810, %v1194
  %v1196 = vpop.f32.mrb[0].mxu0
  %1197 = vmatprep.mubr.f32.mxu0 %v439
  %1198 = vmatmul.mubr.f32.gmra.mrb[0].mxu0 %v438
  %v1199 = vpop.f32.mrb[0].mxu0
  %v1200 = vadd.f32 %v815, %v1199
  %v1201 = vpop.f32.mrb[0].mxu0
  %1202 = vmatprep.mubr.f32.mxu0 %v443
  %1203 = vmatmul.mubr.f32.gmra.mrb[0].mxu0 %v442
  %v1204 = vpop.f32.mrb[0].mxu0
  %v1205 = vadd.f32 %v820, %v1204
  %v1206 = vpop.f32.mrb[0].mxu0
  %1207 = vmatprep.mubr.f32.mxu0 %v447
  %1208 = vmatmul.mubr.f32.gmra.mrb[0].mxu0 %v446
  %v1209 = vpop.f32.mrb[0].mxu0
  %v1210 = vadd.f32 %v825, %v1209
  %v1211 = vpop.f32.mrb[0].mxu0
  %1212 = vmatprep.mubr.f32.mxu0 %v451
  %1213 = vmatmul.mubr.f32.gmra.mrb[0].mxu0 %v450
  %v1214 = vpop.f32.mrb[0].mxu0
  %v1215 = vadd.f32 %v830, %v1214
  %v1216 = vpop.f32.mrb[0].mxu0
  %1217 = vmatprep.mubr.f32.mxu0 %v455
  %1218 = vmatmul.mubr.f32.gmra.mrb[0].mxu0 %v454
  %v1219 = vpop.f32.mrb[0].mxu0
  %v1220 = vadd.f32 %v835, %v1219
  %v1221 = vpop.f32.mrb[0].mxu0
  %1222 = vmatprep.mubr.f32.mxu0 %v459
  %1223 = vmatmul.mubr.f32.gmra.mrb[0].mxu0 %v458
  %v1224 = vpop.f32.mrb[0].mxu0
  %v1225 = vadd.f32 %v840, %v1224
  %v1226 = vpop.f32.mrb[0].mxu0
  %1227 = vmatprep.mubr.f32.mxu0 %v463
  %1228 = vmatmul.mubr.f32.gmra.mrb[0].mxu0 %v462
  %v1229 = vpop.f32.mrb[0].mxu0
  %v1230 = vadd.f32 %v845, %v1229
  %v1231 = vpop.f32.mrb[0].mxu0
  %1232 = vmatprep.mubr.f32.mxu0 %v467
  %1233 = vmatmul.mubr.f32.gmra.mrb[0].mxu0 %v466
  %v1234 = vpop.f32.mrb[0].mxu0
  %v1235 = vadd.f32 %v850, %v1234
  %v1236 = vpop.f32.mrb[0].mxu0
  %1237 = vdwg.mxu0
  %v1238 = vadd.f32 %v148, %v920
  %v1239 = vadd.f32 %v149, %v925
  %v1240 = vadd.f32 %v150, %v930
  %v1241 = vadd.f32 %v151, %v935
  %v1242 = vadd.f32 %v152, %v940
  %v1243 = vadd.f32 %v153, %v945
  %v1244 = vadd.f32 %v154, %v950
  %v1245 = vadd.f32 %v155, %v955
  %v1246 = vadd.f32 %v156, %v960
  %v1247 = vadd.f32 %v157, %v965
  %v1248 = vadd.f32 %v158, %v970
  %v1249 = vadd.f32 %v159, %v975
  %v1250 = vadd.f32 %v160, %v980
  %v1251 = vadd.f32 %v161, %v985
  %v1252 = vadd.f32 %v162, %v990
  %v1253 = vadd.f32 %v163, %v995
  %v1254 = vadd.f32 %v164, %v1000
  %v1255 = vadd.f32 %v165, %v1005
  %v1256 = vadd.f32 %v166, %v1010
  %v1257 = vadd.f32 %v167, %v1015
  %v1258 = vadd.f32 %v168, %v1020
  %v1259 = vadd.f32 %v169, %v1025
  %v1260 = vadd.f32 %v170, %v1030
  %v1261 = vadd.f32 %v171, %v1035
  %v1262 = vadd.f32 %v172, %v1040
  %v1263 = vadd.f32 %v173, %v1045
  %v1264 = vadd.f32 %v174, %v1050
  %v1265 = vadd.f32 %v175, %v1055
  %v1266 = vadd.f32 %v176, %v1060
  %v1267 = vadd.f32 %v177, %v1065
  %v1268 = vadd.f32 %v178, %v1070
  %v1269 = vadd.f32 %v179, %v1075
  %v1270 = vadd.f32 %v180, %v1080
  %v1271 = vadd.f32 %v181, %v1085
  %v1272 = vadd.f32 %v182, %v1090
  %v1273 = vadd.f32 %v183, %v1095
  %v1274 = vadd.f32 %v184, %v1100
  %v1275 = vadd.f32 %v185, %v1105
  %v1276 = vadd.f32 %v186, %v1110
  %v1277 = vadd.f32 %v187, %v1115
  %v1278 = vadd.f32 %v188, %v1120
  %v1279 = vadd.f32 %v189, %v1125
  %v1280 = vadd.f32 %v190, %v1130
  %v1281 = vadd.f32 %v191, %v1135
  %v1282 = vadd.f32 %v192, %v1140
  %v1283 = vadd.f32 %v193, %v1145
  %v1284 = vadd.f32 %v194, %v1150
  %v1285 = vadd.f32 %v195, %v1155
  %v1286 = vadd.f32 %v196, %v1160
  %v1287 = vadd.f32 %v197, %v1165
  %v1288 = vadd.f32 %v198, %v1170
  %v1289 = vadd.f32 %v199, %v1175
  %v1290 = vadd.f32 %v200, %v1180
  %v1291 = vadd.f32 %v201, %v1185
  %v1292 = vadd.f32 %v202, %v1190
  %v1293 = vadd.f32 %v203, %v1195
  %v1294 = vadd.f32 %v204, %v1200
  %v1295 = vadd.f32 %v205, %v1205
  %v1296 = vadd.f32 %v206, %v1210
  %v1297 = vadd.f32 %v207, %v1215
  %v1298 = vadd.f32 %v208, %v1220
  %v1299 = vadd.f32 %v209, %v1225
  %v1300 = vadd.f32 %v210, %v1230
  %v1301 = vadd.f32 %v211, %v1235
  %1302 = vst [vmem:[#allocation2] sm:$0xff] %v1238
  %1303 = vst [vmem:[#allocation2 + $0x8] sm:$0xff] %v1239
  %1304 = vst [vmem:[#allocation2 + $0x10] sm:$0xff] %v1240
  %1305 = vst [vmem:[#allocation2 + $0x18] sm:$0xff] %v1241
  %1306 = vst [vmem:[#allocation2 + $0x20] sm:$0xff] %v1242
  %1307 = vst [vmem:[#allocation2 + $0x28] sm:$0xff] %v1243
  %1308 = vst [vmem:[#allocation2 + $0x30] sm:$0xff] %v1244
  %1309 = vst [vmem:[#allocation2 + $0x38] sm:$0xff] %v1245
  %1310 = vst [vmem:[#allocation2 + $0x40] sm:$0xff] %v1246
  %1311 = vst [vmem:[#allocation2 + $0x48] sm:$0xff] %v1247
  %1312 = vst [vmem:[#allocation2 + $0x50] sm:$0xff] %v1248
  %1313 = vst [vmem:[#allocation2 + $0x58] sm:$0xff] %v1249
  %1314 = vst [vmem:[#allocation2 + $0x60] sm:$0xff] %v1250
  %1315 = vst [vmem:[#allocation2 + $0x68] sm:$0xff] %v1251
  %1316 = vst [vmem:[#allocation2 + $0x70] sm:$0xff] %v1252
  %1317 = vst [vmem:[#allocation2 + $0x78] sm:$0xff] %v1253
  %1318 = vst [vmem:[#allocation2 + $0x80] sm:$0xff] %v1254
  %1319 = vst [vmem:[#allocation2 + $0x88] sm:$0xff] %v1255
  %1320 = vst [vmem:[#allocation2 + $0x90] sm:$0xff] %v1256
  %1321 = vst [vmem:[#allocation2 + $0x98] sm:$0xff] %v1257
  %1322 = vst [vmem:[#allocation2 + $0xa0] sm:$0xff] %v1258
  %1323 = vst [vmem:[#allocation2 + $0xa8] sm:$0xff] %v1259
  %1324 = vst [vmem:[#allocation2 + $0xb0] sm:$0xff] %v1260
  %1325 = vst [vmem:[#allocation2 + $0xb8] sm:$0xff] %v1261
  %1326 = vst [vmem:[#allocation2 + $0xc0] sm:$0xff] %v1262
  %1327 = vst [vmem:[#allocation2 + $0xc8] sm:$0xff] %v1263
  %1328 = vst [vmem:[#allocation2 + $0xd0] sm:$0xff] %v1264
  %1329 = vst [vmem:[#allocation2 + $0xd8] sm:$0xff] %v1265
  %1330 = vst [vmem:[#allocation2 + $0xe0] sm:$0xff] %v1266
  %1331 = vst [vmem:[#allocation2 + $0xe8] sm:$0xff] %v1267
  %1332 = vst [vmem:[#allocation2 + $0xf0] sm:$0xff] %v1268
  %1333 = vst [vmem:[#allocation2 + $0xf8] sm:$0xff] %v1269
  %1334 = vst [vmem:[#allocation2 + $0x100] sm:$0xff] %v1270
  %1335 = vst [vmem:[#allocation2 + $0x108] sm:$0xff] %v1271
  %1336 = vst [vmem:[#allocation2 + $0x110] sm:$0xff] %v1272
  %1337 = vst [vmem:[#allocation2 + $0x118] sm:$0xff] %v1273
  %1338 = vst [vmem:[#allocation2 + $0x120] sm:$0xff] %v1274
  %1339 = vst [vmem:[#allocation2 + $0x128] sm:$0xff] %v1275
  %1340 = vst [vmem:[#allocation2 + $0x130] sm:$0xff] %v1276
  %1341 = vst [vmem:[#allocation2 + $0x138] sm:$0xff] %v1277
  %1342 = vst [vmem:[#allocation2 + $0x140] sm:$0xff] %v1278
  %1343 = vst [vmem:[#allocation2 + $0x148] sm:$0xff] %v1279
  %1344 = vst [vmem:[#allocation2 + $0x150] sm:$0xff] %v1280
  %1345 = vst [vmem:[#allocation2 + $0x158] sm:$0xff] %v1281
  %1346 = vst [vmem:[#allocation2 + $0x160] sm:$0xff] %v1282
  %1347 = vst [vmem:[#allocation2 + $0x168] sm:$0xff] %v1283
  %1348 = vst [vmem:[#allocation2 + $0x170] sm:$0xff] %v1284
  %1349 = vst [vmem:[#allocation2 + $0x178] sm:$0xff] %v1285
  %1350 = vst [vmem:[#allocation2 + $0x180] sm:$0xff] %v1286
  %1351 = vst [vmem:[#allocation2 + $0x188] sm:$0xff] %v1287
  %1352 = vst [vmem:[#allocation2 + $0x190] sm:$0xff] %v1288
  %1353 = vst [vmem:[#allocation2 + $0x198] sm:$0xff] %v1289
  %1354 = vst [vmem:[#allocation2 + $0x1a0] sm:$0xff] %v1290
  %1355 = vst [vmem:[#allocation2 + $0x1a8] sm:$0xff] %v1291
  %1356 = vst [vmem:[#allocation2 + $0x1b0] sm:$0xff] %v1292
  %1357 = vst [vmem:[#allocation2 + $0x1b8] sm:$0xff] %v1293
  %1358 = vst [vmem:[#allocation2 + $0x1c0] sm:$0xff] %v1294
  %1359 = vst [vmem:[#allocation2 + $0x1c8] sm:$0xff] %v1295
  %1360 = vst [vmem:[#allocation2 + $0x1d0] sm:$0xff] %v1296
  %1361 = vst [vmem:[#allocation2 + $0x1d8] sm:$0xff] %v1297
  %1362 = vst [vmem:[#allocation2 + $0x1e0] sm:$0xff] %v1298
  %1363 = vst [vmem:[#allocation2 + $0x1e8] sm:$0xff] %v1299
  %1364 = vst [vmem:[#allocation2 + $0x1f0] sm:$0xff] %v1300
  %1365 = vst [vmem:[#allocation2 + $0x1f8] sm:$0xff] %v1301
  // Predicated region
  $region18: #{graphsage_forward.7} parent=0 // pred_check
    %p1366 = pneg %p14
  $region19: #{graphsage_forward.7} parent=0 // pred_check_branch
    %1368 = sbr.rel (%p1366) target = $region21
  $region20: #{graphsage_forward.7} parent=0 // pred_region
    %v1369 = vld [vmem:[#allocation2] sm:$0xff]
    %v1370 = vld [vmem:[#allocation2 + $0x8] sm:$0xff]
    %v1371 = vld [vmem:[#allocation2 + $0x10] sm:$0xff]
    %v1372 = vld [vmem:[#allocation2 + $0x18] sm:$0xff]
    %v1373 = vld [vmem:[#allocation2 + $0x20] sm:$0xff]
    %v1374 = vld [vmem:[#allocation2 + $0x28] sm:$0xff]
    %v1375 = vld [vmem:[#allocation2 + $0x30] sm:$0xff]
    %v1376 = vld [vmem:[#allocation2 + $0x38] sm:$0xff]
    %v1377 = vld [vmem:[#allocation2 + $0x40] sm:$0xff]
    %v1378 = vld [vmem:[#allocation2 + $0x48] sm:$0xff]
    %v1379 = vld [vmem:[#allocation2 + $0x50] sm:$0xff]
    %v1380 = vld [vmem:[#allocation2 + $0x58] sm:$0xff]
    %v1381 = vld [vmem:[#allocation2 + $0x60] sm:$0xff]
    %v1382 = vld [vmem:[#allocation2 + $0x68] sm:$0xff]
    %v1383 = vld [vmem:[#allocation2 + $0x70] sm:$0xff]
    %v1384 = vld [vmem:[#allocation2 + $0x78] sm:$0xff]
    %v1385 = vld [vmem:[#allocation2 + $0x80] sm:$0xff]
    %v1386 = vld [vmem:[#allocation2 + $0x88] sm:$0xff]
    %v1387 = vld [vmem:[#allocation2 + $0x90] sm:$0xff]
    %v1388 = vld [vmem:[#allocation2 + $0x98] sm:$0xff]
    %v1389 = vld [vmem:[#allocation2 + $0xa0] sm:$0xff]
    %v1390 = vld [vmem:[#allocation2 + $0xa8] sm:$0xff]
    %v1391 = vld [vmem:[#allocation2 + $0xb0] sm:$0xff]
    %v1392 = vld [vmem:[#allocation2 + $0xb8] sm:$0xff]
    %v1393 = vld [vmem:[#allocation2 + $0xc0] sm:$0xff]
    %v1394 = vld [vmem:[#allocation2 + $0xc8] sm:$0xff]
    %v1395 = vld [vmem:[#allocation2 + $0xd0] sm:$0xff]
    %v1396 = vld [vmem:[#allocation2 + $0xd8] sm:$0xff]
    %v1397 = vld [vmem:[#allocation2 + $0xe0] sm:$0xff]
    %v1398 = vld [vmem:[#allocation2 + $0xe8] sm:$0xff]
    %v1399 = vld [vmem:[#allocation2 + $0xf0] sm:$0xff]
    %v1400 = vld [vmem:[#allocation2 + $0xf8] sm:$0xff]
    %v1401 = vld [vmem:[#allocation2 + $0x100] sm:$0xff]
    %v1402 = vld [vmem:[#allocation2 + $0x108] sm:$0xff]
    %v1403 = vld [vmem:[#allocation2 + $0x110] sm:$0xff]
    %v1404 = vld [vmem:[#allocation2 + $0x118] sm:$0xff]
    %v1405 = vld [vmem:[#allocation2 + $0x120] sm:$0xff]
    %v1406 = vld [vmem:[#allocation2 + $0x128] sm:$0xff]
    %v1407 = vld [vmem:[#allocation2 + $0x130] sm:$0xff]
    %v1408 = vld [vmem:[#allocation2 + $0x138] sm:$0xff]
    %v1409 = vld [vmem:[#allocation2 + $0x140] sm:$0xff]
    %v1410 = vld [vmem:[#allocation2 + $0x148] sm:$0xff]
    %v1411 = vld [vmem:[#allocation2 + $0x150] sm:$0xff]
    %v1412 = vld [vmem:[#allocation2 + $0x158] sm:$0xff]
    %v1413 = vld [vmem:[#allocation2 + $0x160] sm:$0xff]
    %v1414 = vld [vmem:[#allocation2 + $0x168] sm:$0xff]
    %v1415 = vld [vmem:[#allocation2 + $0x170] sm:$0xff]
    %v1416 = vld [vmem:[#allocation2 + $0x178] sm:$0xff]
    %v1417 = vld [vmem:[#allocation2 + $0x180] sm:$0xff]
    %v1418 = vld [vmem:[#allocation2 + $0x188] sm:$0xff]
    %v1419 = vld [vmem:[#allocation2 + $0x190] sm:$0xff]
    %v1420 = vld [vmem:[#allocation2 + $0x198] sm:$0xff]
    %v1421 = vld [vmem:[#allocation2 + $0x1a0] sm:$0xff]
    %v1422 = vld [vmem:[#allocation2 + $0x1a8] sm:$0xff]
    %v1423 = vld [vmem:[#allocation2 + $0x1b0] sm:$0xff]
    %v1424 = vld [vmem:[#allocation2 + $0x1b8] sm:$0xff]
    %v1425 = vld [vmem:[#allocation2 + $0x1c0] sm:$0xff]
    %v1426 = vld [vmem:[#allocation2 + $0x1c8] sm:$0xff]
    %v1427 = vld [vmem:[#allocation2 + $0x1d0] sm:$0xff]
    %v1428 = vld [vmem:[#allocation2 + $0x1d8] sm:$0xff]
    %v1429 = vld [vmem:[#allocation2 + $0x1e0] sm:$0xff]
    %v1430 = vld [vmem:[#allocation2 + $0x1e8] sm:$0xff]
    %v1431 = vld [vmem:[#allocation2 + $0x1f0] sm:$0xff]
    %v1432 = vld [vmem:[#allocation2 + $0x1f8] sm:$0xff]
    %v1433 = vld [vmem:[%s2] sm:$0xff]
    %v1434 = vld [vmem:[%s2 + $0x8] sm:$0xff]
    %v1435 = vld [vmem:[%s2 + $0x10] sm:$0xff]
    %v1436 = vld [vmem:[%s2 + $0x18] sm:$0xff]
    %v1437 = vld [vmem:[%s2 + $0x20] sm:$0xff]
    %v1438 = vld [vmem:[%s2 + $0x28] sm:$0xff]
    %v1439 = vld [vmem:[%s2 + $0x30] sm:$0xff]
    %v1440 = vld [vmem:[%s2 + $0x38] sm:$0xff]
    %v1441 = vld [vmem:[%s2 + $0x40] sm:$0xff]
    %v1442 = vld [vmem:[%s2 + $0x48] sm:$0xff]
    %v1443 = vld [vmem:[%s2 + $0x50] sm:$0xff]
    %v1444 = vld [vmem:[%s2 + $0x58] sm:$0xff]
    %v1445 = vld [vmem:[%s2 + $0x60] sm:$0xff]
    %v1446 = vld [vmem:[%s2 + $0x68] sm:$0xff]
    %v1447 = vld [vmem:[%s2 + $0x70] sm:$0xff]
    %v1448 = vld [vmem:[%s2 + $0x78] sm:$0xff]
    %v1449 = vld [vmem:[%s2 + $0x80] sm:$0xff]
    %v1450 = vld [vmem:[%s2 + $0x88] sm:$0xff]
    %v1451 = vld [vmem:[%s2 + $0x90] sm:$0xff]
    %v1452 = vld [vmem:[%s2 + $0x98] sm:$0xff]
    %v1453 = vld [vmem:[%s2 + $0xa0] sm:$0xff]
    %v1454 = vld [vmem:[%s2 + $0xa8] sm:$0xff]
    %v1455 = vld [vmem:[%s2 + $0xb0] sm:$0xff]
    %v1456 = vld [vmem:[%s2 + $0xb8] sm:$0xff]
    %v1457 = vld [vmem:[%s2 + $0xc0] sm:$0xff]
    %v1458 = vld [vmem:[%s2 + $0xc8] sm:$0xff]
    %v1459 = vld [vmem:[%s2 + $0xd0] sm:$0xff]
    %v1460 = vld [vmem:[%s2 + $0xd8] sm:$0xff]
    %v1461 = vld [vmem:[%s2 + $0xe0] sm:$0xff]
    %v1462 = vld [vmem:[%s2 + $0xe8] sm:$0xff]
    %v1463 = vld [vmem:[%s2 + $0xf0] sm:$0xff]
    %v1464 = vld [vmem:[%s2 + $0xf8] sm:$0xff]
    %v1465 = vld [vmem:[%s2 + $0x100] sm:$0xff]
    %v1466 = vld [vmem:[%s2 + $0x108] sm:$0xff]
    %v1467 = vld [vmem:[%s2 + $0x110] sm:$0xff]
    %v1468 = vld [vmem:[%s2 + $0x118] sm:$0xff]
    %v1469 = vld [vmem:[%s2 + $0x120] sm:$0xff]
    %v1470 = vld [vmem:[%s2 + $0x128] sm:$0xff]
    %v1471 = vld [vmem:[%s2 + $0x130] sm:$0xff]
    %v1472 = vld [vmem:[%s2 + $0x138] sm:$0xff]
    %v1473 = vld [vmem:[%s2 + $0x140] sm:$0xff]
    %v1474 = vld [vmem:[%s2 + $0x148] sm:$0xff]
    %v1475 = vld [vmem:[%s2 + $0x150] sm:$0xff]
    %v1476 = vld [vmem:[%s2 + $0x158] sm:$0xff]
    %v1477 = vld [vmem:[%s2 + $0x160] sm:$0xff]
    %v1478 = vld [vmem:[%s2 + $0x168] sm:$0xff]
    %v1479 = vld [vmem:[%s2 + $0x170] sm:$0xff]
    %v1480 = vld [vmem:[%s2 + $0x178] sm:$0xff]
    %v1481 = vld [vmem:[%s2 + $0x180] sm:$0xff]
    %v1482 = vld [vmem:[%s2 + $0x188] sm:$0xff]
    %v1483 = vld [vmem:[%s2 + $0x190] sm:$0xff]
    %v1484 = vld [vmem:[%s2 + $0x198] sm:$0xff]
    %v1485 = vld [vmem:[%s2 + $0x1a0] sm:$0xff]
    %v1486 = vld [vmem:[%s2 + $0x1a8] sm:$0xff]
    %v1487 = vld [vmem:[%s2 + $0x1b0] sm:$0xff]
    %v1488 = vld [vmem:[%s2 + $0x1b8] sm:$0xff]
    %v1489 = vld [vmem:[%s2 + $0x1c0] sm:$0xff]
    %v1490 = vld [vmem:[%s2 + $0x1c8] sm:$0xff]
    %v1491 = vld [vmem:[%s2 + $0x1d0] sm:$0xff]
    %v1492 = vld [vmem:[%s2 + $0x1d8] sm:$0xff]
    %v1493 = vld [vmem:[%s2 + $0x1e0] sm:$0xff]
    %v1494 = vld [vmem:[%s2 + $0x1e8] sm:$0xff]
    %v1495 = vld [vmem:[%s2 + $0x1f0] sm:$0xff]
    %v1496 = vld [vmem:[%s2 + $0x1f8] sm:$0xff]
    %v1497 = vadd.f32 %v1369, %v1433
    %v1498 = vadd.f32 %v1370, %v1434
    %v1499 = vadd.f32 %v1371, %v1435
    %v1500 = vadd.f32 %v1372, %v1436
    %v1501 = vadd.f32 %v1373, %v1437
    %v1502 = vadd.f32 %v1374, %v1438
    %v1503 = vadd.f32 %v1375, %v1439
    %v1504 = vadd.f32 %v1376, %v1440
    %v1505 = vadd.f32 %v1377, %v1441
    %v1506 = vadd.f32 %v1378, %v1442
    %v1507 = vadd.f32 %v1379, %v1443
    %v1508 = vadd.f32 %v1380, %v1444
    %v1509 = vadd.f32 %v1381, %v1445
    %v1510 = vadd.f32 %v1382, %v1446
    %v1511 = vadd.f32 %v1383, %v1447
    %v1512 = vadd.f32 %v1384, %v1448
    %v1513 = vadd.f32 %v1385, %v1449
    %v1514 = vadd.f32 %v1386, %v1450
    %v1515 = vadd.f32 %v1387, %v1451
    %v1516 = vadd.f32 %v1388, %v1452
    %v1517 = vadd.f32 %v1389, %v1453
    %v1518 = vadd.f32 %v1390, %v1454
    %v1519 = vadd.f32 %v1391, %v1455
    %v1520 = vadd.f32 %v1392, %v1456
    %v1521 = vadd.f32 %v1393, %v1457
    %v1522 = vadd.f32 %v1394, %v1458
    %v1523 = vadd.f32 %v1395, %v1459
    %v1524 = vadd.f32 %v1396, %v1460
    %v1525 = vadd.f32 %v1397, %v1461
    %v1526 = vadd.f32 %v1398, %v1462
    %v1527 = vadd.f32 %v1399, %v1463
    %v1528 = vadd.f32 %v1400, %v1464
    %v1529 = vadd.f32 %v1401, %v1465
    %v1530 = vadd.f32 %v1402, %v1466
    %v1531 = vadd.f32 %v1403, %v1467
    %v1532 = vadd.f32 %v1404, %v1468
    %v1533 = vadd.f32 %v1405, %v1469
    %v1534 = vadd.f32 %v1406, %v1470
    %v1535 = vadd.f32 %v1407, %v1471
    %v1536 = vadd.f32 %v1408, %v1472
    %v1537 = vadd.f32 %v1409, %v1473
    %v1538 = vadd.f32 %v1410, %v1474
    %v1539 = vadd.f32 %v1411, %v1475
    %v1540 = vadd.f32 %v1412, %v1476
    %v1541 = vadd.f32 %v1413, %v1477
    %v1542 = vadd.f32 %v1414, %v1478
    %v1543 = vadd.f32 %v1415, %v1479
    %v1544 = vadd.f32 %v1416, %v1480
    %v1545 = vadd.f32 %v1417, %v1481
    %v1546 = vadd.f32 %v1418, %v1482
    %v1547 = vadd.f32 %v1419, %v1483
    %v1548 = vadd.f32 %v1420, %v1484
    %v1549 = vadd.f32 %v1421, %v1485
    %v1550 = vadd.f32 %v1422, %v1486
    %v1551 = vadd.f32 %v1423, %v1487
    %v1552 = vadd.f32 %v1424, %v1488
    %v1553 = vadd.f32 %v1425, %v1489
    %v1554 = vadd.f32 %v1426, %v1490
    %v1555 = vadd.f32 %v1427, %v1491
    %v1556 = vadd.f32 %v1428, %v1492
    %v1557 = vadd.f32 %v1429, %v1493
    %v1558 = vadd.f32 %v1430, %v1494
    %v1559 = vadd.f32 %v1431, %v1495
    %v1560 = vadd.f32 %v1432, %v1496
    %v1561 = vlaneseq
    %v1562 = vand.u32 %v1561, 127
    %vm1563 = vcmp.lt.s32.totalorder %v1562, 16
    %v1564 = vsel %vm1563, %v1497, -1e+30
    %v1565 = vsel %vm1563, %v1498, -1e+30
    %v1566 = vsel %vm1563, %v1499, -1e+30
    %v1567 = vsel %vm1563, %v1500, -1e+30
    %v1568 = vsel %vm1563, %v1501, -1e+30
    %v1569 = vsel %vm1563, %v1502, -1e+30
    %v1570 = vsel %vm1563, %v1503, -1e+30
    %v1571 = vsel %vm1563, %v1504, -1e+30
    %v1572 = vsel %vm1563, %v1505, -1e+30
    %v1573 = vsel %vm1563, %v1506, -1e+30
    %v1574 = vsel %vm1563, %v1507, -1e+30
    %v1575 = vsel %vm1563, %v1508, -1e+30
    %v1576 = vsel %vm1563, %v1509, -1e+30
    %v1577 = vsel %vm1563, %v1510, -1e+30
    %v1578 = vsel %vm1563, %v1511, -1e+30
    %v1579 = vsel %vm1563, %v1512, -1e+30
    %v1580 = vsel %vm1563, %v1513, -1e+30
    %v1581 = vsel %vm1563, %v1514, -1e+30
    %v1582 = vsel %vm1563, %v1515, -1e+30
    %v1583 = vsel %vm1563, %v1516, -1e+30
    %v1584 = vsel %vm1563, %v1517, -1e+30
    %v1585 = vsel %vm1563, %v1518, -1e+30
    %v1586 = vsel %vm1563, %v1519, -1e+30
    %v1587 = vsel %vm1563, %v1520, -1e+30
    %v1588 = vsel %vm1563, %v1521, -1e+30
    %v1589 = vsel %vm1563, %v1522, -1e+30
    %v1590 = vsel %vm1563, %v1523, -1e+30
    %v1591 = vsel %vm1563, %v1524, -1e+30
    %v1592 = vsel %vm1563, %v1525, -1e+30
    %v1593 = vsel %vm1563, %v1526, -1e+30
    %v1594 = vsel %vm1563, %v1527, -1e+30
    %v1595 = vsel %vm1563, %v1528, -1e+30
    %v1596 = vsel %vm1563, %v1529, -1e+30
    %v1597 = vsel %vm1563, %v1530, -1e+30
    %v1598 = vsel %vm1563, %v1531, -1e+30
    %v1599 = vsel %vm1563, %v1532, -1e+30
    %v1600 = vsel %vm1563, %v1533, -1e+30
    %v1601 = vsel %vm1563, %v1534, -1e+30
    %v1602 = vsel %vm1563, %v1535, -1e+30
    %v1603 = vsel %vm1563, %v1536, -1e+30
    %v1604 = vsel %vm1563, %v1537, -1e+30
    %v1605 = vsel %vm1563, %v1538, -1e+30
    %v1606 = vsel %vm1563, %v1539, -1e+30
    %v1607 = vsel %vm1563, %v1540, -1e+30
    %v1608 = vsel %vm1563, %v1541, -1e+30
    %v1609 = vsel %vm1563, %v1542, -1e+30
    %v1610 = vsel %vm1563, %v1543, -1e+30
    %v1611 = vsel %vm1563, %v1544, -1e+30
    %v1612 = vsel %vm1563, %v1545, -1e+30
    %v1613 = vsel %vm1563, %v1546, -1e+30
    %v1614 = vsel %vm1563, %v1547, -1e+30
    %v1615 = vsel %vm1563, %v1548, -1e+30
    %v1616 = vsel %vm1563, %v1549, -1e+30
    %v1617 = vsel %vm1563, %v1550, -1e+30
    %v1618 = vsel %vm1563, %v1551, -1e+30
    %v1619 = vsel %vm1563, %v1552, -1e+30
    %v1620 = vsel %vm1563, %v1553, -1e+30
    %v1621 = vsel %vm1563, %v1554, -1e+30
    %v1622 = vsel %vm1563, %v1555, -1e+30
    %v1623 = vsel %vm1563, %v1556, -1e+30
    %v1624 = vsel %vm1563, %v1557, -1e+30
    %v1625 = vsel %vm1563, %v1558, -1e+30
    %v1626 = vsel %vm1563, %v1559, -1e+30
    %v1627 = vsel %vm1563, %v1560, -1e+30
    %1628 = vmax.xlane.f32.xlu0 %v1564
    %v1629 = vpop.xlane.xlu0 %1628
    %1630 = vmax.xlane.f32.xlu0 %v1565
    %v1631 = vpop.xlane.xlu0 %1630
    %1632 = vmax.xlane.f32.xlu0 %v1566
    %v1633 = vpop.xlane.xlu0 %1632
    %1634 = vmax.xlane.f32.xlu0 %v1567
    %v1635 = vpop.xlane.xlu0 %1634
    %1636 = vmax.xlane.f32.xlu0 %v1568
    %v1637 = vpop.xlane.xlu0 %1636
    %1638 = vmax.xlane.f32.xlu0 %v1569
    %v1639 = vpop.xlane.xlu0 %1638
    %1640 = vmax.xlane.f32.xlu0 %v1570
    %v1641 = vpop.xlane.xlu0 %1640
    %1642 = vmax.xlane.f32.xlu0 %v1571
    %v1643 = vpop.xlane.xlu0 %1642
    %1644 = vmax.xlane.f32.xlu0 %v1572
    %v1645 = vpop.xlane.xlu0 %1644
    %1646 = vmax.xlane.f32.xlu0 %v1573
    %v1647 = vpop.xlane.xlu0 %1646
    %1648 = vmax.xlane.f32.xlu0 %v1574
    %v1649 = vpop.xlane.xlu0 %1648
    %1650 = vmax.xlane.f32.xlu0 %v1575
    %v1651 = vpop.xlane.xlu0 %1650
    %1652 = vmax.xlane.f32.xlu0 %v1576
    %v1653 = vpop.xlane.xlu0 %1652
    %1654 = vmax.xlane.f32.xlu0 %v1577
    %v1655 = vpop.xlane.xlu0 %1654
    %1656 = vmax.xlane.f32.xlu0 %v1578
    %v1657 = vpop.xlane.xlu0 %1656
    %1658 = vmax.xlane.f32.xlu0 %v1579
    %v1659 = vpop.xlane.xlu0 %1658
    %1660 = vmax.xlane.f32.xlu0 %v1580
    %v1661 = vpop.xlane.xlu0 %1660
    %1662 = vmax.xlane.f32.xlu0 %v1581
    %v1663 = vpop.xlane.xlu0 %1662
    %1664 = vmax.xlane.f32.xlu0 %v1582
    %v1665 = vpop.xlane.xlu0 %1664
    %1666 = vmax.xlane.f32.xlu0 %v1583
    %v1667 = vpop.xlane.xlu0 %1666
    %1668 = vmax.xlane.f32.xlu0 %v1584
    %v1669 = vpop.xlane.xlu0 %1668
    %1670 = vmax.xlane.f32.xlu0 %v1585
    %v1671 = vpop.xlane.xlu0 %1670
    %1672 = vmax.xlane.f32.xlu0 %v1586
    %v1673 = vpop.xlane.xlu0 %1672
    %1674 = vmax.xlane.f32.xlu0 %v1587
    %v1675 = vpop.xlane.xlu0 %1674
    %1676 = vmax.xlane.f32.xlu0 %v1588
    %v1677 = vpop.xlane.xlu0 %1676
    %1678 = vmax.xlane.f32.xlu0 %v1589
    %v1679 = vpop.xlane.xlu0 %1678
    %1680 = vmax.xlane.f32.xlu0 %v1590
    %v1681 = vpop.xlane.xlu0 %1680
    %1682 = vmax.xlane.f32.xlu0 %v1591
    %v1683 = vpop.xlane.xlu0 %1682
    %1684 = vmax.xlane.f32.xlu0 %v1592
    %v1685 = vpop.xlane.xlu0 %1684
    %1686 = vmax.xlane.f32.xlu0 %v1593
    %v1687 = vpop.xlane.xlu0 %1686
    %1688 = vmax.xlane.f32.xlu0 %v1594
    %v1689 = vpop.xlane.xlu0 %1688
    %1690 = vmax.xlane.f32.xlu0 %v1595
    %v1691 = vpop.xlane.xlu0 %1690
    %1692 = vmax.xlane.f32.xlu0 %v1596
    %v1693 = vpop.xlane.xlu0 %1692
    %1694 = vmax.xlane.f32.xlu0 %v1597
    %v1695 = vpop.xlane.xlu0 %1694
    %1696 = vmax.xlane.f32.xlu0 %v1598
    %v1697 = vpop.xlane.xlu0 %1696
    %1698 = vmax.xlane.f32.xlu0 %v1599
    %v1699 = vpop.xlane.xlu0 %1698
    %1700 = vmax.xlane.f32.xlu0 %v1600
    %v1701 = vpop.xlane.xlu0 %1700
    %1702 = vmax.xlane.f32.xlu0 %v1601
    %v1703 = vpop.xlane.xlu0 %1702
    %1704 = vmax.xlane.f32.xlu0 %v1602
    %v1705 = vpop.xlane.xlu0 %1704
    %1706 = vmax.xlane.f32.xlu0 %v1603
    %v1707 = vpop.xlane.xlu0 %1706
    %1708 = vmax.xlane.f32.xlu0 %v1604
    %v1709 = vpop.xlane.xlu0 %1708
    %1710 = vmax.xlane.f32.xlu0 %v1605
    %v1711 = vpop.xlane.xlu0 %1710
    %1712 = vmax.xlane.f32.xlu0 %v1606
    %v1713 = vpop.xlane.xlu0 %1712
    %1714 = vmax.xlane.f32.xlu0 %v1607
    %v1715 = vpop.xlane.xlu0 %1714
    %1716 = vmax.xlane.f32.xlu0 %v1608
    %v1717 = vpop.xlane.xlu0 %1716
    %1718 = vmax.xlane.f32.xlu0 %v1609
    %v1719 = vpop.xlane.xlu0 %1718
    %1720 = vmax.xlane.f32.xlu0 %v1610
    %v1721 = vpop.xlane.xlu0 %1720
    %1722 = vmax.xlane.f32.xlu0 %v1611
    %v1723 = vpop.xlane.xlu0 %1722
    %1724 = vmax.xlane.f32.xlu0 %v1612
    %v1725 = vpop.xlane.xlu0 %1724
    %1726 = vmax.xlane.f32.xlu0 %v1613
    %v1727 = vpop.xlane.xlu0 %1726
    %1728 = vmax.xlane.f32.xlu0 %v1614
    %v1729 = vpop.xlane.xlu0 %1728
    %1730 = vmax.xlane.f32.xlu0 %v1615
    %v1731 = vpop.xlane.xlu0 %1730
    %1732 = vmax.xlane.f32.xlu0 %v1616
    %v1733 = vpop.xlane.xlu0 %1732
    %1734 = vmax.xlane.f32.xlu0 %v1617
    %v1735 = vpop.xlane.xlu0 %1734
    %1736 = vmax.xlane.f32.xlu0 %v1618
    %v1737 = vpop.xlane.xlu0 %1736
    %1738 = vmax.xlane.f32.xlu0 %v1619
    %v1739 = vpop.xlane.xlu0 %1738
    %1740 = vmax.xlane.f32.xlu0 %v1620
    %v1741 = vpop.xlane.xlu0 %1740
    %1742 = vmax.xlane.f32.xlu0 %v1621
    %v1743 = vpop.xlane.xlu0 %1742
    %1744 = vmax.xlane.f32.xlu0 %v1622
    %v1745 = vpop.xlane.xlu0 %1744
    %1746 = vmax.xlane.f32.xlu0 %v1623
    %v1747 = vpop.xlane.xlu0 %1746
    %1748 = vmax.xlane.f32.xlu0 %v1624
    %v1749 = vpop.xlane.xlu0 %1748
    %1750 = vmax.xlane.f32.xlu0 %v1625
    %v1751 = vpop.xlane.xlu0 %1750
    %1752 = vmax.xlane.f32.xlu0 %v1626
    %v1753 = vpop.xlane.xlu0 %1752
    %1754 = vmax.xlane.f32.xlu0 %v1627
    %v1755 = vpop.xlane.xlu0 %1754
    %v1756 = vsub.f32 %v1497, %v1629
    %v1757 = vsub.f32 %v1498, %v1631
    %v1758 = vsub.f32 %v1499, %v1633
    %v1759 = vsub.f32 %v1500, %v1635
    %v1760 = vsub.f32 %v1501, %v1637
    %v1761 = vsub.f32 %v1502, %v1639
    %v1762 = vsub.f32 %v1503, %v1641
    %v1763 = vsub.f32 %v1504, %v1643
    %v1764 = vsub.f32 %v1505, %v1645
    %v1765 = vsub.f32 %v1506, %v1647
    %v1766 = vsub.f32 %v1507, %v1649
    %v1767 = vsub.f32 %v1508, %v1651
    %v1768 = vsub.f32 %v1509, %v1653
    %v1769 = vsub.f32 %v1510, %v1655
    %v1770 = vsub.f32 %v1511, %v1657
    %v1771 = vsub.f32 %v1512, %v1659
    %v1772 = vsub.f32 %v1513, %v1661
    %v1773 = vsub.f32 %v1514, %v1663
    %v1774 = vsub.f32 %v1515, %v1665
    %v1775 = vsub.f32 %v1516, %v1667
    %v1776 = vsub.f32 %v1517, %v1669
    %v1777 = vsub.f32 %v1518, %v1671
    %v1778 = vsub.f32 %v1519, %v1673
    %v1779 = vsub.f32 %v1520, %v1675
    %v1780 = vsub.f32 %v1521, %v1677
    %v1781 = vsub.f32 %v1522, %v1679
    %v1782 = vsub.f32 %v1523, %v1681
    %v1783 = vsub.f32 %v1524, %v1683
    %v1784 = vsub.f32 %v1525, %v1685
    %v1785 = vsub.f32 %v1526, %v1687
    %v1786 = vsub.f32 %v1527, %v1689
    %v1787 = vsub.f32 %v1528, %v1691
    %v1788 = vsub.f32 %v1529, %v1693
    %v1789 = vsub.f32 %v1530, %v1695
    %v1790 = vsub.f32 %v1531, %v1697
    %v1791 = vsub.f32 %v1532, %v1699
    %v1792 = vsub.f32 %v1533, %v1701
    %v1793 = vsub.f32 %v1534, %v1703
    %v1794 = vsub.f32 %v1535, %v1705
    %v1795 = vsub.f32 %v1536, %v1707
    %v1796 = vsub.f32 %v1537, %v1709
    %v1797 = vsub.f32 %v1538, %v1711
    %v1798 = vsub.f32 %v1539, %v1713
    %v1799 = vsub.f32 %v1540, %v1715
    %v1800 = vsub.f32 %v1541, %v1717
    %v1801 = vsub.f32 %v1542, %v1719
    %v1802 = vsub.f32 %v1543, %v1721
    %v1803 = vsub.f32 %v1544, %v1723
    %v1804 = vsub.f32 %v1545, %v1725
    %v1805 = vsub.f32 %v1546, %v1727
    %v1806 = vsub.f32 %v1547, %v1729
    %v1807 = vsub.f32 %v1548, %v1731
    %v1808 = vsub.f32 %v1549, %v1733
    %v1809 = vsub.f32 %v1550, %v1735
    %v1810 = vsub.f32 %v1551, %v1737
    %v1811 = vsub.f32 %v1552, %v1739
    %v1812 = vsub.f32 %v1553, %v1741
    %v1813 = vsub.f32 %v1554, %v1743
    %v1814 = vsub.f32 %v1555, %v1745
    %v1815 = vsub.f32 %v1556, %v1747
    %v1816 = vsub.f32 %v1557, %v1749
    %v1817 = vsub.f32 %v1558, %v1751
    %v1818 = vsub.f32 %v1559, %v1753
    %v1819 = vsub.f32 %v1560, %v1755
    %v1820 = vsel %vm1563, %v1756, -1e+30
    %v1821 = vsel %vm1563, %v1757, -1e+30
    %v1822 = vsel %vm1563, %v1758, -1e+30
    %v1823 = vsel %vm1563, %v1759, -1e+30
    %v1824 = vsel %vm1563, %v1760, -1e+30
    %v1825 = vsel %vm1563, %v1761, -1e+30
    %v1826 = vsel %vm1563, %v1762, -1e+30
    %v1827 = vsel %vm1563, %v1763, -1e+30
    %v1828 = vsel %vm1563, %v1764, -1e+30
    %v1829 = vsel %vm1563, %v1765, -1e+30
    %v1830 = vsel %vm1563, %v1766, -1e+30
    %v1831 = vsel %vm1563, %v1767, -1e+30
    %v1832 = vsel %vm1563, %v1768, -1e+30
    %v1833 = vsel %vm1563, %v1769, -1e+30
    %v1834 = vsel %vm1563, %v1770, -1e+30
    %v1835 = vsel %vm1563, %v1771, -1e+30
    %v1836 = vsel %vm1563, %v1772, -1e+30
    %v1837 = vsel %vm1563, %v1773, -1e+30
    %v1838 = vsel %vm1563, %v1774, -1e+30
    %v1839 = vsel %vm1563, %v1775, -1e+30
    %v1840 = vsel %vm1563, %v1776, -1e+30
    %v1841 = vsel %vm1563, %v1777, -1e+30
    %v1842 = vsel %vm1563, %v1778, -1e+30
    %v1843 = vsel %vm1563, %v1779, -1e+30
    %v1844 = vsel %vm1563, %v1780, -1e+30
    %v1845 = vsel %vm1563, %v1781, -1e+30
    %v1846 = vsel %vm1563, %v1782, -1e+30
    %v1847 = vsel %vm1563, %v1783, -1e+30
    %v1848 = vsel %vm1563, %v1784, -1e+30
    %v1849 = vsel %vm1563, %v1785, -1e+30
    %v1850 = vsel %vm1563, %v1786, -1e+30
    %v1851 = vsel %vm1563, %v1787, -1e+30
    %v1852 = vsel %vm1563, %v1788, -1e+30
    %v1853 = vsel %vm1563, %v1789, -1e+30
    %v1854 = vsel %vm1563, %v1790, -1e+30
    %v1855 = vsel %vm1563, %v1791, -1e+30
    %v1856 = vsel %vm1563, %v1792, -1e+30
    %v1857 = vsel %vm1563, %v1793, -1e+30
    %v1858 = vsel %vm1563, %v1794, -1e+30
    %v1859 = vsel %vm1563, %v1795, -1e+30
    %v1860 = vsel %vm1563, %v1796, -1e+30
    %v1861 = vsel %vm1563, %v1797, -1e+30
    %v1862 = vsel %vm1563, %v1798, -1e+30
    %v1863 = vsel %vm1563, %v1799, -1e+30
    %v1864 = vsel %vm1563, %v1800, -1e+30
    %v1865 = vsel %vm1563, %v1801, -1e+30
    %v1866 = vsel %vm1563, %v1802, -1e+30
    %v1867 = vsel %vm1563, %v1803, -1e+30
    %v1868 = vsel %vm1563, %v1804, -1e+30
    %v1869 = vsel %vm1563, %v1805, -1e+30
    %v1870 = vsel %vm1563, %v1806, -1e+30
    %v1871 = vsel %vm1563, %v1807, -1e+30
    %v1872 = vsel %vm1563, %v1808, -1e+30
    %v1873 = vsel %vm1563, %v1809, -1e+30
    %v1874 = vsel %vm1563, %v1810, -1e+30
    %v1875 = vsel %vm1563, %v1811, -1e+30
    %v1876 = vsel %vm1563, %v1812, -1e+30
    %v1877 = vsel %vm1563, %v1813, -1e+30
    %v1878 = vsel %vm1563, %v1814, -1e+30
    %v1879 = vsel %vm1563, %v1815, -1e+30
    %v1880 = vsel %vm1563, %v1816, -1e+30
    %v1881 = vsel %vm1563, %v1817, -1e+30
    %v1882 = vsel %vm1563, %v1818, -1e+30
    %v1883 = vsel %vm1563, %v1819, -1e+30
    %v1884 = vmul.f32 %v1820, 1.442695
    %v1885 = vpow.pop %v1884
    %v1886 = vmul.f32 %v1821, 1.442695
    %v1887 = vpow.pop %v1886
    %v1888 = vmul.f32 %v1822, 1.442695
    %v1889 = vpow.pop %v1888
    %v1890 = vmul.f32 %v1823, 1.442695
    %v1891 = vpow.pop %v1890
    %v1892 = vmul.f32 %v1824, 1.442695
    %v1893 = vpow.pop %v1892
    %v1894 = vmul.f32 %v1825, 1.442695
    %v1895 = vpow.pop %v1894
    %v1896 = vmul.f32 %v1826, 1.442695
    %v1897 = vpow.pop %v1896
    %v1898 = vmul.f32 %v1827, 1.442695
    %v1899 = vpow.pop %v1898
    %v1900 = vmul.f32 %v1828, 1.442695
    %v1901 = vpow.pop %v1900
    %v1902 = vmul.f32 %v1829, 1.442695
    %v1903 = vpow.pop %v1902
    %v1904 = vmul.f32 %v1830, 1.442695
    %v1905 = vpow.pop %v1904
    %v1906 = vmul.f32 %v1831, 1.442695
    %v1907 = vpow.pop %v1906
    %v1908 = vmul.f32 %v1832, 1.442695
    %v1909 = vpow.pop %v1908
    %v1910 = vmul.f32 %v1833, 1.442695
    %v1911 = vpow.pop %v1910
    %v1912 = vmul.f32 %v1834, 1.442695
    %v1913 = vpow.pop %v1912
    %v1914 = vmul.f32 %v1835, 1.442695
    %v1915 = vpow.pop %v1914
    %v1916 = vmul.f32 %v1836, 1.442695
    %v1917 = vpow.pop %v1916
    %v1918 = vmul.f32 %v1837, 1.442695
    %v1919 = vpow.pop %v1918
    %v1920 = vmul.f32 %v1838, 1.442695
    %v1921 = vpow.pop %v1920
    %v1922 = vmul.f32 %v1839, 1.442695
    %v1923 = vpow.pop %v1922
    %v1924 = vmul.f32 %v1840, 1.442695
    %v1925 = vpow.pop %v1924
    %v1926 = vmul.f32 %v1841, 1.442695
    %v1927 = vpow.pop %v1926
    %v1928 = vmul.f32 %v1842, 1.442695
    %v1929 = vpow.pop %v1928
    %v1930 = vmul.f32 %v1843, 1.442695
    %v1931 = vpow.pop %v1930
    %v1932 = vmul.f32 %v1844, 1.442695
    %v1933 = vpow.pop %v1932
    %v1934 = vmul.f32 %v1845, 1.442695
    %v1935 = vpow.pop %v1934
    %v1936 = vmul.f32 %v1846, 1.442695
    %v1937 = vpow.pop %v1936
    %v1938 = vmul.f32 %v1847, 1.442695
    %v1939 = vpow.pop %v1938
    %v1940 = vmul.f32 %v1848, 1.442695
    %v1941 = vpow.pop %v1940
    %v1942 = vmul.f32 %v1849, 1.442695
    %v1943 = vpow.pop %v1942
    %v1944 = vmul.f32 %v1850, 1.442695
    %v1945 = vpow.pop %v1944
    %v1946 = vmul.f32 %v1851, 1.442695
    %v1947 = vpow.pop %v1946
    %v1948 = vmul.f32 %v1852, 1.442695
    %v1949 = vpow.pop %v1948
    %v1950 = vmul.f32 %v1853, 1.442695
    %v1951 = vpow.pop %v1950
    %v1952 = vmul.f32 %v1854, 1.442695
    %v1953 = vpow.pop %v1952
    %v1954 = vmul.f32 %v1855, 1.442695
    %v1955 = vpow.pop %v1954
    %v1956 = vmul.f32 %v1856, 1.442695
    %v1957 = vpow.pop %v1956
    %v1958 = vmul.f32 %v1857, 1.442695
    %v1959 = vpow.pop %v1958
    %v1960 = vmul.f32 %v1858, 1.442695
    %v1961 = vpow.pop %v1960
    %v1962 = vmul.f32 %v1859, 1.442695
    %v1963 = vpow.pop %v1962
    %v1964 = vmul.f32 %v1860, 1.442695
    %v1965 = vpow.pop %v1964
    %v1966 = vmul.f32 %v1861, 1.442695
    %v1967 = vpow.pop %v1966
    %v1968 = vmul.f32 %v1862, 1.442695
    %v1969 = vpow.pop %v1968
    %v1970 = vmul.f32 %v1863, 1.442695
    %v1971 = vpow.pop %v1970
    %v1972 = vmul.f32 %v1864, 1.442695
    %v1973 = vpow.pop %v1972
    %v1974 = vmul.f32 %v1865, 1.442695
    %v1975 = vpow.pop %v1974
    %v1976 = vmul.f32 %v1866, 1.442695
    %v1977 = vpow.pop %v1976
    %v1978 = vmul.f32 %v1867, 1.442695
    %v1979 = vpow.pop %v1978
    %v1980 = vmul.f32 %v1868, 1.442695
    %v1981 = vpow.pop %v1980
    %v1982 = vmul.f32 %v1869, 1.442695
    %v1983 = vpow.pop %v1982
    %v1984 = vmul.f32 %v1870, 1.442695
    %v1985 = vpow.pop %v1984
    %v1986 = vmul.f32 %v1871, 1.442695
    %v1987 = vpow.pop %v1986
    %v1988 = vmul.f32 %v1872, 1.442695
    %v1989 = vpow.pop %v1988
    %v1990 = vmul.f32 %v1873, 1.442695
    %v1991 = vpow.pop %v1990
    %v1992 = vmul.f32 %v1874, 1.442695
    %v1993 = vpow.pop %v1992
    %v1994 = vmul.f32 %v1875, 1.442695
    %v1995 = vpow.pop %v1994
    %v1996 = vmul.f32 %v1876, 1.442695
    %v1997 = vpow.pop %v1996
    %v1998 = vmul.f32 %v1877, 1.442695
    %v1999 = vpow.pop %v1998
    %v2000 = vmul.f32 %v1878, 1.442695
    %v2001 = vpow.pop %v2000
    %v2002 = vmul.f32 %v1879, 1.442695
    %v2003 = vpow.pop %v2002
    %v2004 = vmul.f32 %v1880, 1.442695
    %v2005 = vpow.pop %v2004
    %v2006 = vmul.f32 %v1881, 1.442695
    %v2007 = vpow.pop %v2006
    %v2008 = vmul.f32 %v1882, 1.442695
    %v2009 = vpow.pop %v2008
    %v2010 = vmul.f32 %v1883, 1.442695
    %v2011 = vpow.pop %v2010
    %2012 = vadd.xlane.f32.xlu0 %v1885
    %v2013 = vpop.xlane.xlu0 %2012
    %2014 = vadd.xlane.f32.xlu0 %v1887
    %v2015 = vpop.xlane.xlu0 %2014
    %2016 = vadd.xlane.f32.xlu0 %v1889
    %v2017 = vpop.xlane.xlu0 %2016
    %2018 = vadd.xlane.f32.xlu0 %v1891
    %v2019 = vpop.xlane.xlu0 %2018
    %2020 = vadd.xlane.f32.xlu0 %v1893
    %v2021 = vpop.xlane.xlu0 %2020
    %2022 = vadd.xlane.f32.xlu0 %v1895
    %v2023 = vpop.xlane.xlu0 %2022
    %2024 = vadd.xlane.f32.xlu0 %v1897
    %v2025 = vpop.xlane.xlu0 %2024
    %2026 = vadd.xlane.f32.xlu0 %v1899
    %v2027 = vpop.xlane.xlu0 %2026
    %2028 = vadd.xlane.f32.xlu0 %v1901
    %v2029 = vpop.xlane.xlu0 %2028
    %2030 = vadd.xlane.f32.xlu0 %v1903
    %v2031 = vpop.xlane.xlu0 %2030
    %2032 = vadd.xlane.f32.xlu0 %v1905
    %v2033 = vpop.xlane.xlu0 %2032
    %2034 = vadd.xlane.f32.xlu0 %v1907
    %v2035 = vpop.xlane.xlu0 %2034
    %2036 = vadd.xlane.f32.xlu0 %v1909
    %v2037 = vpop.xlane.xlu0 %2036
    %2038 = vadd.xlane.f32.xlu0 %v1911
    %v2039 = vpop.xlane.xlu0 %2038
    %2040 = vadd.xlane.f32.xlu0 %v1913
    %v2041 = vpop.xlane.xlu0 %2040
    %2042 = vadd.xlane.f32.xlu0 %v1915
    %v2043 = vpop.xlane.xlu0 %2042
    %2044 = vadd.xlane.f32.xlu0 %v1917
    %v2045 = vpop.xlane.xlu0 %2044
    %2046 = vadd.xlane.f32.xlu0 %v1919
    %v2047 = vpop.xlane.xlu0 %2046
    %2048 = vadd.xlane.f32.xlu0 %v1921
    %v2049 = vpop.xlane.xlu0 %2048
    %2050 = vadd.xlane.f32.xlu0 %v1923
    %v2051 = vpop.xlane.xlu0 %2050
    %2052 = vadd.xlane.f32.xlu0 %v1925
    %v2053 = vpop.xlane.xlu0 %2052
    %2054 = vadd.xlane.f32.xlu0 %v1927
    %v2055 = vpop.xlane.xlu0 %2054
    %2056 = vadd.xlane.f32.xlu0 %v1929
    %v2057 = vpop.xlane.xlu0 %2056
    %2058 = vadd.xlane.f32.xlu0 %v1931
    %v2059 = vpop.xlane.xlu0 %2058
    %2060 = vadd.xlane.f32.xlu0 %v1933
    %v2061 = vpop.xlane.xlu0 %2060
    %2062 = vadd.xlane.f32.xlu0 %v1935
    %v2063 = vpop.xlane.xlu0 %2062
    %2064 = vadd.xlane.f32.xlu0 %v1937
    %v2065 = vpop.xlane.xlu0 %2064
    %2066 = vadd.xlane.f32.xlu0 %v1939
    %v2067 = vpop.xlane.xlu0 %2066
    %2068 = vadd.xlane.f32.xlu0 %v1941
    %v2069 = vpop.xlane.xlu0 %2068
    %2070 = vadd.xlane.f32.xlu0 %v1943
    %v2071 = vpop.xlane.xlu0 %2070
    %2072 = vadd.xlane.f32.xlu0 %v1945
    %v2073 = vpop.xlane.xlu0 %2072
    %2074 = vadd.xlane.f32.xlu0 %v1947
    %v2075 = vpop.xlane.xlu0 %2074
    %2076 = vadd.xlane.f32.xlu0 %v1949
    %v2077 = vpop.xlane.xlu0 %2076
    %2078 = vadd.xlane.f32.xlu0 %v1951
    %v2079 = vpop.xlane.xlu0 %2078
    %2080 = vadd.xlane.f32.xlu0 %v1953
    %v2081 = vpop.xlane.xlu0 %2080
    %2082 = vadd.xlane.f32.xlu0 %v1955
    %v2083 = vpop.xlane.xlu0 %2082
    %2084 = vadd.xlane.f32.xlu0 %v1957
    %v2085 = vpop.xlane.xlu0 %2084
    %2086 = vadd.xlane.f32.xlu0 %v1959
    %v2087 = vpop.xlane.xlu0 %2086
    %2088 = vadd.xlane.f32.xlu0 %v1961
    %v2089 = vpop.xlane.xlu0 %2088
    %2090 = vadd.xlane.f32.xlu0 %v1963
    %v2091 = vpop.xlane.xlu0 %2090
    %2092 = vadd.xlane.f32.xlu0 %v1965
    %v2093 = vpop.xlane.xlu0 %2092
    %2094 = vadd.xlane.f32.xlu0 %v1967
    %v2095 = vpop.xlane.xlu0 %2094
    %2096 = vadd.xlane.f32.xlu0 %v1969
    %v2097 = vpop.xlane.xlu0 %2096
    %2098 = vadd.xlane.f32.xlu0 %v1971
    %v2099 = vpop.xlane.xlu0 %2098
    %2100 = vadd.xlane.f32.xlu0 %v1973
    %v2101 = vpop.xlane.xlu0 %2100
    %2102 = vadd.xlane.f32.xlu0 %v1975
    %v2103 = vpop.xlane.xlu0 %2102
    %2104 = vadd.xlane.f32.xlu0 %v1977
    %v2105 = vpop.xlane.xlu0 %2104
    %2106 = vadd.xlane.f32.xlu0 %v1979
    %v2107 = vpop.xlane.xlu0 %2106
    %2108 = vadd.xlane.f32.xlu0 %v1981
    %v2109 = vpop.xlane.xlu0 %2108
    %2110 = vadd.xlane.f32.xlu0 %v1983
    %v2111 = vpop.xlane.xlu0 %2110
    %2112 = vadd.xlane.f32.xlu0 %v1985
    %v2113 = vpop.xlane.xlu0 %2112
    %2114 = vadd.xlane.f32.xlu0 %v1987
    %v2115 = vpop.xlane.xlu0 %2114
    %2116 = vadd.xlane.f32.xlu0 %v1989
    %v2117 = vpop.xlane.xlu0 %2116
    %2118 = vadd.xlane.f32.xlu0 %v1991
    %v2119 = vpop.xlane.xlu0 %2118
    %2120 = vadd.xlane.f32.xlu0 %v1993
    %v2121 = vpop.xlane.xlu0 %2120
    %2122 = vadd.xlane.f32.xlu0 %v1995
    %v2123 = vpop.xlane.xlu0 %2122
    %2124 = vadd.xlane.f32.xlu0 %v1997
    %v2125 = vpop.xlane.xlu0 %2124
    %2126 = vadd.xlane.f32.xlu0 %v1999
    %v2127 = vpop.xlane.xlu0 %2126
    %2128 = vadd.xlane.f32.xlu0 %v2001
    %v2129 = vpop.xlane.xlu0 %2128
    %2130 = vadd.xlane.f32.xlu0 %v2003
    %v2131 = vpop.xlane.xlu0 %2130
    %2132 = vadd.xlane.f32.xlu0 %v2005
    %v2133 = vpop.xlane.xlu0 %2132
    %2134 = vadd.xlane.f32.xlu0 %v2007
    %v2135 = vpop.xlane.xlu0 %2134
    %2136 = vadd.xlane.f32.xlu0 %v2009
    %v2137 = vpop.xlane.xlu0 %2136
    %2138 = vadd.xlane.f32.xlu0 %v2011
    %v2139 = vpop.xlane.xlu0 %2138
    %v2140 = vlog2.pop %v2013
    %v2141 = vmul.f32 %v2140, 0.6931472
    %v2142 = vlog2.pop %v2015
    %v2143 = vmul.f32 %v2142, 0.6931472
    %v2144 = vlog2.pop %v2017
    %v2145 = vmul.f32 %v2144, 0.6931472
    %v2146 = vlog2.pop %v2019
    %v2147 = vmul.f32 %v2146, 0.6931472
    %v2148 = vlog2.pop %v2021
    %v2149 = vmul.f32 %v2148, 0.6931472
    %v2150 = vlog2.pop %v2023
    %v2151 = vmul.f32 %v2150, 0.6931472
    %v2152 = vlog2.pop %v2025
    %v2153 = vmul.f32 %v2152, 0.6931472
    %v2154 = vlog2.pop %v2027
    %v2155 = vmul.f32 %v2154, 0.6931472
    %v2156 = vlog2.pop %v2029
    %v2157 = vmul.f32 %v2156, 0.6931472
    %v2158 = vlog2.pop %v2031
    %v2159 = vmul.f32 %v2158, 0.6931472
    %v2160 = vlog2.pop %v2033
    %v2161 = vmul.f32 %v2160, 0.6931472
    %v2162 = vlog2.pop %v2035
    %v2163 = vmul.f32 %v2162, 0.6931472
    %v2164 = vlog2.pop %v2037
    %v2165 = vmul.f32 %v2164, 0.6931472
    %v2166 = vlog2.pop %v2039
    %v2167 = vmul.f32 %v2166, 0.6931472
    %v2168 = vlog2.pop %v2041
    %v2169 = vmul.f32 %v2168, 0.6931472
    %v2170 = vlog2.pop %v2043
    %v2171 = vmul.f32 %v2170, 0.6931472
    %v2172 = vlog2.pop %v2045
    %v2173 = vmul.f32 %v2172, 0.6931472
    %v2174 = vlog2.pop %v2047
    %v2175 = vmul.f32 %v2174, 0.6931472
    %v2176 = vlog2.pop %v2049
    %v2177 = vmul.f32 %v2176, 0.6931472
    %v2178 = vlog2.pop %v2051
    %v2179 = vmul.f32 %v2178, 0.6931472
    %v2180 = vlog2.pop %v2053
    %v2181 = vmul.f32 %v2180, 0.6931472
    %v2182 = vlog2.pop %v2055
    %v2183 = vmul.f32 %v2182, 0.6931472
    %v2184 = vlog2.pop %v2057
    %v2185 = vmul.f32 %v2184, 0.6931472
    %v2186 = vlog2.pop %v2059
    %v2187 = vmul.f32 %v2186, 0.6931472
    %v2188 = vlog2.pop %v2061
    %v2189 = vmul.f32 %v2188, 0.6931472
    %v2190 = vlog2.pop %v2063
    %v2191 = vmul.f32 %v2190, 0.6931472
    %v2192 = vlog2.pop %v2065
    %v2193 = vmul.f32 %v2192, 0.6931472
    %v2194 = vlog2.pop %v2067
    %v2195 = vmul.f32 %v2194, 0.6931472
    %v2196 = vlog2.pop %v2069
    %v2197 = vmul.f32 %v2196, 0.6931472
    %v2198 = vlog2.pop %v2071
    %v2199 = vmul.f32 %v2198, 0.6931472
    %v2200 = vlog2.pop %v2073
    %v2201 = vmul.f32 %v2200, 0.6931472
    %v2202 = vlog2.pop %v2075
    %v2203 = vmul.f32 %v2202, 0.6931472
    %v2204 = vlog2.pop %v2077
    %v2205 = vmul.f32 %v2204, 0.6931472
    %v2206 = vlog2.pop %v2079
    %v2207 = vmul.f32 %v2206, 0.6931472
    %v2208 = vlog2.pop %v2081
    %v2209 = vmul.f32 %v2208, 0.6931472
    %v2210 = vlog2.pop %v2083
    %v2211 = vmul.f32 %v2210, 0.6931472
    %v2212 = vlog2.pop %v2085
    %v2213 = vmul.f32 %v2212, 0.6931472
    %v2214 = vlog2.pop %v2087
    %v2215 = vmul.f32 %v2214, 0.6931472
    %v2216 = vlog2.pop %v2089
    %v2217 = vmul.f32 %v2216, 0.6931472
    %v2218 = vlog2.pop %v2091
    %v2219 = vmul.f32 %v2218, 0.6931472
    %v2220 = vlog2.pop %v2093
    %v2221 = vmul.f32 %v2220, 0.6931472
    %v2222 = vlog2.pop %v2095
    %v2223 = vmul.f32 %v2222, 0.6931472
    %v2224 = vlog2.pop %v2097
    %v2225 = vmul.f32 %v2224, 0.6931472
    %v2226 = vlog2.pop %v2099
    %v2227 = vmul.f32 %v2226, 0.6931472
    %v2228 = vlog2.pop %v2101
    %v2229 = vmul.f32 %v2228, 0.6931472
    %v2230 = vlog2.pop %v2103
    %v2231 = vmul.f32 %v2230, 0.6931472
    %v2232 = vlog2.pop %v2105
    %v2233 = vmul.f32 %v2232, 0.6931472
    %v2234 = vlog2.pop %v2107
    %v2235 = vmul.f32 %v2234, 0.6931472
    %v2236 = vlog2.pop %v2109
    %v2237 = vmul.f32 %v2236, 0.6931472
    %v2238 = vlog2.pop %v2111
    %v2239 = vmul.f32 %v2238, 0.6931472
    %v2240 = vlog2.pop %v2113
    %v2241 = vmul.f32 %v2240, 0.6931472
    %v2242 = vlog2.pop %v2115
    %v2243 = vmul.f32 %v2242, 0.6931472
    %v2244 = vlog2.pop %v2117
    %v2245 = vmul.f32 %v2244, 0.6931472
    %v2246 = vlog2.pop %v2119
    %v2247 = vmul.f32 %v2246, 0.6931472
    %v2248 = vlog2.pop %v2121
    %v2249 = vmul.f32 %v2248, 0.6931472
    %v2250 = vlog2.pop %v2123
    %v2251 = vmul.f32 %v2250, 0.6931472
    %v2252 = vlog2.pop %v2125
    %v2253 = vmul.f32 %v2252, 0.6931472
    %v2254 = vlog2.pop %v2127
    %v2255 = vmul.f32 %v2254, 0.6931472
    %v2256 = vlog2.pop %v2129
    %v2257 = vmul.f32 %v2256, 0.6931472
    %v2258 = vlog2.pop %v2131
    %v2259 = vmul.f32 %v2258, 0.6931472
    %v2260 = vlog2.pop %v2133
    %v2261 = vmul.f32 %v2260, 0.6931472
    %v2262 = vlog2.pop %v2135
    %v2263 = vmul.f32 %v2262, 0.6931472
    %v2264 = vlog2.pop %v2137
    %v2265 = vmul.f32 %v2264, 0.6931472
    %v2266 = vlog2.pop %v2139
    %v2267 = vmul.f32 %v2266, 0.6931472
    %v2268 = vsub.f32 %v1820, %v2141
    %v2269 = vsub.f32 %v1821, %v2143
    %v2270 = vsub.f32 %v1822, %v2145
    %v2271 = vsub.f32 %v1823, %v2147
    %v2272 = vsub.f32 %v1824, %v2149
    %v2273 = vsub.f32 %v1825, %v2151
    %v2274 = vsub.f32 %v1826, %v2153
    %v2275 = vsub.f32 %v1827, %v2155
    %v2276 = vsub.f32 %v1828, %v2157
    %v2277 = vsub.f32 %v1829, %v2159
    %v2278 = vsub.f32 %v1830, %v2161
    %v2279 = vsub.f32 %v1831, %v2163
    %v2280 = vsub.f32 %v1832, %v2165
    %v2281 = vsub.f32 %v1833, %v2167
    %v2282 = vsub.f32 %v1834, %v2169
    %v2283 = vsub.f32 %v1835, %v2171
    %v2284 = vsub.f32 %v1836, %v2173
    %v2285 = vsub.f32 %v1837, %v2175
    %v2286 = vsub.f32 %v1838, %v2177
    %v2287 = vsub.f32 %v1839, %v2179
    %v2288 = vsub.f32 %v1840, %v2181
    %v2289 = vsub.f32 %v1841, %v2183
    %v2290 = vsub.f32 %v1842, %v2185
    %v2291 = vsub.f32 %v1843, %v2187
    %v2292 = vsub.f32 %v1844, %v2189
    %v2293 = vsub.f32 %v1845, %v2191
    %v2294 = vsub.f32 %v1846, %v2193
    %v2295 = vsub.f32 %v1847, %v2195
    %v2296 = vsub.f32 %v1848, %v2197
    %v2297 = vsub.f32 %v1849, %v2199
    %v2298 = vsub.f32 %v1850, %v2201
    %v2299 = vsub.f32 %v1851, %v2203
    %v2300 = vsub.f32 %v1852, %v2205
    %v2301 = vsub.f32 %v1853, %v2207
    %v2302 = vsub.f32 %v1854, %v2209
    %v2303 = vsub.f32 %v1855, %v2211
    %v2304 = vsub.f32 %v1856, %v2213
    %v2305 = vsub.f32 %v1857, %v2215
    %v2306 = vsub.f32 %v1858, %v2217
    %v2307 = vsub.f32 %v1859, %v2219
    %v2308 = vsub.f32 %v1860, %v2221
    %v2309 = vsub.f32 %v1861, %v2223
    %v2310 = vsub.f32 %v1862, %v2225
    %v2311 = vsub.f32 %v1863, %v2227
    %v2312 = vsub.f32 %v1864, %v2229
    %v2313 = vsub.f32 %v1865, %v2231
    %v2314 = vsub.f32 %v1866, %v2233
    %v2315 = vsub.f32 %v1867, %v2235
    %v2316 = vsub.f32 %v1868, %v2237
    %v2317 = vsub.f32 %v1869, %v2239
    %v2318 = vsub.f32 %v1870, %v2241
    %v2319 = vsub.f32 %v1871, %v2243
    %v2320 = vsub.f32 %v1872, %v2245
    %v2321 = vsub.f32 %v1873, %v2247
    %v2322 = vsub.f32 %v1874, %v2249
    %v2323 = vsub.f32 %v1875, %v2251
    %v2324 = vsub.f32 %v1876, %v2253
    %v2325 = vsub.f32 %v1877, %v2255
    %v2326 = vsub.f32 %v1878, %v2257
    %v2327 = vsub.f32 %v1879, %v2259
    %v2328 = vsub.f32 %v1880, %v2261
    %v2329 = vsub.f32 %v1881, %v2263
    %v2330 = vsub.f32 %v1882, %v2265
    %v2331 = vsub.f32 %v1883, %v2267
    %v2332 = vsel %vm1563, %v2268, 0.0
    %v2333 = vsel %vm1563, %v2269, 0.0
    %v2334 = vsel %vm1563, %v2270, 0.0
    %v2335 = vsel %vm1563, %v2271, 0.0
    %v2336 = vsel %vm1563, %v2272, 0.0
    %v2337 = vsel %vm1563, %v2273, 0.0
    %v2338 = vsel %vm1563, %v2274, 0.0
    %v2339 = vsel %vm1563, %v2275, 0.0
    %v2340 = vsel %vm1563, %v2276, 0.0
    %v2341 = vsel %vm1563, %v2277, 0.0
    %v2342 = vsel %vm1563, %v2278, 0.0
    %v2343 = vsel %vm1563, %v2279, 0.0
    %v2344 = vsel %vm1563, %v2280, 0.0
    %v2345 = vsel %vm1563, %v2281, 0.0
    %v2346 = vsel %vm1563, %v2282, 0.0
    %v2347 = vsel %vm1563, %v2283, 0.0
    %v2348 = vsel %vm1563, %v2284, 0.0
    %v2349 = vsel %vm1563, %v2285, 0.0
    %v2350 = vsel %vm1563, %v2286, 0.0
    %v2351 = vsel %vm1563, %v2287, 0.0
    %v2352 = vsel %vm1563, %v2288, 0.0
    %v2353 = vsel %vm1563, %v2289, 0.0
    %v2354 = vsel %vm1563, %v2290, 0.0
    %v2355 = vsel %vm1563, %v2291, 0.0
    %v2356 = vsel %vm1563, %v2292, 0.0
    %v2357 = vsel %vm1563, %v2293, 0.0
    %v2358 = vsel %vm1563, %v2294, 0.0
    %v2359 = vsel %vm1563, %v2295, 0.0
    %v2360 = vsel %vm1563, %v2296, 0.0
    %v2361 = vsel %vm1563, %v2297, 0.0
    %v2362 = vsel %vm1563, %v2298, 0.0
    %v2363 = vsel %vm1563, %v2299, 0.0
    %v2364 = vsel %vm1563, %v2300, 0.0
    %v2365 = vsel %vm1563, %v2301, 0.0
    %v2366 = vsel %vm1563, %v2302, 0.0
    %v2367 = vsel %vm1563, %v2303, 0.0
    %v2368 = vsel %vm1563, %v2304, 0.0
    %v2369 = vsel %vm1563, %v2305, 0.0
    %v2370 = vsel %vm1563, %v2306, 0.0
    %v2371 = vsel %vm1563, %v2307, 0.0
    %v2372 = vsel %vm1563, %v2308, 0.0
    %v2373 = vsel %vm1563, %v2309, 0.0
    %v2374 = vsel %vm1563, %v2310, 0.0
    %v2375 = vsel %vm1563, %v2311, 0.0
    %v2376 = vsel %vm1563, %v2312, 0.0
    %v2377 = vsel %vm1563, %v2313, 0.0
    %v2378 = vsel %vm1563, %v2314, 0.0
    %v2379 = vsel %vm1563, %v2315, 0.0
    %v2380 = vsel %vm1563, %v2316, 0.0
    %v2381 = vsel %vm1563, %v2317, 0.0
    %v2382 = vsel %vm1563, %v2318, 0.0
    %v2383 = vsel %vm1563, %v2319, 0.0
    %v2384 = vsel %vm1563, %v2320, 0.0
    %v2385 = vsel %vm1563, %v2321, 0.0
    %v2386 = vsel %vm1563, %v2322, 0.0
    %v2387 = vsel %vm1563, %v2323, 0.0
    %v2388 = vsel %vm1563, %v2324, 0.0
    %v2389 = vsel %vm1563, %v2325, 0.0
    %v2390 = vsel %vm1563, %v2326, 0.0
    %v2391 = vsel %vm1563, %v2327, 0.0
    %v2392 = vsel %vm1563, %v2328, 0.0
    %v2393 = vsel %vm1563, %v2329, 0.0
    %v2394 = vsel %vm1563, %v2330, 0.0
    %v2395 = vsel %vm1563, %v2331, 0.0
    %2396 = vst [vmem:[%s3] sm:$0xff] %v2332
    %2397 = vst [vmem:[%s3 + $0x8] sm:$0xff] %v2333
    %2398 = vst [vmem:[%s3 + $0x10] sm:$0xff] %v2334
    %2399 = vst [vmem:[%s3 + $0x18] sm:$0xff] %v2335
    %2400 = vst [vmem:[%s3 + $0x20] sm:$0xff] %v2336
    %2401 = vst [vmem:[%s3 + $0x28] sm:$0xff] %v2337
    %2402 = vst [vmem:[%s3 + $0x30] sm:$0xff] %v2338
    %2403 = vst [vmem:[%s3 + $0x38] sm:$0xff] %v2339
    %2404 = vst [vmem:[%s3 + $0x40] sm:$0xff] %v2340
    %2405 = vst [vmem:[%s3 + $0x48] sm:$0xff] %v2341
    %2406 = vst [vmem:[%s3 + $0x50] sm:$0xff] %v2342
    %2407 = vst [vmem:[%s3 + $0x58] sm:$0xff] %v2343
    %2408 = vst [vmem:[%s3 + $0x60] sm:$0xff] %v2344
    %2409 = vst [vmem:[%s3 + $0x68] sm:$0xff] %v2345
    %2410 = vst [vmem:[%s3 + $0x70] sm:$0xff] %v2346
    %2411 = vst [vmem:[%s3 + $0x78] sm:$0xff] %v2347
    %2412 = vst [vmem:[%s3 + $0x80] sm:$0xff] %v2348
    %2413 = vst [vmem:[%s3 + $0x88] sm:$0xff] %v2349
    %2414 = vst [vmem:[%s3 + $0x90] sm:$0xff] %v2350
    %2415 = vst [vmem:[%s3 + $0x98] sm:$0xff] %v2351
    %2416 = vst [vmem:[%s3 + $0xa0] sm:$0xff] %v2352
    %2417 = vst [vmem:[%s3 + $0xa8] sm:$0xff] %v2353
    %2418 = vst [vmem:[%s3 + $0xb0] sm:$0xff] %v2354
    %2419 = vst [vmem:[%s3 + $0xb8] sm:$0xff] %v2355
    %2420 = vst [vmem:[%s3 + $0xc0] sm:$0xff] %v2356
    %2421 = vst [vmem:[%s3 + $0xc8] sm:$0xff] %v2357
    %2422 = vst [vmem:[%s3 + $0xd0] sm:$0xff] %v2358
    %2423 = vst [vmem:[%s3 + $0xd8] sm:$0xff] %v2359
    %2424 = vst [vmem:[%s3 + $0xe0] sm:$0xff] %v2360
    %2425 = vst [vmem:[%s3 + $0xe8] sm:$0xff] %v2361
    %2426 = vst [vmem:[%s3 + $0xf0] sm:$0xff] %v2362
    %2427 = vst [vmem:[%s3 + $0xf8] sm:$0xff] %v2363
    %2428 = vst [vmem:[%s3 + $0x100] sm:$0xff] %v2364
    %2429 = vst [vmem:[%s3 + $0x108] sm:$0xff] %v2365
    %2430 = vst [vmem:[%s3 + $0x110] sm:$0xff] %v2366
    %2431 = vst [vmem:[%s3 + $0x118] sm:$0xff] %v2367
    %2432 = vst [vmem:[%s3 + $0x120] sm:$0xff] %v2368
    %2433 = vst [vmem:[%s3 + $0x128] sm:$0xff] %v2369
    %2434 = vst [vmem:[%s3 + $0x130] sm:$0xff] %v2370
    %2435 = vst [vmem:[%s3 + $0x138] sm:$0xff] %v2371
    %2436 = vst [vmem:[%s3 + $0x140] sm:$0xff] %v2372
    %2437 = vst [vmem:[%s3 + $0x148] sm:$0xff] %v2373
    %2438 = vst [vmem:[%s3 + $0x150] sm:$0xff] %v2374
    %2439 = vst [vmem:[%s3 + $0x158] sm:$0xff] %v2375
    %2440 = vst [vmem:[%s3 + $0x160] sm:$0xff] %v2376
    %2441 = vst [vmem:[%s3 + $0x168] sm:$0xff] %v2377
    %2442 = vst [vmem:[%s3 + $0x170] sm:$0xff] %v2378
    %2443 = vst [vmem:[%s3 + $0x178] sm:$0xff] %v2379
    %2444 = vst [vmem:[%s3 + $0x180] sm:$0xff] %v2380
    %2445 = vst [vmem:[%s3 + $0x188] sm:$0xff] %v2381
    %2446 = vst [vmem:[%s3 + $0x190] sm:$0xff] %v2382
    %2447 = vst [vmem:[%s3 + $0x198] sm:$0xff] %v2383
    %2448 = vst [vmem:[%s3 + $0x1a0] sm:$0xff] %v2384
    %2449 = vst [vmem:[%s3 + $0x1a8] sm:$0xff] %v2385
    %2450 = vst [vmem:[%s3 + $0x1b0] sm:$0xff] %v2386
    %2451 = vst [vmem:[%s3 + $0x1b8] sm:$0xff] %v2387
    %2452 = vst [vmem:[%s3 + $0x1c0] sm:$0xff] %v2388
    %2453 = vst [vmem:[%s3 + $0x1c8] sm:$0xff] %v2389
    %2454 = vst [vmem:[%s3 + $0x1d0] sm:$0xff] %v2390
    %2455 = vst [vmem:[%s3 + $0x1d8] sm:$0xff] %v2391
    %2456 = vst [vmem:[%s3 + $0x1e0] sm:$0xff] %v2392
    %2457 = vst [vmem:[%s3 + $0x1e8] sm:$0xff] %v2393
    %2458 = vst [vmem:[%s3 + $0x1f0] sm:$0xff] %v2394
    %2459 = vst [vmem:[%s3 + $0x1f8] sm:$0xff] %v2395
  $region21: #{graphsage_forward.7} parent=0 // pred_fallthru
    _
  // Predicated region
  $region22: #{graphsage_forward.7} parent=0 // pred_check
    _
  $region23: #{graphsage_forward.7} parent=0 // pred_check_branch
    %2461 = sbr.rel (0) target = $region25
  $region24: #{graphsage_forward.7} parent=0 // pred_region
    _
  $region25: #{graphsage_forward.7} parent=0 // pred_fallthru
    _
  // Predicated region
  $region26: #{graphsage_forward.7} parent=0 // pred_check
    _
  $region27: #{graphsage_forward.7} parent=0 // pred_check_branch
    %2463 = sbr.rel (0) target = $region29
  $region28: #{graphsage_forward.7} parent=0 // pred_region
    _
  $region29: #{graphsage_forward.7} parent=0 // pred_fallthru
    _

</llo_original>
